<compile_context>
chip_gen: v6e
topology: v6e:2x2x1
jax: 0.10.0
libtpu: 0.0.40
codegen_flags: <defaults>
</compile_context>

<pallas_src>
import jax
import jax.numpy as jnp
from jax.experimental import pallas as pl
from jax.experimental.pallas import tpu as pltpu

# ---- FlowBlock hyperparameters (small config implied by the module) ----
IDIM = 4                     # flow feature dim (idim < 5 -> LinearUnit without BN)
HDIM = 32                    # LinearUnit hidden width
CDIM = 8                     # conditioning feature dim
CH1 = IDIM - IDIM // 2       # 2  (kept half)
CH2 = IDIM // 2              # 2  (transformed half)
N_BLOCK = 3                  # LinearUnit hidden blocks
FDIM = 2 * HDIM              # fused (s,t) hidden width = 64

CLAMP = 1.9                  # SoftClampling bound
COMPUTE_DTYPE = jnp.bfloat16 # MXU operand dtype (f32 accumulation)
LANE = 256                   # lane-tile quantum
MAX_TP = 1024                # max points (lanes) per grid step

# FLOPs per point (used for the advisory CostEstimate)
FLOPS_PER_POINT = 2 * (IDIM * IDIM                       # folded affine
                       + (2 * FDIM) * CDIM               # shared conditioning matmul
                       + 2 * (FDIM * CH1                 # per coupling: layer-0 h part
                              + (N_BLOCK - 1) * FDIM * FDIM  # block-diag hidden layers
                              + (2 * CH2) * FDIM))           # block-diag output layer


def soft_clamp(s):
    # bounded, smooth soft clamp (see TODO above)
    return CLAMP * jnp.tanh(s / CLAMP)


# ----------------------------- Pallas kernel -----------------------------
def flowblock_kernel(x_ref, c_ref, a0_ref, b0_ref, wc_ref,
                     w0h_ref, b0h_ref, w1_ref, b1_ref, w2_ref, b2_ref,
                     wo_ref, bo_ref, y_ref, ssum_ref):
    """One grid step processes TP points (batch*points fused on the lane axis).

    x_ref   : (IDIM, TP) f32   flow features, point-major columns
    c_ref   : (CDIM, TP) f32   conditioning features
    a0/b0   : folded (ActNorm + inv1x1 + 'reverse' row order) affine, f32
    wc      : (2*FDIM, CDIM) bf16  layer-0 conditioning weights of both fused units
    w0h/b0h : (2, FDIM, CH1) bf16 / (2, FDIM, 1) f32  fused layer-0 kept-half weights
    w1/b1, w2/b2 : (2, FDIM, FDIM) bf16 / (2, FDIM, 1) f32  block-diag hidden layers
    wo/bo   : (2, 2*CH2, FDIM) bf16 / (2, 2*CH2, 1) f32     block-diag output layer
    y_ref   : (IDIM, TP) f32   transformed features (already in output channel order)
    ssum_ref: (1, TP)    f32   per-point sum of coupling log-scales (for log-det)
    """
    x = x_ref[...]                                            # (IDIM, TP) f32

    # ActNorm + inv1x1 (+ 'reverse' row fold) as one tiny f32 affine.
    w = jnp.dot(a0_ref[...], x, preferred_element_type=jnp.float32) + b0_ref[...]
    ka = w[:CH1, :]                       # coupling1 kept half      (CH1, TP)
    ta = w[CH1:, :]                       # coupling1 transformed    (CH2, TP)

    # Conditioning contribution of layer 0 for BOTH fused units: one lane-dense dot.
    c_bf = c_ref[...].astype(COMPUTE_DTYPE)                   # cast once
    cpart = jnp.dot(wc_ref[...], c_bf,
                    preferred_element_type=jnp.float32)       # (2*FDIM, TP) f32

    hiddens = ((w1_ref, b1_ref), (w2_ref, b2_ref))            # N_BLOCK - 1 layers

    def fused_unit(u, kept):
        # Fused (s, t) LinearUnit: layer-0 split into kept-half dot + shared c part,
        # block-diagonal hidden layers, block-diagonal output head.
        h = jnp.dot(w0h_ref[u], kept.astype(COMPUTE_DTYPE),
                    preferred_element_type=jnp.float32)
        h = h + cpart[FDIM * u:FDIM * (u + 1), :] + b0h_ref[u]
        h = jnp.maximum(h, 0.0).astype(COMPUTE_DTYPE)         # ReLU in f32, downcast
        for wr, br in hiddens:
            h = jnp.dot(wr[u], h, preferred_element_type=jnp.float32) + br[u]
            h = jnp.maximum(h, 0.0).astype(COMPUTE_DTYPE)
        o = jnp.dot(wo_ref[u], h, preferred_element_type=jnp.float32) + bo_ref[u]
        return soft_clamp(o[:CH2, :]), o[CH2:, :]             # s, t  (CH2, TP) f32

    # Coupling 1 (kept = rows 0:2, transformed = rows 2:4 of the folded affine).
    s1, t1 = fused_unit(0, ka)
    tb = ta * jnp.exp(s1) + t1                                # (CH2, TP)

    # Coupling 2 ('reverse' already folded into the weights): kept = tb, trans = ka.
    s2, t2 = fused_unit(1, tb)
    yb = ka * jnp.exp(s2) + t2                                # (CH2, TP)

    y_ref[...] = jnp.concatenate([tb, yb], axis=0)            # output channel order
    ssum_ref[...] = (jnp.sum(s1, axis=0, keepdims=True)
                     + jnp.sum(s2, axis=0, keepdims=True))


# ----------------------------- parameter packing -----------------------------
def _pack_params(params):
    """Fold ActNorm + inv1x1 + 'reverse' permutation and fuse the s/t LinearUnits."""
    assert N_BLOCK == 3
    logs, anbias = params["actnorm"]
    W = params["perm_w"]

    # Folded ActNorm + inv1x1 affine, with the 'reverse' permutation folded in as a
    # static row reorder [1, 0, 3, 2] (see kernel: coupling2 then needs no permutes).
    fold = jnp.array([1, 0, 3, 2])
    a0 = (W * jnp.exp(logs)[None, :])[fold].astype(jnp.float32)      # (IDIM, IDIM)
    b0 = (W @ anbias)[fold].astype(jnp.float32)[:, None]             # (IDIM, 1)

    def fuse(cpl, swap):
        # swap=True compensates the folded row order for coupling1 (input columns of
        # the kept half AND output rows / biases of the s,t heads are swapped).
        su, tu = cpl["s"], cpl["t"]
        perm = jnp.array([1, 0]) if swap else jnp.array([0, 1])
        w0s, b0s = su[0]
        w0t, b0t = tu[0]
        w0h = jnp.concatenate([w0s[:, :CH1][:, perm], w0t[:, :CH1][:, perm]], 0)
        wc = jnp.concatenate([w0s[:, CH1:], w0t[:, CH1:]], 0)         # (FDIM, CDIM)
        b0h = jnp.concatenate([b0s, b0t], 0)[:, None]                 # (FDIM, 1)
        hid = []
        for layer in range(1, N_BLOCK):
            ws, bs = su[layer]
            wt, bt = tu[layer]
            wbd = jnp.zeros((FDIM, FDIM), jnp.float32)
            wbd = wbd.at[:HDIM, :HDIM].set(ws).at[HDIM:, HDIM:].set(wt)
            hid.append((wbd, jnp.concatenate([bs, bt], 0)[:, None]))
        wso, bso = su[N_BLOCK]
        wto, bto = tu[N_BLOCK]
        wo = jnp.zeros((2 * CH2, FDIM), jnp.float32)
        wo = wo.at[:CH2, :HDIM].set(wso[perm]).at[CH2:, HDIM:].set(wto[perm])
        bo = jnp.concatenate([bso[perm], bto[perm]], 0)[:, None]
        return w0h, wc, b0h, hid, wo, bo

    f1 = fuse(params["coupling1"], swap=True)
    f2 = fuse(params["coupling2"], swap=False)

    def stack_w(a, b):
        return jnp.stack([a, b]).astype(COMPUTE_DTYPE)

    def stack_b(a, b):
        return jnp.stack([a, b]).astype(jnp.float32)

    wc_all = jnp.concatenate([f1[1], f2[1]], axis=0).astype(COMPUTE_DTYPE)  # (128, 8)
    return [a0, b0, wc_all,
            stack_w(f1[0], f2[0]), stack_b(f1[2], f2[2]),                   # layer 0
            stack_w(f1[3][0][0], f2[3][0][0]), stack_b(f1[3][0][1], f2[3][0][1]),
            stack_w(f1[3][1][0], f2[3][1][0]), stack_b(f1[3][1][1], f2[3][1][1]),
            stack_w(f1[4], f2[4]), stack_b(f1[5], f2[5])]                   # output


def _choose_tp(P, max_tp=MAX_TP, lane=LANE):
    # Big lane tiles amortize the ~0.35us/step fixed overhead; aim for >=2 grid
    # steps so both v7x TensorCores get work via the parallel grid axis.
    tp = ((max(P, 1) + 2 * lane - 1) // (2 * lane)) * lane
    return int(max(lane, min(max_tp, tp)))


# ----------------------------- JAX wrapper -----------------------------
def flowblock_forward(x, c, params, max_tp=MAX_TP):
    """x: (B, N, IDIM), c: (B, N, CDIM) -> (y: (B, N, IDIM), logdet: (B,))."""
    B, N, _ = x.shape
    P = B * N
    TP = _choose_tp(P, max_tp=max_tp)
    Ppad = pl.cdiv(P, TP) * TP
    grid = (Ppad // TP,)

    # (channels, B*N) point-major layout: all batch elements fused on the lane axis.
    x_t = jnp.transpose(x.reshape(P, IDIM))
    c_t = jnp.transpose(c.reshape(P, CDIM))
    if Ppad != P:
        x_t = jnp.pad(x_t, ((0, 0), (0, Ppad - P)))
        c_t = jnp.pad(c_t, ((0, 0), (0, Ppad - P)))

    const_in = _pack_params(params)

    in_specs = [pl.BlockSpec((IDIM, TP), lambda i: (0, i)),
                pl.BlockSpec((CDIM, TP), lambda i: (0, i))]
    for arr in const_in:
        in_specs.append(pl.BlockSpec(arr.shape, lambda i, nd=arr.ndim: (0,) * nd))

    out_shape = (jax.ShapeDtypeStruct((IDIM, Ppad), jnp.float32),
                 jax.ShapeDtypeStruct((1, Ppad), jnp.float32))
    out_specs = (pl.BlockSpec((IDIM, TP), lambda i: (0, i)),
                 pl.BlockSpec((1, TP), lambda i: (0, i)))

    weight_bytes = sum(int(a.size) * a.dtype.itemsize for a in const_in)
    cost = pl.CostEstimate(
        flops=FLOPS_PER_POINT * Ppad,
        transcendentals=8 * Ppad,                      # exp + tanh per coupling row
        bytes_accessed=(IDIM + CDIM + IDIM + 1) * 4 * Ppad + weight_bytes)

    y_t, ssum = pl.pallas_call(
        flowblock_kernel,
        grid=grid,
        in_specs=in_specs,
        out_specs=out_specs,
        out_shape=out_shape,
        compiler_params=pltpu.CompilerParams(dimension_semantics=("parallel",)),
        cost_estimate=cost,
    )(x_t, c_t, *const_in)

    y = jnp.transpose(y_t[:, :P]).reshape(B, N, IDIM)
    ld_coupling = jnp.sum(ssum[0, :P].reshape(B, N), axis=1)     # (B,)
    # Data-independent log-dets (ActNorm + inv1x1), computed once in the wrapper.
    logs, _ = params["actnorm"]
    ld_const = N * jnp.sum(logs) + N * jnp.linalg.slogdet(params["perm_w"])[1]
    return y, ld_coupling + ld_const


# ----------------------------- parameters -----------------------------
def make_params(key):
    ks = jax.random.split(key, 8)
    IN0 = CH1 + CDIM

    def conv(k, cout, cin):
        kw, kb = jax.random.split(k)
        bound = 1.0 / (cin ** 0.5)
        w = jax.random.uniform(kw, (cout, cin), jnp.float32, -bound, bound)
        b = jax.random.uniform(kb, (cout,), jnp.float32, -bound, bound)
        return w, b

    def out_conv(k, cout, cin):
        # spec: nn.init.normal_(weight, 0, 0.05); nn.init.zeros_(bias)
        return (0.05 * jax.random.normal(k, (cout, cin), jnp.float32),
                jnp.zeros((cout,), jnp.float32))

    def linear_unit(k):
        kk = jax.random.split(k, N_BLOCK + 1)
        layers, cin = [], IN0
        for i in range(N_BLOCK):
            layers.append(conv(kk[i], HDIM, cin))
            cin = HDIM
        layers.append(out_conv(kk[-1], CH2, HDIM))
        return layers

    logs = 0.1 * jax.random.normal(ks[0], (IDIM,), jnp.float32)
    anbias = 0.1 * jax.random.normal(ks[1], (IDIM,), jnp.float32)
    W, _ = jnp.linalg.qr(jax.random.normal(ks[2], (IDIM, IDIM), jnp.float32))
    return {
        "actnorm": (logs, anbias),
        "perm_w": W,
        "coupling1": {"s": linear_unit(ks[3]), "t": linear_unit(ks[4])},
        "coupling2": {"s": linear_unit(ks[5]), "t": linear_unit(ks[6])},
    }


# ----------------------------- pure-JAX reference -----------------------------
def reference_forward(x, c, params):
    B, N, _ = x.shape
    logs, anbias = params["actnorm"]
    z = x * jnp.exp(logs) + anbias                           # ActNorm (dim=2)
    logdet = N * jnp.sum(logs)

    W = params["perm_w"]
    z = jnp.einsum("ij,bnj->bni", W, z)                      # inv1x1 permutation
    logdet = logdet + N * jnp.linalg.slogdet(W)[1]

    def linear_unit(h, layers):
        h = jnp.concatenate([h, c], axis=-1)
        for Wl, bl in layers[:-1]:
            h = jnp.maximum(jnp.einsum("oc,bnc->bno", Wl, h) + bl, 0.0)
        Wl, bl = layers[-1]
        return jnp.einsum("oc,bnc->bno", Wl, h) + bl

    def coupling(z, cp):
        h1, h2 = z[..., :CH1], z[..., CH1:]
        s = soft_clamp(linear_unit(h1, cp["s"]))
        t = linear_unit(h1, cp["t"])
        h2 = h2 * jnp.exp(s) + t
        return (jnp.concatenate([h1, h2], axis=-1),
                jnp.sum(s.reshape(B, -1), axis=1))

    z, ld2 = coupling(z, params["coupling1"])
    z = jnp.flip(z, axis=2)                                  # 'reverse' permutation
    z, ld4 = coupling(z, params["coupling2"])
    return z, logdet + ld2 + ld4


# ----------------------------- main -----------------------------
if __name__ == "__main__":
    key = jax.random.PRNGKey(0)
    kp, kx, kc = jax.random.split(key, 3)

    params = make_params(kp)
    # B*N = 4096 points -> TP = 1024, 4 grid steps (>= 2 steps per v7x TensorCore).
    B, N = 2, 2048
    x = jax.random.normal(kx, (B, N, IDIM), dtype=jnp.float32)
    c = jax.random.normal(kc, (B, N, CDIM), dtype=jnp.float32)

    y, logdet = jax.jit(flowblock_forward)(x, c, params)
    jax.block_until_ready((y, logdet))

    y_ref, ld_ref = reference_forward(x, c, params)
    assert y.shape == (B, N, IDIM), y.shape
    assert logdet.shape == (B,), logdet.shape
    assert bool(jnp.all(jnp.isfinite(y))) and bool(jnp.all(jnp.isfinite(logdet)))
    # bf16 MXU operands (f32 accumulation) -> slightly loose tolerances
    assert jnp.allclose(y, y_ref, atol=7.5e-2, rtol=5e-2), \
        float(jnp.max(jnp.abs(y - y_ref)))
    assert jnp.allclose(logdet, ld_ref, atol=1.0, rtol=5e-2), (logdet, ld_ref)
    print("KERNEL_OK")
</pallas_src>

<mosaic_0001>
module attributes {stable_mosaic.version = 11 : i64} {
  func.func @flowblock_kernel(%arg0: i32, %arg1: memref<4x1024xf32, #tpu.memory_space<vmem>>, %arg2: memref<8x1024xf32, #tpu.memory_space<vmem>>, %arg3: memref<4x4xf32, #tpu.memory_space<vmem>>, %arg4: memref<4x1xf32, #tpu.memory_space<vmem>>, %arg5: memref<128x8xbf16, #tpu.memory_space<vmem>>, %arg6: memref<2x64x2xbf16, #tpu.memory_space<vmem>>, %arg7: memref<2x64x1xf32, #tpu.memory_space<vmem>>, %arg8: memref<2x64x64xbf16, #tpu.memory_space<vmem>>, %arg9: memref<2x64x1xf32, #tpu.memory_space<vmem>>, %arg10: memref<2x64x64xbf16, #tpu.memory_space<vmem>>, %arg11: memref<2x64x1xf32, #tpu.memory_space<vmem>>, %arg12: memref<2x4x64xbf16, #tpu.memory_space<vmem>>, %arg13: memref<2x4x1xf32, #tpu.memory_space<vmem>>, %arg14: memref<4x1024xf32, #tpu.memory_space<vmem>>, %arg15: memref<1x1024xf32, #tpu.memory_space<vmem>>) attributes {dimension_semantics = [#tpu.dimension_semantics<parallel>], iteration_bounds = array<i64: 4>, scalar_prefetch = 0 : i64, scratch_operands = 0 : i64, tpu.core_type = #tpu.core_type<tc>, window_params = [{transform_indices = @transform_0, window_bounds = array<i64: 4, 1024>}, {transform_indices = @transform_1, window_bounds = array<i64: 8, 1024>}, {pipeline_mode = #tpu.pipeline_mode<synchronous>, transform_indices = @transform_2, window_bounds = array<i64: 4, 4>}, {pipeline_mode = #tpu.pipeline_mode<synchronous>, transform_indices = @transform_3, window_bounds = array<i64: 4, 1>}, {pipeline_mode = #tpu.pipeline_mode<synchronous>, transform_indices = @transform_4, window_bounds = array<i64: 128, 8>}, {pipeline_mode = #tpu.pipeline_mode<synchronous>, transform_indices = @transform_5, window_bounds = array<i64: 2, 64, 2>}, {pipeline_mode = #tpu.pipeline_mode<synchronous>, transform_indices = @transform_6, window_bounds = array<i64: 2, 64, 1>}, {pipeline_mode = #tpu.pipeline_mode<synchronous>, transform_indices = @transform_7, window_bounds = array<i64: 2, 64, 64>}, {pipeline_mode = #tpu.pipeline_mode<synchronous>, transform_indices = @transform_8, window_bounds = array<i64: 2, 64, 1>}, {pipeline_mode = #tpu.pipeline_mode<synchronous>, transform_indices = @transform_9, window_bounds = array<i64: 2, 64, 64>}, {pipeline_mode = #tpu.pipeline_mode<synchronous>, transform_indices = @transform_10, window_bounds = array<i64: 2, 64, 1>}, {pipeline_mode = #tpu.pipeline_mode<synchronous>, transform_indices = @transform_11, window_bounds = array<i64: 2, 4, 64>}, {pipeline_mode = #tpu.pipeline_mode<synchronous>, transform_indices = @transform_12, window_bounds = array<i64: 2, 4, 1>}, {transform_indices = @transform_13, window_bounds = array<i64: 4, 1024>}, {transform_indices = @transform_14, window_bounds = array<i64: 1, 1024>}]} {
    %c0 = arith.constant 0 : index
    %c0_0 = arith.constant 0 : index
    %0 = vector.load %arg1[%c0, %c0_0] : memref<4x1024xf32, #tpu.memory_space<vmem>>, vector<4x1024xf32>
    %c0_1 = arith.constant 0 : index
    %c0_2 = arith.constant 0 : index
    %1 = vector.load %arg3[%c0_1, %c0_2] : memref<4x4xf32, #tpu.memory_space<vmem>>, vector<4x4xf32>
    %cst = arith.constant dense<0.000000e+00> : vector<4x1024xf32>
    %2 = tpu.matmul %1, %0, %cst {dimension_numbers = #tpu.dot_dimension_numbers<[1], [0], [0], [1], [0, 0, 1, 1], [], []>} : vector<4x4xf32>, vector<4x1024xf32>, vector<4x1024xf32> -> vector<4x1024xf32>
    %c0_3 = arith.constant 0 : index
    %c0_4 = arith.constant 0 : index
    %3 = vector.load %arg4[%c0_3, %c0_4] : memref<4x1xf32, #tpu.memory_space<vmem>>, vector<4x1xf32>
    %4 = vector.broadcast %3 : vector<4x1xf32> to vector<4x1024xf32>
    %5 = arith.addf %2, %4 : vector<4x1024xf32>
    %6 = vector.extract_strided_slice %5 {offsets = [0, 0], sizes = [2, 1024], strides = [1, 1]} : vector<4x1024xf32> to vector<2x1024xf32>
    %7 = vector.extract_strided_slice %5 {offsets = [2, 0], sizes = [2, 1024], strides = [1, 1]} : vector<4x1024xf32> to vector<2x1024xf32>
    %c0_5 = arith.constant 0 : index
    %c0_6 = arith.constant 0 : index
    %8 = vector.load %arg2[%c0_5, %c0_6] : memref<8x1024xf32, #tpu.memory_space<vmem>>, vector<8x1024xf32>
    %9 = arith.truncf %8 : vector<8x1024xf32> to vector<8x1024xbf16>
    %c0_7 = arith.constant 0 : index
    %c0_8 = arith.constant 0 : index
    %10 = vector.load %arg5[%c0_7, %c0_8] : memref<128x8xbf16, #tpu.memory_space<vmem>>, vector<128x8xbf16>
    %cst_9 = arith.constant dense<0.000000e+00> : vector<128x1024xf32>
    %11 = tpu.matmul %10, %9, %cst_9 {dimension_numbers = #tpu.dot_dimension_numbers<[1], [0], [0], [1], [0, 0, 1, 1], [], []>} : vector<128x8xbf16>, vector<8x1024xbf16>, vector<128x1024xf32> -> vector<128x1024xf32>
    %c0_10 = arith.constant 0 : index
    %c0_11 = arith.constant 0 : index
    %c0_12 = arith.constant 0 : index
    %12 = vector.load %arg6[%c0_10, %c0_11, %c0_12] : memref<2x64x2xbf16, #tpu.memory_space<vmem>>, vector<1x64x2xbf16>
    %13 = vector.shape_cast %12 : vector<1x64x2xbf16> to vector<64x2xbf16>
    %14 = arith.truncf %6 : vector<2x1024xf32> to vector<2x1024xbf16>
    %cst_13 = arith.constant dense<0.000000e+00> : vector<64x1024xf32>
    %15 = tpu.matmul %13, %14, %cst_13 {dimension_numbers = #tpu.dot_dimension_numbers<[1], [0], [0], [1], [0, 0, 1, 1], [], []>} : vector<64x2xbf16>, vector<2x1024xbf16>, vector<64x1024xf32> -> vector<64x1024xf32>
    %16 = vector.extract_strided_slice %11 {offsets = [0, 0], sizes = [64, 1024], strides = [1, 1]} : vector<128x1024xf32> to vector<64x1024xf32>
    %17 = arith.addf %15, %16 : vector<64x1024xf32>
    %c0_14 = arith.constant 0 : index
    %c0_15 = arith.constant 0 : index
    %c0_16 = arith.constant 0 : index
    %18 = vector.load %arg7[%c0_14, %c0_15, %c0_16] : memref<2x64x1xf32, #tpu.memory_space<vmem>>, vector<1x64x1xf32>
    %19 = vector.shape_cast %18 : vector<1x64x1xf32> to vector<64x1xf32>
    %20 = vector.broadcast %19 : vector<64x1xf32> to vector<64x1024xf32>
    %21 = arith.addf %17, %20 : vector<64x1024xf32>
    %cst_17 = arith.constant 0.000000e+00 : f32
    %22 = vector.broadcast %cst_17 : f32 to vector<64x1024xf32>
    %23 = arith.maximumf %21, %22 : vector<64x1024xf32>
    %24 = arith.truncf %23 : vector<64x1024xf32> to vector<64x1024xbf16>
    %c0_18 = arith.constant 0 : index
    %c0_19 = arith.constant 0 : index
    %c0_20 = arith.constant 0 : index
    %25 = vector.load %arg8[%c0_18, %c0_19, %c0_20] : memref<2x64x64xbf16, #tpu.memory_space<vmem>>, vector<1x64x64xbf16>
    %26 = vector.shape_cast %25 : vector<1x64x64xbf16> to vector<64x64xbf16>
    %cst_21 = arith.constant dense<0.000000e+00> : vector<64x1024xf32>
    %27 = tpu.matmul %26, %24, %cst_21 {dimension_numbers = #tpu.dot_dimension_numbers<[1], [0], [0], [1], [0, 0, 1, 1], [], []>} : vector<64x64xbf16>, vector<64x1024xbf16>, vector<64x1024xf32> -> vector<64x1024xf32>
    %c0_22 = arith.constant 0 : index
    %c0_23 = arith.constant 0 : index
    %c0_24 = arith.constant 0 : index
    %28 = vector.load %arg9[%c0_22, %c0_23, %c0_24] : memref<2x64x1xf32, #tpu.memory_space<vmem>>, vector<1x64x1xf32>
    %29 = vector.shape_cast %28 : vector<1x64x1xf32> to vector<64x1xf32>
    %30 = vector.broadcast %29 : vector<64x1xf32> to vector<64x1024xf32>
    %31 = arith.addf %27, %30 : vector<64x1024xf32>
    %cst_25 = arith.constant 0.000000e+00 : f32
    %32 = vector.broadcast %cst_25 : f32 to vector<64x1024xf32>
    %33 = arith.maximumf %31, %32 : vector<64x1024xf32>
    %34 = arith.truncf %33 : vector<64x1024xf32> to vector<64x1024xbf16>
    %c0_26 = arith.constant 0 : index
    %c0_27 = arith.constant 0 : index
    %c0_28 = arith.constant 0 : index
    %35 = vector.load %arg10[%c0_26, %c0_27, %c0_28] : memref<2x64x64xbf16, #tpu.memory_space<vmem>>, vector<1x64x64xbf16>
    %36 = vector.shape_cast %35 : vector<1x64x64xbf16> to vector<64x64xbf16>
    %cst_29 = arith.constant dense<0.000000e+00> : vector<64x1024xf32>
    %37 = tpu.matmul %36, %34, %cst_29 {dimension_numbers = #tpu.dot_dimension_numbers<[1], [0], [0], [1], [0, 0, 1, 1], [], []>} : vector<64x64xbf16>, vector<64x1024xbf16>, vector<64x1024xf32> -> vector<64x1024xf32>
    %c0_30 = arith.constant 0 : index
    %c0_31 = arith.constant 0 : index
    %c0_32 = arith.constant 0 : index
    %38 = vector.load %arg11[%c0_30, %c0_31, %c0_32] : memref<2x64x1xf32, #tpu.memory_space<vmem>>, vector<1x64x1xf32>
    %39 = vector.shape_cast %38 : vector<1x64x1xf32> to vector<64x1xf32>
    %40 = vector.broadcast %39 : vector<64x1xf32> to vector<64x1024xf32>
    %41 = arith.addf %37, %40 : vector<64x1024xf32>
    %cst_33 = arith.constant 0.000000e+00 : f32
    %42 = vector.broadcast %cst_33 : f32 to vector<64x1024xf32>
    %43 = arith.maximumf %41, %42 : vector<64x1024xf32>
    %44 = arith.truncf %43 : vector<64x1024xf32> to vector<64x1024xbf16>
    %c0_34 = arith.constant 0 : index
    %c0_35 = arith.constant 0 : index
    %c0_36 = arith.constant 0 : index
    %45 = vector.load %arg12[%c0_34, %c0_35, %c0_36] : memref<2x4x64xbf16, #tpu.memory_space<vmem>>, vector<1x4x64xbf16>
    %46 = vector.shape_cast %45 : vector<1x4x64xbf16> to vector<4x64xbf16>
    %cst_37 = arith.constant dense<0.000000e+00> : vector<4x1024xf32>
    %47 = tpu.matmul %46, %44, %cst_37 {dimension_numbers = #tpu.dot_dimension_numbers<[1], [0], [0], [1], [0, 0, 1, 1], [], []>} : vector<4x64xbf16>, vector<64x1024xbf16>, vector<4x1024xf32> -> vector<4x1024xf32>
    %c0_38 = arith.constant 0 : index
    %c0_39 = arith.constant 0 : index
    %c0_40 = arith.constant 0 : index
    %48 = vector.load %arg13[%c0_38, %c0_39, %c0_40] : memref<2x4x1xf32, #tpu.memory_space<vmem>>, vector<1x4x1xf32>
    %49 = vector.shape_cast %48 : vector<1x4x1xf32> to vector<4x1xf32>
    %50 = vector.broadcast %49 : vector<4x1xf32> to vector<4x1024xf32>
    %51 = arith.addf %47, %50 : vector<4x1024xf32>
    %52 = vector.extract_strided_slice %51 {offsets = [0, 0], sizes = [2, 1024], strides = [1, 1]} : vector<4x1024xf32> to vector<2x1024xf32>
    %cst_41 = arith.constant 1.900000e+00 : f32
    %53 = vector.broadcast %cst_41 : f32 to vector<2x1024xf32>
    %54 = arith.divf %52, %53 : vector<2x1024xf32>
    %55 = math.tanh %54 : vector<2x1024xf32>
    %cst_42 = arith.constant 1.900000e+00 : f32
    %56 = vector.broadcast %cst_42 : f32 to vector<2x1024xf32>
    %57 = arith.mulf %56, %55 : vector<2x1024xf32>
    %58 = vector.extract_strided_slice %51 {offsets = [2, 0], sizes = [2, 1024], strides = [1, 1]} : vector<4x1024xf32> to vector<2x1024xf32>
    %59 = math.exp %57 : vector<2x1024xf32>
    %60 = arith.mulf %7, %59 : vector<2x1024xf32>
    %61 = arith.addf %60, %58 : vector<2x1024xf32>
    %c1 = arith.constant 1 : index
    %c0_43 = arith.constant 0 : index
    %c0_44 = arith.constant 0 : index
    %62 = vector.load %arg6[%c1, %c0_43, %c0_44] : memref<2x64x2xbf16, #tpu.memory_space<vmem>>, vector<1x64x2xbf16>
    %63 = vector.shape_cast %62 : vector<1x64x2xbf16> to vector<64x2xbf16>
    %64 = arith.truncf %61 : vector<2x1024xf32> to vector<2x1024xbf16>
    %cst_45 = arith.constant dense<0.000000e+00> : vector<64x1024xf32>
    %65 = tpu.matmul %63, %64, %cst_45 {dimension_numbers = #tpu.dot_dimension_numbers<[1], [0], [0], [1], [0, 0, 1, 1], [], []>} : vector<64x2xbf16>, vector<2x1024xbf16>, vector<64x1024xf32> -> vector<64x1024xf32>
    %66 = vector.extract_strided_slice %11 {offsets = [64, 0], sizes = [64, 1024], strides = [1, 1]} : vector<128x1024xf32> to vector<64x1024xf32>
    %67 = arith.addf %65, %66 : vector<64x1024xf32>
    %c1_46 = arith.constant 1 : index
    %c0_47 = arith.constant 0 : index
    %c0_48 = arith.constant 0 : index
    %68 = vector.load %arg7[%c1_46, %c0_47, %c0_48] : memref<2x64x1xf32, #tpu.memory_space<vmem>>, vector<1x64x1xf32>
    %69 = vector.shape_cast %68 : vector<1x64x1xf32> to vector<64x1xf32>
    %70 = vector.broadcast %69 : vector<64x1xf32> to vector<64x1024xf32>
    %71 = arith.addf %67, %70 : vector<64x1024xf32>
    %cst_49 = arith.constant 0.000000e+00 : f32
    %72 = vector.broadcast %cst_49 : f32 to vector<64x1024xf32>
    %73 = arith.maximumf %71, %72 : vector<64x1024xf32>
    %74 = arith.truncf %73 : vector<64x1024xf32> to vector<64x1024xbf16>
    %c1_50 = arith.constant 1 : index
    %c0_51 = arith.constant 0 : index
    %c0_52 = arith.constant 0 : index
    %75 = vector.load %arg8[%c1_50, %c0_51, %c0_52] : memref<2x64x64xbf16, #tpu.memory_space<vmem>>, vector<1x64x64xbf16>
    %76 = vector.shape_cast %75 : vector<1x64x64xbf16> to vector<64x64xbf16>
    %cst_53 = arith.constant dense<0.000000e+00> : vector<64x1024xf32>
    %77 = tpu.matmul %76, %74, %cst_53 {dimension_numbers = #tpu.dot_dimension_numbers<[1], [0], [0], [1], [0, 0, 1, 1], [], []>} : vector<64x64xbf16>, vector<64x1024xbf16>, vector<64x1024xf32> -> vector<64x1024xf32>
    %c1_54 = arith.constant 1 : index
    %c0_55 = arith.constant 0 : index
    %c0_56 = arith.constant 0 : index
    %78 = vector.load %arg9[%c1_54, %c0_55, %c0_56] : memref<2x64x1xf32, #tpu.memory_space<vmem>>, vector<1x64x1xf32>
    %79 = vector.shape_cast %78 : vector<1x64x1xf32> to vector<64x1xf32>
    %80 = vector.broadcast %79 : vector<64x1xf32> to vector<64x1024xf32>
    %81 = arith.addf %77, %80 : vector<64x1024xf32>
    %cst_57 = arith.constant 0.000000e+00 : f32
    %82 = vector.broadcast %cst_57 : f32 to vector<64x1024xf32>
    %83 = arith.maximumf %81, %82 : vector<64x1024xf32>
    %84 = arith.truncf %83 : vector<64x1024xf32> to vector<64x1024xbf16>
    %c1_58 = arith.constant 1 : index
    %c0_59 = arith.constant 0 : index
    %c0_60 = arith.constant 0 : index
    %85 = vector.load %arg10[%c1_58, %c0_59, %c0_60] : memref<2x64x64xbf16, #tpu.memory_space<vmem>>, vector<1x64x64xbf16>
    %86 = vector.shape_cast %85 : vector<1x64x64xbf16> to vector<64x64xbf16>
    %cst_61 = arith.constant dense<0.000000e+00> : vector<64x1024xf32>
    %87 = tpu.matmul %86, %84, %cst_61 {dimension_numbers = #tpu.dot_dimension_numbers<[1], [0], [0], [1], [0, 0, 1, 1], [], []>} : vector<64x64xbf16>, vector<64x1024xbf16>, vector<64x1024xf32> -> vector<64x1024xf32>
    %c1_62 = arith.constant 1 : index
    %c0_63 = arith.constant 0 : index
    %c0_64 = arith.constant 0 : index
    %88 = vector.load %arg11[%c1_62, %c0_63, %c0_64] : memref<2x64x1xf32, #tpu.memory_space<vmem>>, vector<1x64x1xf32>
    %89 = vector.shape_cast %88 : vector<1x64x1xf32> to vector<64x1xf32>
    %90 = vector.broadcast %89 : vector<64x1xf32> to vector<64x1024xf32>
    %91 = arith.addf %87, %90 : vector<64x1024xf32>
    %cst_65 = arith.constant 0.000000e+00 : f32
    %92 = vector.broadcast %cst_65 : f32 to vector<64x1024xf32>
    %93 = arith.maximumf %91, %92 : vector<64x1024xf32>
    %94 = arith.truncf %93 : vector<64x1024xf32> to vector<64x1024xbf16>
    %c1_66 = arith.constant 1 : index
    %c0_67 = arith.constant 0 : index
    %c0_68 = arith.constant 0 : index
    %95 = vector.load %arg12[%c1_66, %c0_67, %c0_68] : memref<2x4x64xbf16, #tpu.memory_space<vmem>>, vector<1x4x64xbf16>
    %96 = vector.shape_cast %95 : vector<1x4x64xbf16> to vector<4x64xbf16>
    %cst_69 = arith.constant dense<0.000000e+00> : vector<4x1024xf32>
    %97 = tpu.matmul %96, %94, %cst_69 {dimension_numbers = #tpu.dot_dimension_numbers<[1], [0], [0], [1], [0, 0, 1, 1], [], []>} : vector<4x64xbf16>, vector<64x1024xbf16>, vector<4x1024xf32> -> vector<4x1024xf32>
    %c1_70 = arith.constant 1 : index
    %c0_71 = arith.constant 0 : index
    %c0_72 = arith.constant 0 : index
    %98 = vector.load %arg13[%c1_70, %c0_71, %c0_72] : memref<2x4x1xf32, #tpu.memory_space<vmem>>, vector<1x4x1xf32>
    %99 = vector.shape_cast %98 : vector<1x4x1xf32> to vector<4x1xf32>
    %100 = vector.broadcast %99 : vector<4x1xf32> to vector<4x1024xf32>
    %101 = arith.addf %97, %100 : vector<4x1024xf32>
    %102 = vector.extract_strided_slice %101 {offsets = [0, 0], sizes = [2, 1024], strides = [1, 1]} : vector<4x1024xf32> to vector<2x1024xf32>
    %cst_73 = arith.constant 1.900000e+00 : f32
    %103 = vector.broadcast %cst_73 : f32 to vector<2x1024xf32>
    %104 = arith.divf %102, %103 : vector<2x1024xf32>
    %105 = math.tanh %104 : vector<2x1024xf32>
    %cst_74 = arith.constant 1.900000e+00 : f32
    %106 = vector.broadcast %cst_74 : f32 to vector<2x1024xf32>
    %107 = arith.mulf %106, %105 : vector<2x1024xf32>
    %108 = vector.extract_strided_slice %101 {offsets = [2, 0], sizes = [2, 1024], strides = [1, 1]} : vector<4x1024xf32> to vector<2x1024xf32>
    %109 = math.exp %107 : vector<2x1024xf32>
    %110 = arith.mulf %6, %109 : vector<2x1024xf32>
    %111 = arith.addf %110, %108 : vector<2x1024xf32>
    %112 = tpu.concatenate %61, %111 in 0 : vector<2x1024xf32>, vector<2x1024xf32> -> vector<4x1024xf32>
    %c0_75 = arith.constant 0 : index
    %c0_76 = arith.constant 0 : index
    %113 = vector.load %arg14[%c0_75, %c0_76] : memref<4x1024xf32, #tpu.memory_space<vmem>>, vector<4x1024xf32>
    tpu.vector_store %arg14[%c0_75, %c0_76], %112 {strides = array<i32>} : memref<4x1024xf32, #tpu.memory_space<vmem>>, vector<4x1024xf32>,
    %cst_77 = arith.constant dense<0.000000e+00> : vector<1024xf32>
    %114 = vector.multi_reduction <add>, %57, %cst_77 [0] : vector<2x1024xf32> to vector<1024xf32>
    %115 = vector.shape_cast %114 : vector<1024xf32> to vector<1x1024xf32>
    %cst_78 = arith.constant dense<0.000000e+00> : vector<1024xf32>
    %116 = vector.multi_reduction <add>, %107, %cst_78 [0] : vector<2x1024xf32> to vector<1024xf32>
    %117 = vector.shape_cast %116 : vector<1024xf32> to vector<1x1024xf32>
    %118 = arith.addf %115, %117 : vector<1x1024xf32>
    %c0_79 = arith.constant 0 : index
    %c0_80 = arith.constant 0 : index
    %119 = vector.load %arg15[%c0_79, %c0_80] : memref<1x1024xf32, #tpu.memory_space<vmem>>, vector<1x1024xf32>
    tpu.vector_store %arg15[%c0_79, %c0_80], %118 {strides = array<i32>} : memref<1x1024xf32, #tpu.memory_space<vmem>>, vector<1x1024xf32>,
    return
  }
  func.func @transform_0(%arg0: i32) -> (i32, i32) {
    %c0_i32 = arith.constant 0 : i32
    %c0_i32_0 = arith.constant 0 : i32
    return %c0_i32, %arg0 : i32, i32
  }
  func.func @transform_1(%arg0: i32) -> (i32, i32) {
    %c0_i32 = arith.constant 0 : i32
    %c0_i32_0 = arith.constant 0 : i32
    return %c0_i32, %arg0 : i32, i32
  }
  func.func @transform_2(%arg0: i32) -> (i32, i32) {
    %c0_i32 = arith.constant 0 : i32
    %c0_i32_0 = arith.constant 0 : i32
    %c0_i32_1 = arith.constant 0 : i32
    return %c0_i32, %c0_i32_0 : i32, i32
  }
  func.func @transform_3(%arg0: i32) -> (i32, i32) {
    %c0_i32 = arith.constant 0 : i32
    %c0_i32_0 = arith.constant 0 : i32
    %c0_i32_1 = arith.constant 0 : i32
    return %c0_i32, %c0_i32_0 : i32, i32
  }
  func.func @transform_4(%arg0: i32) -> (i32, i32) {
    %c0_i32 = arith.constant 0 : i32
    %c0_i32_0 = arith.constant 0 : i32
    %c0_i32_1 = arith.constant 0 : i32
    return %c0_i32, %c0_i32_0 : i32, i32
  }
  func.func @transform_5(%arg0: i32) -> (i32, i32, i32) {
    %c0_i32 = arith.constant 0 : i32
    %c0_i32_0 = arith.constant 0 : i32
    %c0_i32_1 = arith.constant 0 : i32
    %c0_i32_2 = arith.constant 0 : i32
    return %c0_i32, %c0_i32_0, %c0_i32_1 : i32, i32, i32
  }
  func.func @transform_6(%arg0: i32) -> (i32, i32, i32) {
    %c0_i32 = arith.constant 0 : i32
    %c0_i32_0 = arith.constant 0 : i32
    %c0_i32_1 = arith.constant 0 : i32
    %c0_i32_2 = arith.constant 0 : i32
    return %c0_i32, %c0_i32_0, %c0_i32_1 : i32, i32, i32
  }
  func.func @transform_7(%arg0: i32) -> (i32, i32, i32) {
    %c0_i32 = arith.constant 0 : i32
    %c0_i32_0 = arith.constant 0 : i32
    %c0_i32_1 = arith.constant 0 : i32
    %c0_i32_2 = arith.constant 0 : i32
    return %c0_i32, %c0_i32_0, %c0_i32_1 : i32, i32, i32
  }
  func.func @transform_8(%arg0: i32) -> (i32, i32, i32) {
    %c0_i32 = arith.constant 0 : i32
    %c0_i32_0 = arith.constant 0 : i32
    %c0_i32_1 = arith.constant 0 : i32
    %c0_i32_2 = arith.constant 0 : i32
    return %c0_i32, %c0_i32_0, %c0_i32_1 : i32, i32, i32
  }
  func.func @transform_9(%arg0: i32) -> (i32, i32, i32) {
    %c0_i32 = arith.constant 0 : i32
    %c0_i32_0 = arith.constant 0 : i32
    %c0_i32_1 = arith.constant 0 : i32
    %c0_i32_2 = arith.constant 0 : i32
    return %c0_i32, %c0_i32_0, %c0_i32_1 : i32, i32, i32
  }
  func.func @transform_10(%arg0: i32) -> (i32, i32, i32) {
    %c0_i32 = arith.constant 0 : i32
    %c0_i32_0 = arith.constant 0 : i32
    %c0_i32_1 = arith.constant 0 : i32
    %c0_i32_2 = arith.constant 0 : i32
    return %c0_i32, %c0_i32_0, %c0_i32_1 : i32, i32, i32
  }
  func.func @transform_11(%arg0: i32) -> (i32, i32, i32) {
    %c0_i32 = arith.constant 0 : i32
    %c0_i32_0 = arith.constant 0 : i32
    %c0_i32_1 = arith.constant 0 : i32
    %c0_i32_2 = arith.constant 0 : i32
    return %c0_i32, %c0_i32_0, %c0_i32_1 : i32, i32, i32
  }
  func.func @transform_12(%arg0: i32) -> (i32, i32, i32) {
    %c0_i32 = arith.constant 0 : i32
    %c0_i32_0 = arith.constant 0 : i32
    %c0_i32_1 = arith.constant 0 : i32
    %c0_i32_2 = arith.constant 0 : i32
    return %c0_i32, %c0_i32_0, %c0_i32_1 : i32, i32, i32
  }
  func.func @transform_13(%arg0: i32) -> (i32, i32) {
    %c0_i32 = arith.constant 0 : i32
    %c0_i32_0 = arith.constant 0 : i32
    return %c0_i32, %arg0 : i32, i32
  }
  func.func @transform_14(%arg0: i32) -> (i32, i32) {
    %c0_i32 = arith.constant 0 : i32
    %c0_i32_0 = arith.constant 0 : i32
    return %c0_i32, %arg0 : i32, i32
  }
}

</mosaic_0001>

<llo_original>
// kernel: squeeze.1
$region0: #{squeeze.1}
  %s0 = inlined_call_operand.vmem [shape: f32[4096], index: 0, kind: input, shape index: {}]
  %s1 = inlined_call_operand.vmem [shape: f32[2,2048], index: 1, kind: output, shape index: {}]
  $region1: #{squeeze.1} parent=0
    #allocation0 [shape = 'u8[65536]{0}', space=vmem, size = 0x10000, scoped, tag = 'scoped mem for output reshape']
    %v2 = vld [vmem:[%s0] sm:$0xff]
    %3 = vst [vmem:[#allocation0] ss:$8 sm:$0xf] %v2
    %4 = vst [vmem:[#allocation0] ss:$8 sm:$0xf0] %v2
    %s5 = scalar_lea.vmem %s0, 8
    %v6 = vld [vmem:[%s5] sm:$0xff]
    %s7 = scalar_lea.vmem [#allocation0], 64
    %8 = vst [vmem:[%s7] ss:$8 sm:$0xf] %v6
    %s9 = scalar_lea.vmem [#allocation0], 64
    %10 = vst [vmem:[%s9] ss:$8 sm:$0xf0] %v6
    %s11 = scalar_lea.vmem %s0, 16
    %v12 = vld [vmem:[%s11] sm:$0xff]
    %s13 = scalar_lea.vmem [#allocation0], 1
    %14 = vst [vmem:[%s13] ss:$8 sm:$0xf] %v12
    %s15 = scalar_lea.vmem [#allocation0], 1
    %16 = vst [vmem:[%s15] ss:$8 sm:$0xf0] %v12
    %s17 = scalar_lea.vmem %s0, 24
    %v18 = vld [vmem:[%s17] sm:$0xff]
    %s19 = scalar_lea.vmem [#allocation0], 65
    %20 = vst [vmem:[%s19] ss:$8 sm:$0xf] %v18
    %s21 = scalar_lea.vmem [#allocation0], 65
    %22 = vst [vmem:[%s21] ss:$8 sm:$0xf0] %v18
    %s24 = sshll.u32 1, 2
    %s25 = ssub.s32 %s24, 1
    %v27 = vld [vmem:[#allocation0] sm:%s25]
    %s28 = sshll.u32 1, 2
    %s29 = ssub.s32 %s28, 1
    %30 = vst [vmem:[%s1] sm:%s29] %v27
    %s31 = scalar_lea.vmem [#allocation0], 8
    %v32 = vld [vmem:[%s31] sm:%s25]
    %s33 = sshll.u32 1, 2
    %s34 = ssub.s32 %s33, 1
    %s35 = scalar_lea.vmem %s1, 2
    %36 = vst [vmem:[%s35] sm:%s34] %v32
    %s37 = scalar_lea.vmem [#allocation0], 16
    %v38 = vld [vmem:[%s37] sm:%s25]
    %s39 = sshll.u32 1, 2
    %s40 = ssub.s32 %s39, 1
    %s41 = smul.addr 2, 2
    %s42 = scalar_lea.vmem %s1, %s41
    %43 = vst [vmem:[%s42] sm:%s40] %v38
    %s44 = scalar_lea.vmem [#allocation0], 24
    %v45 = vld [vmem:[%s44] sm:%s25]
    %s46 = sshll.u32 1, 2
    %s47 = ssub.s32 %s46, 1
    %s48 = smul.addr 2, 3
    %s49 = scalar_lea.vmem %s1, %s48
    %50 = vst [vmem:[%s49] sm:%s47] %v45
    %s51 = scalar_lea.vmem [#allocation0], 32
    %v52 = vld [vmem:[%s51] sm:%s25]
    %s53 = sshll.u32 1, 2
    %s54 = ssub.s32 %s53, 1
    %s55 = smul.addr 2, 4
    %s56 = scalar_lea.vmem %s1, %s55
    %57 = vst [vmem:[%s56] sm:%s54] %v52
    %s58 = scalar_lea.vmem [#allocation0], 40
    %v59 = vld [vmem:[%s58] sm:%s25]
    %s60 = sshll.u32 1, 2
    %s61 = ssub.s32 %s60, 1
    %s62 = smul.addr 2, 5
    %s63 = scalar_lea.vmem %s1, %s62
    %64 = vst [vmem:[%s63] sm:%s61] %v59
    %s65 = scalar_lea.vmem [#allocation0], 48
    %v66 = vld [vmem:[%s65] sm:%s25]
    %s67 = sshll.u32 1, 2
    %s68 = ssub.s32 %s67, 1
    %s69 = smul.addr 2, 6
    %s70 = scalar_lea.vmem %s1, %s69
    %71 = vst [vmem:[%s70] sm:%s68] %v66
    %s72 = scalar_lea.vmem [#allocation0], 56
    %v73 = vld [vmem:[%s72] sm:%s25]
    %s74 = sshll.u32 1, 2
    %s75 = ssub.s32 %s74, 1
    %s76 = smul.addr 2, 7
    %s77 = scalar_lea.vmem %s1, %s76
    %78 = vst [vmem:[%s77] sm:%s75] %v73
    %s79 = scalar_lea.vmem [#allocation0], 64
    %v80 = vld [vmem:[%s79] sm:%s25]
    %s81 = sshll.u32 1, 2
    %s82 = ssub.s32 %s81, 1
    %s83 = smul.addr 2, 8
    %s84 = scalar_lea.vmem %s1, %s83
    %85 = vst [vmem:[%s84] sm:%s82] %v80
    %s86 = scalar_lea.vmem [#allocation0], 72
    %v87 = vld [vmem:[%s86] sm:%s25]
    %s88 = sshll.u32 1, 2
    %s89 = ssub.s32 %s88, 1
    %s90 = smul.addr 2, 9
    %s91 = scalar_lea.vmem %s1, %s90
    %92 = vst [vmem:[%s91] sm:%s89] %v87
    %s93 = scalar_lea.vmem [#allocation0], 80
    %v94 = vld [vmem:[%s93] sm:%s25]
    %s95 = sshll.u32 1, 2
    %s96 = ssub.s32 %s95, 1
    %s97 = smul.addr 2, 10
    %s98 = scalar_lea.vmem %s1, %s97
    %99 = vst [vmem:[%s98] sm:%s96] %v94
    %s100 = scalar_lea.vmem [#allocation0], 88
    %v101 = vld [vmem:[%s100] sm:%s25]
    %s102 = sshll.u32 1, 2
    %s103 = ssub.s32 %s102, 1
    %s104 = smul.addr 2, 11
    %s105 = scalar_lea.vmem %s1, %s104
    %106 = vst [vmem:[%s105] sm:%s103] %v101
    %s107 = scalar_lea.vmem [#allocation0], 96
    %v108 = vld [vmem:[%s107] sm:%s25]
    %s109 = sshll.u32 1, 2
    %s110 = ssub.s32 %s109, 1
    %s111 = smul.addr 2, 12
    %s112 = scalar_lea.vmem %s1, %s111
    %113 = vst [vmem:[%s112] sm:%s110] %v108
    %s114 = scalar_lea.vmem [#allocation0], 104
    %v115 = vld [vmem:[%s114] sm:%s25]
    %s116 = sshll.u32 1, 2
    %s117 = ssub.s32 %s116, 1
    %s118 = smul.addr 2, 13
    %s119 = scalar_lea.vmem %s1, %s118
    %120 = vst [vmem:[%s119] sm:%s117] %v115
    %s121 = scalar_lea.vmem [#allocation0], 112
    %v122 = vld [vmem:[%s121] sm:%s25]
    %s123 = sshll.u32 1, 2
    %s124 = ssub.s32 %s123, 1
    %s125 = smul.addr 2, 14
    %s126 = scalar_lea.vmem %s1, %s125
    %127 = vst [vmem:[%s126] sm:%s124] %v122
    %s128 = scalar_lea.vmem [#allocation0], 120
    %v129 = vld [vmem:[%s128] sm:%s25]
    %s130 = sshll.u32 1, 2
    %s131 = ssub.s32 %s130, 1
    %s132 = smul.addr 2, 15
    %s133 = scalar_lea.vmem %s1, %s132
    %134 = vst [vmem:[%s133] sm:%s131] %v129

// kernel: custom-call.2
$region0: #{custom-call.2}
  %s0 = inlined_call_operand.vmem [shape: f32[4,4], index: 0, kind: input, shape index: {}]
  %s1 = inlined_call_operand.vmem [shape: f32[4,4], index: 1, kind: output, shape index: {0}]
  %s2 = inlined_call_operand.hbm [shape: s32[4], index: 2, kind: output, shape index: {1}]
  %s3 = inlined_call_operand.hbm [shape: s32[4], index: 3, kind: output, shape index: {2}]
  %4 = xla_tuple %s1, %s2, %s3
  $region1: #{custom-call.2} parent=0
    #allocation0 [shape = 'u8[4096]{0}', space=vmem, size = 0x1000, scoped, tag = 'operand span for operand 0']
    #allocation1 [shape = 'u8[2048]{0}', space=vmem, size = 0x800, scoped, tag = 'packed  for operand 0']
    #allocation2 [shape = 'u8[4096]{0}', space=vmem, size = 0x1000, scoped, tag = 'operand span for operand 1']
    #allocation3 [shape = 'u8[2048]{0}', space=vmem, size = 0x800, scoped, tag = 'packed  for operand 1']
    #allocation4 [shape = 'u8[4096]{0}', space=vmem, size = 0x1000, scoped, tag = 'operand span for operand 2']
    #allocation5 [shape = 'u8[512]{0}', space=vmem, size = 0x400, scoped, tag = 'packed  for operand 2']
    #allocation6 [shape = 's32[1]{0}', space=sflag, size = 0x4, scoped, tag = 'scoped memory for custom-call.2']
    #allocation7 [shape = 'u8[4096]{0}', space=vmem, size = 0x1000, scoped, tag = 'operand span for operand 3']
    #allocation8 [shape = 'u8[512]{0}', space=vmem, size = 0x400, scoped, tag = 'packed  for operand 3']
    #allocation9 [shape = 's32[1]{0}', space=sflag, size = 0x4, scoped, tag = 'scoped memory for custom-call.2']
    #allocation10 [shape = 's32[4,128]{1,0}', space=vmem, size = 0x1000, scoped, tag = 'scratch for permutations']
    %5 = vsyncpa [#allocation6], 0
    %6 = vsyncpa [#allocation9], 0
    %p8 = scmp.gt.s32.totalorder 4, 0
    // Predicated region
    $region2: #{custom-call.2} parent=1 // pred_check
      %p9 = pneg %p8
    $region3: #{custom-call.2} parent=1 // pred_check_branch
      %11 = sbr.rel (%p9) target = $region5
    $region4: #{custom-call.2} parent=1 // pred_region
      %s12 = sshra.s32 4, 3
      %p13 = scmp.gt.s32.totalorder %s12, 0
      // Predicated region
      $region6: #{custom-call.2} parent=4 // pred_check
        %p14 = pneg %p13
      $region7: #{custom-call.2} parent=4 // pred_check_branch
        %16 = sbr.rel (%p14) target = $region9
      $region8: #{custom-call.2} parent=4 // pred_region
        %s17 = ssub.s32 %s12, 1
        %s18 = smul.u32 %s17, 128
        %s19 = sshra.s32 %s18, 4
        %s20 = scalar_lea.vmem %s0, %s19
        %v21 = vld [vmem:[%s0] sm:$0xff]
        // While loop
        $region10: #{custom-call.2} parent=8 // loop_pre_header
          _
        $region11: #{custom-call.2} parent=8 // loop_header
          %s22 = sphi %s0, %s44
          %s23 = sphi [#allocation1], %s45
          %v24 = vphi %v21, %v46
          %s25 = ssub.s32 %s20, 64
          %p26 = scmp.gt.s32.totalorder %s22, %s25
        $region12: #{custom-call.2} parent=8 // loop_header_branch
          %28 = sbr.rel (%p26) target = $region16
        $region13: #{custom-call.2} parent=8 // loop_body
          %29 = vst [vmem:[%s23] sm:$0xff] %v24
          %v30 = vld [vmem:[%s22 + $0x8] sm:$0xff]
          %31 = vst [vmem:[%s23 + $0x8] sm:$0xff] %v30
          %v32 = vld [vmem:[%s22 + $0x10] sm:$0xff]
          %33 = vst [vmem:[%s23 + $0x10] sm:$0xff] %v32
          %v34 = vld [vmem:[%s22 + $0x18] sm:$0xff]
          %35 = vst [vmem:[%s23 + $0x18] sm:$0xff] %v34
          %v36 = vld [vmem:[%s22 + $0x20] sm:$0xff]
          %37 = vst [vmem:[%s23 + $0x20] sm:$0xff] %v36
          %v38 = vld [vmem:[%s22 + $0x28] sm:$0xff]
          %39 = vst [vmem:[%s23 + $0x28] sm:$0xff] %v38
          %v40 = vld [vmem:[%s22 + $0x30] sm:$0xff]
          %41 = vst [vmem:[%s23 + $0x30] sm:$0xff] %v40
          %v42 = vld [vmem:[%s22 + $0x38] sm:$0xff]
          %43 = vst [vmem:[%s23 + $0x38] sm:$0xff] %v42
        $region14: #{custom-call.2} parent=8 // loop_footer
          %s44 = scalar_lea.vmem %s22, 64
          %s45 = scalar_lea.vmem %s23, 64
          %v46 = vld [vmem:[%s22 + $0x40] sm:$0xff]
        $region15: #{custom-call.2} parent=8 // loop_footer_branch
          %47 = sbr.rel target = $region11
        $region16: #{custom-call.2} parent=8 // loop_exit
          _
        // While loop
        $region17: #{custom-call.2} parent=8 // loop_pre_header
          _
        $region18: #{custom-call.2} parent=8 // loop_header
          %s48 = sphi %s22, %s56
          %s49 = sphi %s23, %s57
          %v50 = vphi %v24, %v50
          %p51 = scmp.gt.s32.totalorder %s48, %s20
        $region19: #{custom-call.2} parent=8 // loop_header_branch
          %53 = sbr.rel (%p51) target = $region23
        $region20: #{custom-call.2} parent=8 // loop_body
          %v54 = vld [vmem:[%s48] sm:$0xff]
          %55 = vst [vmem:[%s49] sm:$0xff] %v54
        $region21: #{custom-call.2} parent=8 // loop_footer
          %s56 = scalar_lea.vmem %s48, 8
          %s57 = scalar_lea.vmem %s49, 8
        $region22: #{custom-call.2} parent=8 // loop_footer_branch
          %58 = sbr.rel target = $region18
        $region23: #{custom-call.2} parent=8 // loop_exit
          _
      $region9: #{custom-call.2} parent=4 // pred_fallthru
        _
      %s59 = sand.u32 4, 7
      %s60 = sshll.u32 1, %s59
      %s61 = ssub.s32 %s60, 1
      %s62 = smul.u32 %s12, 128
      %s63 = sshra.s32 %s62, 4
      %s64 = scalar_lea.vmem [#allocation1], %s63
      %s65 = smul.u32 %s12, 128
      %s66 = sshra.s32 %s65, 4
      %s67 = scalar_lea.vmem %s0, %s66
      %v68 = vld [vmem:[%s67] sm:%s61]
      %69 = vst [vmem:[%s64] sm:%s61] %v68
    $region5: #{custom-call.2} parent=1 // pred_fallthru
      _
    %s71 = sshll.u32 1, 4
    %s72 = ssub.s32 %s71, 1
    %v73 = vld [vmem:[#allocation1] sm:%s72]
    %74 = vst [vmem:[#allocation0] sm:%s72] %v73
    %v75 = vld [vmem:[#allocation0] sm:$0xff]
    %76 = vst [vmem:[#allocation2] sm:$0xff] %v75
    %77 = vst [vmem:[#allocation4] sm:$0x1] 0
    %v78 = vlaneseq
    %v79 = vshrl.u32 %v78, 7
    %v80 = vmov %v79
    %82 = vst [vmem:[#allocation10] sm:$0xff] %v80
    loop: start=0, step=1, limit=4
    $region25: #{custom-call.2} parent=1 // loop_pre_header
      _
    $region26: #{custom-call.2} parent=1 // loop_header
      %s84 = sphi 0, %s88
      %p85 = scmp.ge.s32.totalorder %s84, 4
    $region27: #{custom-call.2} parent=1 // loop_header_branch
      %87 = sbr.rel (%p85) target = $region31
    $region28: #{custom-call.2} parent=1 // loop_body
      %v89 = vstv %s84
      %v90 = vlaneseq
      %v91 = vshrl.u32 %v90, 7
      %v92 = vmov %v91
      %v93 = vld [vmem:[#allocation2] sm:$0xff]
      %v94 = vand.u32 2147483647, %v93
      %v96 = vstv %s84
      %vm97 = vcmp.ge.s32.totalorder %v92, %v96
      %vm98 = vcmp.lt.s32.totalorder %v92, 4
      %vm99 = vmand %vm97, %vm98
      %vm100 = vcmp.lt.f32.partialorder -inf, %v94
      %vm101 = vmand %vm99, %vm100
      %v102 = vsel %vm101, %v92, %v89
      %v103 = vsel %vm101, %v94, -inf
      %v104 = vrot.slane %v103, 1
      %v105 = vrot.slane %v102, 1
      %vm106 = vcmp.ge.f32.partialorder %v104, %v103
      %v107 = vsel %vm106, %v104, %v103
      %v108 = vsel %vm106, %v105, %v102
      %v109 = vrot.slane %v104, 1
      %v110 = vrot.slane %v105, 1
      %vm111 = vcmp.ge.f32.partialorder %v109, %v107
      %v112 = vsel %vm111, %v109, %v107
      %v113 = vsel %vm111, %v110, %v108
      %v114 = vrot.slane %v109, 1
      %v115 = vrot.slane %v110, 1
      %vm116 = vcmp.ge.f32.partialorder %v114, %v112
      %v117 = vsel %vm116, %v114, %v112
      %v118 = vsel %vm116, %v115, %v113
      %v119 = vrot.slane %v114, 1
      %v120 = vrot.slane %v115, 1
      %vm121 = vcmp.ge.f32.partialorder %v119, %v117
      %v122 = vsel %vm121, %v119, %v117
      %v123 = vsel %vm121, %v120, %v118
      %v124 = vrot.slane %v119, 1
      %v125 = vrot.slane %v120, 1
      %vm126 = vcmp.ge.f32.partialorder %v124, %v122
      %v127 = vsel %vm126, %v124, %v122
      %v128 = vsel %vm126, %v125, %v123
      %v129 = vrot.slane %v124, 1
      %v130 = vrot.slane %v125, 1
      %vm131 = vcmp.ge.f32.partialorder %v129, %v127
      %v132 = vsel %vm131, %v129, %v127
      %v133 = vsel %vm131, %v130, %v128
      %v134 = vrot.slane %v129, 1
      %v135 = vrot.slane %v130, 1
      %vm136 = vcmp.ge.f32.partialorder %v134, %v132
      %v137 = vsel %vm136, %v134, %v132
      %v138 = vsel %vm136, %v135, %v133
      %s139 = ssub.s32 128, %s84
      %140 = vrot.lane.b32.xlu0 %v138, %s139
      %v141 = vpop.permute.xlu0 %140
      %s142 = vtos %v141
      %v143 = vstv %s84
      %v144 = vlaneseq
      %v145 = vand.u32 %v144, 127
      %vm146 = vcmp.eq.s32.totalorder %v145, %v143
      %v147 = vstv %s142
      %v148 = vld [vmem:[#allocation4] ss:$0 sm:$0xff]
      %v149 = vsel %vm146, %v147, %v148
      %150 = vst [vmem:[#allocation4] sm:$0x1] %v149
      %s151 = scalar_lea.vmem [#allocation2], %s84
      %s152 = scalar_lea.vmem [#allocation2], %s142
      %v153 = vld [vmem:[%s151] ss:$0 sm:$0xff]
      %v154 = vld [vmem:[%s152] ss:$0 sm:$0xff]
      %155 = vst [vmem:[%s152] sm:$0x1] %v153
      %156 = vst [vmem:[%s151] sm:$0x1] %v154
      %s157 = scalar_lea.vmem [#allocation10], %s84
      %s158 = scalar_lea.vmem [#allocation10], %s142
      %v159 = vld [vmem:[%s157] ss:$0 sm:$0xff]
      %v160 = vld [vmem:[%s158] ss:$0 sm:$0xff]
      %161 = vst [vmem:[%s158] sm:$0x1] %v159
      %162 = vst [vmem:[%s157] sm:$0x1] %v160
      %vm163 = vcmp.ne.f32.partialorder %v154, 0.0
      %vm164 = vmand %vm146, %vm163
      %v165 = vsel %vm164, %v154, 1.0
      %v166 = vlaneseq
      %v167 = vand.u32 %v166, 127
      %v168 = vstv %s84
      %vm169 = vcmp.gt.s32.totalorder %v167, %v168
      %v170 = vsel %vm169, %v154, 0.0
      %v171 = vlaneseq
      %v172 = vshrl.u32 %v171, 7
      %v173 = vmov %v172
      %v174 = vld [vmem:[#allocation2] sm:$0xff]
      %v176 = vstv %s84
      %vm177 = vcmp.gt.s32.totalorder %v173, %v176
      %v178 = vsel %vm177, %v165, 1.0
      %v179 = vrcp.pop %v178
      %v180 = vmul.f32 %v174, %v179
      %vm181 = vmand %vm177, %vm146
      %v182 = vsel %vm181, %v180, 0.0
      %183 = vadd.xlane.f32.xlu0 %v182
      %v184 = vpop.xlane.xlu0 %183
      %v185 = vmul.f32 %v184, %v170
      %v186 = vsub.f32 %v180, %v185
      %187 = vst [vmem:[#allocation2] sm:$0xff] %v186
    $region29: #{custom-call.2} parent=1 // loop_footer
      %s88 = sadd.s32 1, %s84
    $region30: #{custom-call.2} parent=1 // loop_footer_branch
      %83 = sbr.rel target = $region26
    $region31: #{custom-call.2} parent=1 // loop_exit
      _
    %v188 = vld [vmem:[#allocation10] sm:$0xff]
    %s189 = scalar_lea.vmem [#allocation10], 8
    %s190 = scalar_lea.vmem [#allocation10], 16
    %s191 = scalar_lea.vmem [#allocation10], 24
    %s192 = scalar_lea.vmem [#allocation10], 32
    %s193 = scalar_lea.vmem [#allocation10], 40
    %s194 = scalar_lea.vmem [#allocation10], 48
    %s195 = scalar_lea.vmem [#allocation10], 56
    %s196 = scalar_lea.vmem [#allocation10], 64
    %s197 = scalar_lea.vmem [#allocation10], 72
    %s198 = scalar_lea.vmem [#allocation10], 80
    %s199 = scalar_lea.vmem [#allocation10], 88
    %s200 = scalar_lea.vmem [#allocation10], 96
    %s201 = scalar_lea.vmem [#allocation10], 104
    %s202 = scalar_lea.vmem [#allocation10], 112
    %s203 = scalar_lea.vmem [#allocation10], 120
    %204 = vxpose.xlu0.b32.start [1/16] %v188, 128
    %205 = vxpose.xlu0.b32.cont [2/16] 0, 128
    %206 = vxpose.xlu0.b32.cont [3/16] 0, 128
    %207 = vxpose.xlu0.b32.cont [4/16] 0, 128
    %208 = vxpose.xlu0.b32.cont [5/16] 0, 128
    %209 = vxpose.xlu0.b32.cont [6/16] 0, 128
    %210 = vxpose.xlu0.b32.cont [7/16] 0, 128
    %211 = vxpose.xlu0.b32.cont [8/16] 0, 128
    %212 = vxpose.xlu0.b32.cont [9/16] 0, 128
    %213 = vxpose.xlu0.b32.cont [10/16] 0, 128
    %214 = vxpose.xlu0.b32.cont [11/16] 0, 128
    %215 = vxpose.xlu0.b32.cont [12/16] 0, 128
    %216 = vxpose.xlu0.b32.cont [13/16] 0, 128
    %217 = vxpose.xlu0.b32.cont [14/16] 0, 128
    %218 = vxpose.xlu0.b32.cont [15/16] 0, 128
    %219 = vxpose.xlu0.b32.end [16/16] 0, 128
    %v220 = vpop.trf.xlu0
    %v221 = vpop.trf.xlu0
    %v222 = vpop.trf.xlu0
    %v223 = vpop.trf.xlu0
    %v224 = vpop.trf.xlu0
    %v225 = vpop.trf.xlu0
    %v226 = vpop.trf.xlu0
    %v227 = vpop.trf.xlu0
    %v228 = vpop.trf.xlu0
    %v229 = vpop.trf.xlu0
    %v230 = vpop.trf.xlu0
    %v231 = vpop.trf.xlu0
    %v232 = vpop.trf.xlu0
    %v233 = vpop.trf.xlu0
    %v234 = vpop.trf.xlu0
    %v235 = vpop.trf.xlu0
    %236 = vst [vmem:[#allocation7] sm:$0x1] %v220
    %s238 = sshll.u32 1, 4
    %s239 = ssub.s32 %s238, 1
    %v241 = vld [vmem:[#allocation2] sm:%s239]
    %s242 = sshll.u32 1, 4
    %s243 = ssub.s32 %s242, 1
    %244 = vst [vmem:[#allocation3] sm:%s243] %v241
    %s246 = sshll.u32 1, 1
    %s247 = ssub.s32 %s246, 1
    %v249 = vld [vmem:[#allocation4] sm:%s247]
    %s250 = sshll.u32 1, 1
    %s251 = ssub.s32 %s250, 1
    %252 = vst [vmem:[#allocation5] sm:%s251] %v249
    %s254 = sshll.u32 1, 1
    %s255 = ssub.s32 %s254, 1
    %v257 = vld [vmem:[#allocation7] sm:%s255]
    %s258 = sshll.u32 1, 1
    %s259 = ssub.s32 %s258, 1
    %260 = vst [vmem:[#allocation8] sm:%s259] %v257
    %p262 = scmp.gt.s32.totalorder 4, 0
    // Predicated region
    $region32: #{custom-call.2} parent=1 // pred_check
      %p263 = pneg %p262
    $region33: #{custom-call.2} parent=1 // pred_check_branch
      %265 = sbr.rel (%p263) target = $region35
    $region34: #{custom-call.2} parent=1 // pred_region
      %s266 = sshra.s32 4, 3
      %p267 = scmp.gt.s32.totalorder %s266, 0
      // Predicated region
      $region36: #{custom-call.2} parent=34 // pred_check
        %p268 = pneg %p267
      $region37: #{custom-call.2} parent=34 // pred_check_branch
        %270 = sbr.rel (%p268) target = $region39
      $region38: #{custom-call.2} parent=34 // pred_region
        %s271 = ssub.s32 %s266, 1
        %s272 = smul.u32 %s271, 128
        %s273 = sshra.s32 %s272, 4
        %s274 = scalar_lea.vmem [#allocation3], %s273
        %v275 = vld [vmem:[#allocation3] sm:$0xff]
        // While loop
        $region40: #{custom-call.2} parent=38 // loop_pre_header
          _
        $region41: #{custom-call.2} parent=38 // loop_header
          %s276 = sphi [#allocation3], %s298
          %s277 = sphi %s1, %s299
          %v278 = vphi %v275, %v300
          %s279 = ssub.s32 %s274, 64
          %p280 = scmp.gt.s32.totalorder %s276, %s279
        $region42: #{custom-call.2} parent=38 // loop_header_branch
          %282 = sbr.rel (%p280) target = $region46
        $region43: #{custom-call.2} parent=38 // loop_body
          %283 = vst [vmem:[%s277] sm:$0xff] %v278
          %v284 = vld [vmem:[%s276 + $0x8] sm:$0xff]
          %285 = vst [vmem:[%s277 + $0x8] sm:$0xff] %v284
          %v286 = vld [vmem:[%s276 + $0x10] sm:$0xff]
          %287 = vst [vmem:[%s277 + $0x10] sm:$0xff] %v286
          %v288 = vld [vmem:[%s276 + $0x18] sm:$0xff]
          %289 = vst [vmem:[%s277 + $0x18] sm:$0xff] %v288
          %v290 = vld [vmem:[%s276 + $0x20] sm:$0xff]
          %291 = vst [vmem:[%s277 + $0x20] sm:$0xff] %v290
          %v292 = vld [vmem:[%s276 + $0x28] sm:$0xff]
          %293 = vst [vmem:[%s277 + $0x28] sm:$0xff] %v292
          %v294 = vld [vmem:[%s276 + $0x30] sm:$0xff]
          %295 = vst [vmem:[%s277 + $0x30] sm:$0xff] %v294
          %v296 = vld [vmem:[%s276 + $0x38] sm:$0xff]
          %297 = vst [vmem:[%s277 + $0x38] sm:$0xff] %v296
        $region44: #{custom-call.2} parent=38 // loop_footer
          %s298 = scalar_lea.vmem %s276, 64
          %s299 = scalar_lea.vmem %s277, 64
          %v300 = vld [vmem:[%s276 + $0x40] sm:$0xff]
        $region45: #{custom-call.2} parent=38 // loop_footer_branch
          %301 = sbr.rel target = $region41
        $region46: #{custom-call.2} parent=38 // loop_exit
          _
        // While loop
        $region47: #{custom-call.2} parent=38 // loop_pre_header
          _
        $region48: #{custom-call.2} parent=38 // loop_header
          %s302 = sphi %s276, %s310
          %s303 = sphi %s277, %s311
          %v304 = vphi %v278, %v304
          %p305 = scmp.gt.s32.totalorder %s302, %s274
        $region49: #{custom-call.2} parent=38 // loop_header_branch
          %307 = sbr.rel (%p305) target = $region53
        $region50: #{custom-call.2} parent=38 // loop_body
          %v308 = vld [vmem:[%s302] sm:$0xff]
          %309 = vst [vmem:[%s303] sm:$0xff] %v308
        $region51: #{custom-call.2} parent=38 // loop_footer
          %s310 = scalar_lea.vmem %s302, 8
          %s311 = scalar_lea.vmem %s303, 8
        $region52: #{custom-call.2} parent=38 // loop_footer_branch
          %312 = sbr.rel target = $region48
        $region53: #{custom-call.2} parent=38 // loop_exit
          _
      $region39: #{custom-call.2} parent=34 // pred_fallthru
        _
      %s313 = sand.u32 4, 7
      %s314 = sshll.u32 1, %s313
      %s315 = ssub.s32 %s314, 1
      %s316 = smul.u32 %s266, 128
      %s317 = sshra.s32 %s316, 4
      %s318 = scalar_lea.vmem %s1, %s317
      %s319 = smul.u32 %s266, 128
      %s320 = sshra.s32 %s319, 4
      %s321 = scalar_lea.vmem [#allocation3], %s320
      %v322 = vld [vmem:[%s321] sm:%s315]
      %323 = vst [vmem:[%s318] sm:%s315] %v322
    $region35: #{custom-call.2} parent=1 // pred_fallthru
      _
    // Predicated region
    $region54: #{custom-call.2} parent=1 // pred_check
      _
    $region55: #{custom-call.2} parent=1 // pred_check_branch
      %325 = sbr.rel (0) target = $region57
    $region56: #{custom-call.2} parent=1 // pred_region
      %s327 = ssub.s32 16, 16
      %328 = vsyncadd [#allocation6], %s327
      %s329 = sshll.u32 [#allocation5], 4
      %s330 = int_to_ptr.vmem [resolvable:$true] %s329
      %332 = dma.vmem_to_hbm [thread:$0]  %s330, 16, %s2, [#allocation6]
    $region57: #{custom-call.2} parent=1 // pred_fallthru
      _
    // Predicated region
    $region58: #{custom-call.2} parent=1 // pred_check
      _
    $region59: #{custom-call.2} parent=1 // pred_check_branch
      %334 = sbr.rel (0) target = $region61
    $region60: #{custom-call.2} parent=1 // pred_region
      %s336 = ssub.s32 16, 16
      %337 = vsyncadd [#allocation9], %s336
      %s338 = sshll.u32 [#allocation8], 4
      %s339 = int_to_ptr.vmem [resolvable:$true] %s338
      %341 = dma.vmem_to_hbm [thread:$0]  %s339, 16, %s3, [#allocation9]
    $region61: #{custom-call.2} parent=1 // pred_fallthru
      _
    // Predicated region
    $region62: #{custom-call.2} parent=1 // pred_check
      _
    $region63: #{custom-call.2} parent=1 // pred_check_branch
      %343 = sbr.rel (0) target = $region65
    $region64: #{custom-call.2} parent=1 // pred_region
      %344 = dma.done [#allocation6], 16
    $region65: #{custom-call.2} parent=1 // pred_fallthru
      _
    // Predicated region
    $region66: #{custom-call.2} parent=1 // pred_check
      _
    $region67: #{custom-call.2} parent=1 // pred_check_branch
      %346 = sbr.rel (0) target = $region69
    $region68: #{custom-call.2} parent=1 // pred_region
      %347 = dma.done [#allocation9], 16
    $region69: #{custom-call.2} parent=1 // pred_fallthru
      _
    %348 = vsyncpa [#allocation6], 1
    %349 = vsyncpa [#allocation9], 1

// kernel: flowblock_forward.1
$region0: #{flowblock_forward.1}
  #allocation0 [shape = 'u32[]', space=smem, size = 0x4, offset = 0x4, fixed_abs, tag = 'smem constant byte address 0x4 - core index']
  #allocation1 [shape = 'u32[144,128]{1,0:T(1,128)}', space=vmem, size = 0x12000, scoped, tag = 'internal scratch']
  %s0 = inlined_call_operand.vmem [shape: f32[4,4096], index: 0, kind: input, shape index: {}]
  %s1 = inlined_call_operand.vmem [shape: f32[8,4096], index: 1, kind: input, shape index: {}]
  %s2 = inlined_call_operand.vmem [shape: f32[4,4], index: 2, kind: input, shape index: {}]
  %s3 = inlined_call_operand.vmem [shape: f32[4,1], index: 3, kind: input, shape index: {}]
  %s4 = inlined_call_operand.vmem [shape: bf16[128,8], index: 4, kind: input, shape index: {}]
  %s5 = inlined_call_operand.vmem [shape: bf16[2,64,2], index: 5, kind: input, shape index: {}]
  %s6 = inlined_call_operand.vmem [shape: f32[2,64,1], index: 6, kind: input, shape index: {}]
  %s7 = inlined_call_operand.vmem [shape: bf16[2,64,64], index: 7, kind: input, shape index: {}]
  %s8 = inlined_call_operand.vmem [shape: f32[2,64,1], index: 8, kind: input, shape index: {}]
  %s9 = inlined_call_operand.vmem [shape: bf16[2,64,64], index: 9, kind: input, shape index: {}]
  %s10 = inlined_call_operand.vmem [shape: f32[2,64,1], index: 10, kind: input, shape index: {}]
  %s11 = inlined_call_operand.vmem [shape: bf16[2,4,64], index: 11, kind: input, shape index: {}]
  %s12 = inlined_call_operand.vmem [shape: f32[2,4,1], index: 12, kind: input, shape index: {}]
  %s13 = inlined_call_operand.hbm [shape: f32[4,4096], index: 13, kind: output, shape index: {0}]
  %s14 = inlined_call_operand.vmem [shape: f32[1,4096], index: 14, kind: output, shape index: {1}]
  %15 = xla_tuple %s13, %s14
  %s16 = sld [smem:[#allocation0]]
  $region93: #{flowblock_forward.1} parent=0
    _
  %s18 = ssub.s32 1, %s16
  %s19 = scalar_select 0, %s18, %s16
  $region1: #{flowblock_forward.1} parent=0
    #allocation2 [shape = 'u8[32768]{0}', space=vmem, size = 0x8000, scoped, tag = 'output window, operand 0']
    #allocation3 [shape = 's32[2]{0}', space=sflag, size = 0x8, scoped, tag = 'scoped memory for flowblock_forward.1']
    %20 = vsyncpa [#allocation3], 0
    %s21 = scalar_lea.sflag [#allocation3], 1
    %22 = vsyncpa %s21, 0
    loop: start=0, step=1, limit=6
    $region2: #{flowblock_forward.1} parent=1 // loop_pre_header
      _
    $region3: #{flowblock_forward.1} parent=1 // loop_header
      %s24 = sphi 0, %s28
      %p25 = scmp.ge.s32.totalorder %s24, 6
      %s34 = sphi 0, %s36
      %s37 = sphi 0, %s34
      %s38 = sphi 0, %s37
      %s54 = sphi 0, %s38
      %s60 = sphi 0, %s62
      %s63 = sphi 0, %s60
      %s64 = sphi 0, %s63
      %s80 = sphi 0, %s64
      %s84 = sphi 0, %s84
      %s86 = sphi 0, %s84
      %s87 = sphi 0, %s86
      %s101 = sphi 0, %s87
      %s105 = sphi 0, %s105
      %s107 = sphi 0, %s105
      %s108 = sphi 0, %s107
      %s122 = sphi 0, %s108
      %s126 = sphi 0, %s126
      %s128 = sphi 0, %s126
      %s129 = sphi 0, %s128
      %s143 = sphi 0, %s129
      %s147 = sphi 0, %s147
      %s149 = sphi 0, %s147
      %s150 = sphi 0, %s149
      %s164 = sphi 0, %s150
      %s168 = sphi 0, %s168
      %s170 = sphi 0, %s168
      %s171 = sphi 0, %s170
      %s185 = sphi 0, %s171
      %s189 = sphi 0, %s189
      %s191 = sphi 0, %s189
      %s192 = sphi 0, %s191
      %s206 = sphi 0, %s192
      %s210 = sphi 0, %s210
      %s212 = sphi 0, %s210
      %s213 = sphi 0, %s212
      %s227 = sphi 0, %s213
      %s231 = sphi 0, %s231
      %s233 = sphi 0, %s231
      %s234 = sphi 0, %s233
      %s248 = sphi 0, %s234
      %s252 = sphi 0, %s252
      %s254 = sphi 0, %s252
      %s255 = sphi 0, %s254
      %s269 = sphi 0, %s255
      %s273 = sphi 0, %s273
      %s275 = sphi 0, %s273
      %s276 = sphi 0, %s275
      %s290 = sphi 0, %s276
      %s294 = sphi 0, %s294
      %s296 = sphi 0, %s294
      %s297 = sphi 0, %s296
      %s311 = sphi 0, %s297
      %s317 = sphi 0, %s319
      %s320 = sphi 0, %s317
      %s321 = sphi 0, %s320
      %s337 = sphi 0, %s321
      %s343 = sphi 0, %s345
      %s346 = sphi 0, %s343
      %s347 = sphi 0, %s346
      %s363 = sphi 0, %s347
    $region4: #{flowblock_forward.1} parent=1 // loop_header_branch
      %27 = sbr.rel (%p25) target = $region8
    $region5: #{flowblock_forward.1} parent=1 // loop_body
      %s29 = ssub.s32 %s24, 1
      %s30 = ssub.s32 %s24, 2
      %s31 = sadd.s32 %s24, 1
      %s32 = ssub.s32 %s24, %s31
      %p33 = scmp.eq.s32.totalorder %s32, 0
      %s35 = sadd.s32 %s34, 1
      %s36 = scalar_select %p33, %s34, %s35
      %p39 = pneg %p33
      %p40 = scmp.eq.s32.totalorder %s24, 3
      %p41 = por %p39, %p40
      %p42 = scmp.ne.s32.totalorder %s34, %s37
      %p43 = scmp.eq.s32.totalorder %s24, 0
      %p44 = por %p42, %p43
      %p45 = scmp.ne.s32.totalorder %s34, %s37
      %p46 = scmp.eq.s32.totalorder %s29, 3
      %p47 = por %p45, %p46
      %p48 = scmp.ne.s32.totalorder %s37, %s38
      %p49 = scmp.eq.s32.totalorder %s29, 0
      %p50 = por %p48, %p49
      %p51 = scmp.ne.s32.totalorder %s37, %s38
      %p52 = scmp.eq.s32.totalorder %s30, 3
      %p53 = por %p51, %p52
      %p55 = scmp.ne.s32.totalorder %s38, %s54
      %p56 = scmp.eq.s32.totalorder %s30, 0
      %p57 = por %p55, %p56
      %s58 = ssub.s32 %s24, %s31
      %p59 = scmp.eq.s32.totalorder %s58, 0
      %s61 = sadd.s32 %s60, 1
      %s62 = scalar_select %p59, %s60, %s61
      %p65 = pneg %p59
      %p66 = scmp.eq.s32.totalorder %s24, 3
      %p67 = por %p65, %p66
      %p68 = scmp.ne.s32.totalorder %s60, %s63
      %p69 = scmp.eq.s32.totalorder %s24, 0
      %p70 = por %p68, %p69
      %p71 = scmp.ne.s32.totalorder %s60, %s63
      %p72 = scmp.eq.s32.totalorder %s29, 3
      %p73 = por %p71, %p72
      %p74 = scmp.ne.s32.totalorder %s63, %s64
      %p75 = scmp.eq.s32.totalorder %s29, 0
      %p76 = por %p74, %p75
      %p77 = scmp.ne.s32.totalorder %s63, %s64
      %p78 = scmp.eq.s32.totalorder %s30, 3
      %p79 = por %p77, %p78
      %p81 = scmp.ne.s32.totalorder %s64, %s80
      %p82 = scmp.eq.s32.totalorder %s30, 0
      %p83 = por %p81, %p82
      %s85 = sadd.s32 %s84, 1
      %p88 = scmp.eq.s32.totalorder %s24, 3
      %p89 = scmp.ne.s32.totalorder %s84, %s86
      %p90 = scmp.eq.s32.totalorder %s24, 0
      %p91 = por %p89, %p90
      %p92 = scmp.ne.s32.totalorder %s84, %s86
      %p93 = scmp.eq.s32.totalorder %s29, 3
      %p94 = por %p92, %p93
      %p95 = scmp.ne.s32.totalorder %s86, %s87
      %p96 = scmp.eq.s32.totalorder %s29, 0
      %p97 = por %p95, %p96
      %p98 = scmp.ne.s32.totalorder %s86, %s87
      %p99 = scmp.eq.s32.totalorder %s30, 3
      %p100 = por %p98, %p99
      %p102 = scmp.ne.s32.totalorder %s87, %s101
      %p103 = scmp.eq.s32.totalorder %s30, 0
      %p104 = por %p102, %p103
      %s106 = sadd.s32 %s105, 1
      %p109 = scmp.eq.s32.totalorder %s24, 3
      %p110 = scmp.ne.s32.totalorder %s105, %s107
      %p111 = scmp.eq.s32.totalorder %s24, 0
      %p112 = por %p110, %p111
      %p113 = scmp.ne.s32.totalorder %s105, %s107
      %p114 = scmp.eq.s32.totalorder %s29, 3
      %p115 = por %p113, %p114
      %p116 = scmp.ne.s32.totalorder %s107, %s108
      %p117 = scmp.eq.s32.totalorder %s29, 0
      %p118 = por %p116, %p117
      %p119 = scmp.ne.s32.totalorder %s107, %s108
      %p120 = scmp.eq.s32.totalorder %s30, 3
      %p121 = por %p119, %p120
      %p123 = scmp.ne.s32.totalorder %s108, %s122
      %p124 = scmp.eq.s32.totalorder %s30, 0
      %p125 = por %p123, %p124
      %s127 = sadd.s32 %s126, 1
      %p130 = scmp.eq.s32.totalorder %s24, 3
      %p131 = scmp.ne.s32.totalorder %s126, %s128
      %p132 = scmp.eq.s32.totalorder %s24, 0
      %p133 = por %p131, %p132
      %p134 = scmp.ne.s32.totalorder %s126, %s128
      %p135 = scmp.eq.s32.totalorder %s29, 3
      %p136 = por %p134, %p135
      %p137 = scmp.ne.s32.totalorder %s128, %s129
      %p138 = scmp.eq.s32.totalorder %s29, 0
      %p139 = por %p137, %p138
      %p140 = scmp.ne.s32.totalorder %s128, %s129
      %p141 = scmp.eq.s32.totalorder %s30, 3
      %p142 = por %p140, %p141
      %p144 = scmp.ne.s32.totalorder %s129, %s143
      %p145 = scmp.eq.s32.totalorder %s30, 0
      %p146 = por %p144, %p145
      %s148 = sadd.s32 %s147, 1
      %p151 = scmp.eq.s32.totalorder %s24, 3
      %p152 = scmp.ne.s32.totalorder %s147, %s149
      %p153 = scmp.eq.s32.totalorder %s24, 0
      %p154 = por %p152, %p153
      %p155 = scmp.ne.s32.totalorder %s147, %s149
      %p156 = scmp.eq.s32.totalorder %s29, 3
      %p157 = por %p155, %p156
      %p158 = scmp.ne.s32.totalorder %s149, %s150
      %p159 = scmp.eq.s32.totalorder %s29, 0
      %p160 = por %p158, %p159
      %p161 = scmp.ne.s32.totalorder %s149, %s150
      %p162 = scmp.eq.s32.totalorder %s30, 3
      %p163 = por %p161, %p162
      %p165 = scmp.ne.s32.totalorder %s150, %s164
      %p166 = scmp.eq.s32.totalorder %s30, 0
      %p167 = por %p165, %p166
      %s169 = sadd.s32 %s168, 1
      %p172 = scmp.eq.s32.totalorder %s24, 3
      %p173 = scmp.ne.s32.totalorder %s168, %s170
      %p174 = scmp.eq.s32.totalorder %s24, 0
      %p175 = por %p173, %p174
      %p176 = scmp.ne.s32.totalorder %s168, %s170
      %p177 = scmp.eq.s32.totalorder %s29, 3
      %p178 = por %p176, %p177
      %p179 = scmp.ne.s32.totalorder %s170, %s171
      %p180 = scmp.eq.s32.totalorder %s29, 0
      %p181 = por %p179, %p180
      %p182 = scmp.ne.s32.totalorder %s170, %s171
      %p183 = scmp.eq.s32.totalorder %s30, 3
      %p184 = por %p182, %p183
      %p186 = scmp.ne.s32.totalorder %s171, %s185
      %p187 = scmp.eq.s32.totalorder %s30, 0
      %p188 = por %p186, %p187
      %s190 = sadd.s32 %s189, 1
      %p193 = scmp.eq.s32.totalorder %s24, 3
      %p194 = scmp.ne.s32.totalorder %s189, %s191
      %p195 = scmp.eq.s32.totalorder %s24, 0
      %p196 = por %p194, %p195
      %p197 = scmp.ne.s32.totalorder %s189, %s191
      %p198 = scmp.eq.s32.totalorder %s29, 3
      %p199 = por %p197, %p198
      %p200 = scmp.ne.s32.totalorder %s191, %s192
      %p201 = scmp.eq.s32.totalorder %s29, 0
      %p202 = por %p200, %p201
      %p203 = scmp.ne.s32.totalorder %s191, %s192
      %p204 = scmp.eq.s32.totalorder %s30, 3
      %p205 = por %p203, %p204
      %p207 = scmp.ne.s32.totalorder %s192, %s206
      %p208 = scmp.eq.s32.totalorder %s30, 0
      %p209 = por %p207, %p208
      %s211 = sadd.s32 %s210, 1
      %p214 = scmp.eq.s32.totalorder %s24, 3
      %p215 = scmp.ne.s32.totalorder %s210, %s212
      %p216 = scmp.eq.s32.totalorder %s24, 0
      %p217 = por %p215, %p216
      %p218 = scmp.ne.s32.totalorder %s210, %s212
      %p219 = scmp.eq.s32.totalorder %s29, 3
      %p220 = por %p218, %p219
      %p221 = scmp.ne.s32.totalorder %s212, %s213
      %p222 = scmp.eq.s32.totalorder %s29, 0
      %p223 = por %p221, %p222
      %p224 = scmp.ne.s32.totalorder %s212, %s213
      %p225 = scmp.eq.s32.totalorder %s30, 3
      %p226 = por %p224, %p225
      %p228 = scmp.ne.s32.totalorder %s213, %s227
      %p229 = scmp.eq.s32.totalorder %s30, 0
      %p230 = por %p228, %p229
      %s232 = sadd.s32 %s231, 1
      %p235 = scmp.eq.s32.totalorder %s24, 3
      %p236 = scmp.ne.s32.totalorder %s231, %s233
      %p237 = scmp.eq.s32.totalorder %s24, 0
      %p238 = por %p236, %p237
      %p239 = scmp.ne.s32.totalorder %s231, %s233
      %p240 = scmp.eq.s32.totalorder %s29, 3
      %p241 = por %p239, %p240
      %p242 = scmp.ne.s32.totalorder %s233, %s234
      %p243 = scmp.eq.s32.totalorder %s29, 0
      %p244 = por %p242, %p243
      %p245 = scmp.ne.s32.totalorder %s233, %s234
      %p246 = scmp.eq.s32.totalorder %s30, 3
      %p247 = por %p245, %p246
      %p249 = scmp.ne.s32.totalorder %s234, %s248
      %p250 = scmp.eq.s32.totalorder %s30, 0
      %p251 = por %p249, %p250
      %s253 = sadd.s32 %s252, 1
      %p256 = scmp.eq.s32.totalorder %s24, 3
      %p257 = scmp.ne.s32.totalorder %s252, %s254
      %p258 = scmp.eq.s32.totalorder %s24, 0
      %p259 = por %p257, %p258
      %p260 = scmp.ne.s32.totalorder %s252, %s254
      %p261 = scmp.eq.s32.totalorder %s29, 3
      %p262 = por %p260, %p261
      %p263 = scmp.ne.s32.totalorder %s254, %s255
      %p264 = scmp.eq.s32.totalorder %s29, 0
      %p265 = por %p263, %p264
      %p266 = scmp.ne.s32.totalorder %s254, %s255
      %p267 = scmp.eq.s32.totalorder %s30, 3
      %p268 = por %p266, %p267
      %p270 = scmp.ne.s32.totalorder %s255, %s269
      %p271 = scmp.eq.s32.totalorder %s30, 0
      %p272 = por %p270, %p271
      %s274 = sadd.s32 %s273, 1
      %p277 = scmp.eq.s32.totalorder %s24, 3
      %p278 = scmp.ne.s32.totalorder %s273, %s275
      %p279 = scmp.eq.s32.totalorder %s24, 0
      %p280 = por %p278, %p279
      %p281 = scmp.ne.s32.totalorder %s273, %s275
      %p282 = scmp.eq.s32.totalorder %s29, 3
      %p283 = por %p281, %p282
      %p284 = scmp.ne.s32.totalorder %s275, %s276
      %p285 = scmp.eq.s32.totalorder %s29, 0
      %p286 = por %p284, %p285
      %p287 = scmp.ne.s32.totalorder %s275, %s276
      %p288 = scmp.eq.s32.totalorder %s30, 3
      %p289 = por %p287, %p288
      %p291 = scmp.ne.s32.totalorder %s276, %s290
      %p292 = scmp.eq.s32.totalorder %s30, 0
      %p293 = por %p291, %p292
      %s295 = sadd.s32 %s294, 1
      %p298 = scmp.eq.s32.totalorder %s24, 3
      %p299 = scmp.ne.s32.totalorder %s294, %s296
      %p300 = scmp.eq.s32.totalorder %s24, 0
      %p301 = por %p299, %p300
      %p302 = scmp.ne.s32.totalorder %s294, %s296
      %p303 = scmp.eq.s32.totalorder %s29, 3
      %p304 = por %p302, %p303
      %p305 = scmp.ne.s32.totalorder %s296, %s297
      %p306 = scmp.eq.s32.totalorder %s29, 0
      %p307 = por %p305, %p306
      %p308 = scmp.ne.s32.totalorder %s296, %s297
      %p309 = scmp.eq.s32.totalorder %s30, 3
      %p310 = por %p308, %p309
      %p312 = scmp.ne.s32.totalorder %s297, %s311
      %p313 = scmp.eq.s32.totalorder %s30, 0
      %p314 = por %p312, %p313
      %s315 = ssub.s32 %s24, %s31
      %p316 = scmp.eq.s32.totalorder %s315, 0
      %s318 = sadd.s32 %s317, 1
      %s319 = scalar_select %p316, %s317, %s318
      %p322 = pneg %p316
      %p323 = scmp.eq.s32.totalorder %s24, 3
      %p324 = por %p322, %p323
      %p325 = scmp.ne.s32.totalorder %s317, %s320
      %p326 = scmp.eq.s32.totalorder %s24, 0
      %p327 = por %p325, %p326
      %p328 = scmp.ne.s32.totalorder %s317, %s320
      %p329 = scmp.eq.s32.totalorder %s29, 3
      %p330 = por %p328, %p329
      %p331 = scmp.ne.s32.totalorder %s320, %s321
      %p332 = scmp.eq.s32.totalorder %s29, 0
      %p333 = por %p331, %p332
      %p334 = scmp.ne.s32.totalorder %s320, %s321
      %p335 = scmp.eq.s32.totalorder %s30, 3
      %p336 = por %p334, %p335
      %p338 = scmp.ne.s32.totalorder %s321, %s337
      %p339 = scmp.eq.s32.totalorder %s30, 0
      %p340 = por %p338, %p339
      %s341 = ssub.s32 %s24, %s31
      %p342 = scmp.eq.s32.totalorder %s341, 0
      %s344 = sadd.s32 %s343, 1
      %s345 = scalar_select %p342, %s343, %s344
      %p348 = pneg %p342
      %p349 = scmp.eq.s32.totalorder %s24, 3
      %p350 = por %p348, %p349
      %p351 = scmp.ne.s32.totalorder %s343, %s346
      %p352 = scmp.eq.s32.totalorder %s24, 0
      %p353 = por %p351, %p352
      %p354 = scmp.ne.s32.totalorder %s343, %s346
      %p355 = scmp.eq.s32.totalorder %s29, 3
      %p356 = por %p354, %p355
      %p357 = scmp.ne.s32.totalorder %s346, %s347
      %p358 = scmp.eq.s32.totalorder %s29, 0
      %p359 = por %p357, %p358
      %p360 = scmp.ne.s32.totalorder %s346, %s347
      %p361 = scmp.eq.s32.totalorder %s30, 3
      %p362 = por %p360, %p361
      %p364 = scmp.ne.s32.totalorder %s347, %s363
      %p365 = scmp.eq.s32.totalorder %s30, 0
      %p366 = por %p364, %p365
      %p367 = scmp.le.s32.totalorder 1, %s24
      %p368 = scmp.lt.s32.totalorder %s24, 5
      %p369 = pnand %p367, %p368
      %p370 = pneg %p369
      // Predicated region
      $region9: #{flowblock_forward.1} parent=5 // pred_check
        _
      $region10: #{flowblock_forward.1} parent=5 // pred_check_branch
        %372 = sbr.rel (%p369) target = $region12
      $region11: #{flowblock_forward.1} parent=5 // pred_region
        %s373 = ssub.s32 %s24, 1
        // Predicated region
        $region13: #{flowblock_forward.1} parent=11 // pred_check
          %p374 = pneg %p97
        $region14: #{flowblock_forward.1} parent=11 // pred_check_branch
          %376 = sbr.rel (%p374) target = $region16
        $region15: #{flowblock_forward.1} parent=11 // pred_region
          _
        $region16: #{flowblock_forward.1} parent=11 // pred_fallthru
          _
        // Predicated region
        $region17: #{flowblock_forward.1} parent=11 // pred_check
          %p377 = pneg %p118
        $region18: #{flowblock_forward.1} parent=11 // pred_check_branch
          %379 = sbr.rel (%p377) target = $region20
        $region19: #{flowblock_forward.1} parent=11 // pred_region
          _
        $region20: #{flowblock_forward.1} parent=11 // pred_fallthru
          _
        // Predicated region
        $region21: #{flowblock_forward.1} parent=11 // pred_check
          %p380 = pneg %p139
        $region22: #{flowblock_forward.1} parent=11 // pred_check_branch
          %382 = sbr.rel (%p380) target = $region24
        $region23: #{flowblock_forward.1} parent=11 // pred_region
          _
        $region24: #{flowblock_forward.1} parent=11 // pred_fallthru
          _
        // Predicated region
        $region25: #{flowblock_forward.1} parent=11 // pred_check
          %p383 = pneg %p160
        $region26: #{flowblock_forward.1} parent=11 // pred_check_branch
          %385 = sbr.rel (%p383) target = $region28
        $region27: #{flowblock_forward.1} parent=11 // pred_region
          _
        $region28: #{flowblock_forward.1} parent=11 // pred_fallthru
          _
        // Predicated region
        $region29: #{flowblock_forward.1} parent=11 // pred_check
          %p386 = pneg %p181
        $region30: #{flowblock_forward.1} parent=11 // pred_check_branch
          %388 = sbr.rel (%p386) target = $region32
        $region31: #{flowblock_forward.1} parent=11 // pred_region
          _
        $region32: #{flowblock_forward.1} parent=11 // pred_fallthru
          _
        // Predicated region
        $region33: #{flowblock_forward.1} parent=11 // pred_check
          %p389 = pneg %p202
        $region34: #{flowblock_forward.1} parent=11 // pred_check_branch
          %391 = sbr.rel (%p389) target = $region36
        $region35: #{flowblock_forward.1} parent=11 // pred_region
          _
        $region36: #{flowblock_forward.1} parent=11 // pred_fallthru
          _
        // Predicated region
        $region37: #{flowblock_forward.1} parent=11 // pred_check
          %p392 = pneg %p223
        $region38: #{flowblock_forward.1} parent=11 // pred_check_branch
          %394 = sbr.rel (%p392) target = $region40
        $region39: #{flowblock_forward.1} parent=11 // pred_region
          _
        $region40: #{flowblock_forward.1} parent=11 // pred_fallthru
          _
        // Predicated region
        $region41: #{flowblock_forward.1} parent=11 // pred_check
          %p395 = pneg %p244
        $region42: #{flowblock_forward.1} parent=11 // pred_check_branch
          %397 = sbr.rel (%p395) target = $region44
        $region43: #{flowblock_forward.1} parent=11 // pred_region
          _
        $region44: #{flowblock_forward.1} parent=11 // pred_fallthru
          _
        // Predicated region
        $region45: #{flowblock_forward.1} parent=11 // pred_check
          %p398 = pneg %p265
        $region46: #{flowblock_forward.1} parent=11 // pred_check_branch
          %400 = sbr.rel (%p398) target = $region48
        $region47: #{flowblock_forward.1} parent=11 // pred_region
          _
        $region48: #{flowblock_forward.1} parent=11 // pred_fallthru
          _
        // Predicated region
        $region49: #{flowblock_forward.1} parent=11 // pred_check
          %p401 = pneg %p286
        $region50: #{flowblock_forward.1} parent=11 // pred_check_branch
          %403 = sbr.rel (%p401) target = $region52
        $region51: #{flowblock_forward.1} parent=11 // pred_region
          _
        $region52: #{flowblock_forward.1} parent=11 // pred_fallthru
          _
        // Predicated region
        $region53: #{flowblock_forward.1} parent=11 // pred_check
          %p404 = pneg %p307
        $region54: #{flowblock_forward.1} parent=11 // pred_check_branch
          %406 = sbr.rel (%p404) target = $region56
        $region55: #{flowblock_forward.1} parent=11 // pred_region
          _
        $region56: #{flowblock_forward.1} parent=11 // pred_fallthru
          _
      $region12: #{flowblock_forward.1} parent=5 // pred_fallthru
        _
      %p407 = scmp.lt.s32.totalorder %s24, 4
      // Predicated region
      $region57: #{flowblock_forward.1} parent=5 // pred_check
        %p408 = pneg %p407
      $region58: #{flowblock_forward.1} parent=5 // pred_check_branch
        %410 = sbr.rel (%p408) target = $region60
      $region59: #{flowblock_forward.1} parent=5 // pred_region
        // Predicated region
        $region61: #{flowblock_forward.1} parent=59 // pred_check
          %p411 = pneg %p44
        $region62: #{flowblock_forward.1} parent=59 // pred_check_branch
          %413 = sbr.rel (%p411) target = $region64
        $region63: #{flowblock_forward.1} parent=59 // pred_region
          %s414 = smul.u32 8, %s24
          %p415 = scmp.lt.s32.totalorder %s414, 31
          %s416 = scalar_select %p415, %s414, 31
          %s417 = smul.addr %s416, 4
          %s418 = scalar_lea.vmem %s0, %s417
          %s419 = smul.u32 8, %s24
        $region64: #{flowblock_forward.1} parent=59 // pred_fallthru
          _
        // Predicated region
        $region65: #{flowblock_forward.1} parent=59 // pred_check
          %p420 = pneg %p70
        $region66: #{flowblock_forward.1} parent=59 // pred_check_branch
          %422 = sbr.rel (%p420) target = $region68
        $region67: #{flowblock_forward.1} parent=59 // pred_region
          %s423 = smul.u32 8, %s24
          %p424 = scmp.lt.s32.totalorder %s423, 31
          %s425 = scalar_select %p424, %s423, 31
          %s426 = smul.addr %s425, 8
          %s427 = scalar_lea.vmem %s1, %s426
          %s428 = smul.u32 8, %s24
        $region68: #{flowblock_forward.1} parent=59 // pred_fallthru
          _
      $region60: #{flowblock_forward.1} parent=5 // pred_fallthru
        _
      %p429 = scmp.le.s32.totalorder 1, %s24
      %p430 = scmp.lt.s32.totalorder %s24, 5
      %p431 = pnand %p429, %p430
      %p432 = pneg %p431
      // Predicated region
      $region69: #{flowblock_forward.1} parent=5 // pred_check
        _
      $region70: #{flowblock_forward.1} parent=5 // pred_check_branch
        %434 = sbr.rel (%p431) target = $region72
      $region71: #{flowblock_forward.1} parent=5 // pred_region
        %s435 = ssub.s32 %s24, 1
        %s436 = smul.u32 8, %s29
        %p437 = scmp.lt.s32.totalorder %s436, 31
        %s438 = scalar_select %p437, %s436, 31
        %s439 = smul.addr %s438, 4
        %s440 = scalar_lea.vmem %s0, %s439
        %p441 = pneg %p50
        %p442 = pneg %p47
        %s443 = smul.u32 8, %s29
        %p444 = scmp.lt.s32.totalorder %s443, 31
        %s445 = scalar_select %p444, %s443, 31
        %s446 = smul.addr %s445, 8
        %s447 = scalar_lea.vmem %s1, %s446
        %p448 = pneg %p76
        %p449 = pneg %p73
        %p450 = pneg %p97
        %p451 = pneg %p94
        %p452 = pneg %p118
        %p453 = pneg %p115
        %p454 = pneg %p139
        %p455 = pneg %p136
        %p456 = pneg %p160
        %p457 = pneg %p157
        %p458 = pneg %p181
        %p459 = pneg %p178
        %p460 = pneg %p202
        %p461 = pneg %p199
        %p462 = pneg %p223
        %p463 = pneg %p220
        %p464 = pneg %p244
        %p465 = pneg %p241
        %p466 = pneg %p265
        %p467 = pneg %p262
        %p468 = pneg %p286
        %p469 = pneg %p283
        %p470 = pneg %p307
        %p471 = pneg %p304
        %p472 = pneg %p333
        %p473 = pneg %p330
        %s474 = sand.u32 %s320, 1
        %s475 = scalar_lea.sflag [#allocation3], %s474
        %s476 = sand.u32 %s320, 1
        %s477 = smul.addr %s476, 32
        %s478 = scalar_lea.vmem [#allocation2], %s477
        %p479 = pneg %p359
        %p480 = pneg %p356
        %s481 = smul.u32 8, %s29
        %p482 = scmp.lt.s32.totalorder %s481, 31
        %s483 = scalar_select %p482, %s481, 31
        %s484 = scalar_lea.vmem %s14, %s483
        %s485 = smul.u32 8, %s29
        %p486 = scmp.lt.s32.totalorder %s485, 31
        %s487 = scalar_select %p486, %s485, 31
        %s488 = smul.addr %s487, 4
        %s489 = scalar_lea.vmem %s0, %s488
        %s490 = smul.u32 8, %s29
        %s491 = smul.u32 8, %s29
        %p492 = scmp.lt.s32.totalorder %s491, 31
        %s493 = scalar_select %p492, %s491, 31
        %s494 = smul.addr %s493, 8
        %s495 = scalar_lea.vmem %s1, %s494
        %s496 = smul.u32 8, %s29
        %s497 = smul.u32 8, %s29
        %s498 = smul.u32 8, %s29
        %p499 = scmp.lt.s32.totalorder %s498, 31
        %s500 = scalar_select %p499, %s498, 31
        %s501 = scalar_lea.vmem %s14, %s500
        %s502 = smul.u32 8, %s29
        %v504 = vld [vmem:[%s489] sm:$0xff]
        %v505 = vld [vmem:[%s489 + $0x8] sm:$0xff]
        %v506 = vld [vmem:[%s489 + $0x10] sm:$0xff]
        %v507 = vld [vmem:[%s489 + $0x18] sm:$0xff]
        %v508 = vld [vmem:[%s2] sm:$0xf]
        %v509 = vld [vmem:[%s3] sm:$0xf]
        %511 = vset.pattern.permute.xlu0 0
        %512 = vperm.xlu0 %511, %v509
        %v513 = vpop.permute.xlu0 %512
        %v519 = vcombine.high %v504, %v504
        %v520 = vcombine.high %v505, %v505
        %v521 = vcombine.high %v506, %v506
        %v522 = vcombine.high %v507, %v507
        %vm523 = vcmask 31744
        %v525 = vsel %vm523, %v508, 0
        %vm527 = vcmask 1043456
        %v528 = vsel %vm527, %v504, 0
        %v530 = vsel %vm527, %v519, 0
        %v532 = vsel %vm527, %v505, 0
        %v534 = vsel %vm527, %v520, 0
        %v536 = vsel %vm527, %v506, 0
        %v538 = vsel %vm527, %v521, 0
        %v540 = vsel %vm527, %v507, 0
        %v542 = vsel %vm527, %v522, 0
        %544 = vmatprep.subr.mxu0 0.0
        %545 = vmatpush1.msra.mxu0 0.0
        %546 = vmatprep.subr.mxu0 0.0
        %547 = vmatpush1.msra.mxu0 0.0
        %548 = vmatprep.subr.mxu0 0.0
        %549 = vmatpush1.msra.mxu0 0.0
        %550 = vmatprep.subr.mxu0 0.0
        %551 = vmatpush1.msra.mxu0 0.0
        %552 = vmatprep.subr.mxu0 0.0
        %553 = vmatpush1.msra.mxu0 0.0
        %554 = vmatprep.subr.mxu0 0.0
        %555 = vmatpush1.msra.mxu0 0.0
        %556 = vmatprep.subr.mxu0 0.0
        %557 = vmatpush1.msra.mxu0 0.0
        %558 = vmatprep.subr.mxu0 0.0
        %559 = vmatpush1.msra.mxu0 0.0
        %560 = vmatprep.subr.mxu0 0.0
        %561 = vmatpush1.msra.mxu0 0.0
        %562 = vmatprep.subr.mxu0 0.0
        %563 = vmatpush1.msra.mxu0 0.0
        %564 = vmatprep.subr.mxu0 0.0
        %565 = vmatpush1.msra.mxu0 0.0
        %566 = vmatprep.subr.mxu0 0.0
        %567 = vmatpush1.msra.mxu0 0.0
        %568 = vmatprep.subr.mxu0 0.0
        %569 = vmatpush1.msra.mxu0 0.0
        %570 = vmatprep.subr.mxu0 0.0
        %571 = vmatpush1.msra.mxu0 0.0
        %572 = vmatprep.subr.mxu0 0.0
        %573 = vmatpush1.msra.mxu0 0.0
        %574 = vmatprep.subr.mxu0 %v530
        %575 = vmatpush1.msra.mxu0 %v528
        %576 = vmatprep.subr.mxu0 0.0
        %577 = vmatpush2.msra.mxu0 0.0
        %578 = vmatprep.subr.mxu0 0.0
        %579 = vmatpush2.msra.mxu0 0.0
        %580 = vmatprep.subr.mxu0 0.0
        %581 = vmatpush2.msra.mxu0 0.0
        %582 = vmatprep.subr.mxu0 0.0
        %583 = vmatpush2.msra.mxu0 0.0
        %584 = vmatprep.subr.mxu0 0.0
        %585 = vmatpush2.msra.mxu0 0.0
        %586 = vmatprep.subr.mxu0 0.0
        %587 = vmatpush2.msra.mxu0 0.0
        %588 = vmatprep.subr.mxu0 0.0
        %589 = vmatpush2.msra.mxu0 0.0
        %590 = vmatprep.subr.mxu0 0.0
        %591 = vmatpush2.msra.mxu0 0.0
        %592 = vmatprep.subr.mxu0 0.0
        %593 = vmatpush2.msra.mxu0 0.0
        %594 = vmatprep.subr.mxu0 0.0
        %595 = vmatpush2.msra.mxu0 0.0
        %596 = vmatprep.subr.mxu0 0.0
        %597 = vmatpush2.msra.mxu0 0.0
        %598 = vmatprep.subr.mxu0 0.0
        %599 = vmatpush2.msra.mxu0 0.0
        %600 = vmatprep.subr.mxu0 0.0
        %601 = vmatpush2.msra.mxu0 0.0
        %602 = vmatprep.subr.mxu0 0.0
        %603 = vmatpush2.msra.mxu0 0.0
        %604 = vmatprep.subr.mxu0 0.0
        %605 = vmatpush2.msra.mxu0 0.0
        %606 = vmatprep.subr.mxu0 0.0
        %607 = vmatpush2.msra.mxu0 0.0
        %608 = vmatprep.mubr.f32.mxu0 0.0
        %609 = vmatmul.mubr.f32.gmra.mxu0 %v525
        %v610 = vpop.f32.mrf.mxu0
        %v611 = vadd.f32 %v513, %v610
        %v612 = vpop.f32.mrf.mxu0
        %v613 = vadd.f32 %v513, %v612
        %614 = vdwg.mxu0
        %615 = vmatprep.subr.mxu0 0.0
        %616 = vmatpush1.msra.mxu0 0.0
        %617 = vmatprep.subr.mxu0 0.0
        %618 = vmatpush1.msra.mxu0 0.0
        %619 = vmatprep.subr.mxu0 0.0
        %620 = vmatpush1.msra.mxu0 0.0
        %621 = vmatprep.subr.mxu0 0.0
        %622 = vmatpush1.msra.mxu0 0.0
        %623 = vmatprep.subr.mxu0 0.0
        %624 = vmatpush1.msra.mxu0 0.0
        %625 = vmatprep.subr.mxu0 0.0
        %626 = vmatpush1.msra.mxu0 0.0
        %627 = vmatprep.subr.mxu0 0.0
        %628 = vmatpush1.msra.mxu0 0.0
        %629 = vmatprep.subr.mxu0 0.0
        %630 = vmatpush1.msra.mxu0 0.0
        %631 = vmatprep.subr.mxu0 0.0
        %632 = vmatpush1.msra.mxu0 0.0
        %633 = vmatprep.subr.mxu0 0.0
        %634 = vmatpush1.msra.mxu0 0.0
        %635 = vmatprep.subr.mxu0 0.0
        %636 = vmatpush1.msra.mxu0 0.0
        %637 = vmatprep.subr.mxu0 0.0
        %638 = vmatpush1.msra.mxu0 0.0
        %639 = vmatprep.subr.mxu0 0.0
        %640 = vmatpush1.msra.mxu0 0.0
        %641 = vmatprep.subr.mxu0 0.0
        %642 = vmatpush1.msra.mxu0 0.0
        %643 = vmatprep.subr.mxu0 0.0
        %644 = vmatpush1.msra.mxu0 0.0
        %645 = vmatprep.subr.mxu0 %v534
        %646 = vmatpush1.msra.mxu0 %v532
        %647 = vmatprep.subr.mxu0 0.0
        %648 = vmatpush2.msra.mxu0 0.0
        %649 = vmatprep.subr.mxu0 0.0
        %650 = vmatpush2.msra.mxu0 0.0
        %651 = vmatprep.subr.mxu0 0.0
        %652 = vmatpush2.msra.mxu0 0.0
        %653 = vmatprep.subr.mxu0 0.0
        %654 = vmatpush2.msra.mxu0 0.0
        %655 = vmatprep.subr.mxu0 0.0
        %656 = vmatpush2.msra.mxu0 0.0
        %657 = vmatprep.subr.mxu0 0.0
        %658 = vmatpush2.msra.mxu0 0.0
        %659 = vmatprep.subr.mxu0 0.0
        %660 = vmatpush2.msra.mxu0 0.0
        %661 = vmatprep.subr.mxu0 0.0
        %662 = vmatpush2.msra.mxu0 0.0
        %663 = vmatprep.subr.mxu0 0.0
        %664 = vmatpush2.msra.mxu0 0.0
        %665 = vmatprep.subr.mxu0 0.0
        %666 = vmatpush2.msra.mxu0 0.0
        %667 = vmatprep.subr.mxu0 0.0
        %668 = vmatpush2.msra.mxu0 0.0
        %669 = vmatprep.subr.mxu0 0.0
        %670 = vmatpush2.msra.mxu0 0.0
        %671 = vmatprep.subr.mxu0 0.0
        %672 = vmatpush2.msra.mxu0 0.0
        %673 = vmatprep.subr.mxu0 0.0
        %674 = vmatpush2.msra.mxu0 0.0
        %675 = vmatprep.subr.mxu0 0.0
        %676 = vmatpush2.msra.mxu0 0.0
        %677 = vmatprep.subr.mxu0 0.0
        %678 = vmatpush2.msra.mxu0 0.0
        %679 = vmatprep.mubr.f32.mxu0 0.0
        %680 = vmatmul.mubr.f32.gmra.mxu0 %v525
        %v681 = vpop.f32.mrf.mxu0
        %v682 = vadd.f32 %v513, %v681
        %v683 = vpop.f32.mrf.mxu0
        %v684 = vadd.f32 %v513, %v683
        %685 = vdwg.mxu0
        %686 = vmatprep.subr.mxu0 0.0
        %687 = vmatpush1.msra.mxu0 0.0
        %688 = vmatprep.subr.mxu0 0.0
        %689 = vmatpush1.msra.mxu0 0.0
        %690 = vmatprep.subr.mxu0 0.0
        %691 = vmatpush1.msra.mxu0 0.0
        %692 = vmatprep.subr.mxu0 0.0
        %693 = vmatpush1.msra.mxu0 0.0
        %694 = vmatprep.subr.mxu0 0.0
        %695 = vmatpush1.msra.mxu0 0.0
        %696 = vmatprep.subr.mxu0 0.0
        %697 = vmatpush1.msra.mxu0 0.0
        %698 = vmatprep.subr.mxu0 0.0
        %699 = vmatpush1.msra.mxu0 0.0
        %700 = vmatprep.subr.mxu0 0.0
        %701 = vmatpush1.msra.mxu0 0.0
        %702 = vmatprep.subr.mxu0 0.0
        %703 = vmatpush1.msra.mxu0 0.0
        %704 = vmatprep.subr.mxu0 0.0
        %705 = vmatpush1.msra.mxu0 0.0
        %706 = vmatprep.subr.mxu0 0.0
        %707 = vmatpush1.msra.mxu0 0.0
        %708 = vmatprep.subr.mxu0 0.0
        %709 = vmatpush1.msra.mxu0 0.0
        %710 = vmatprep.subr.mxu0 0.0
        %711 = vmatpush1.msra.mxu0 0.0
        %712 = vmatprep.subr.mxu0 0.0
        %713 = vmatpush1.msra.mxu0 0.0
        %714 = vmatprep.subr.mxu0 0.0
        %715 = vmatpush1.msra.mxu0 0.0
        %716 = vmatprep.subr.mxu0 %v538
        %717 = vmatpush1.msra.mxu0 %v536
        %718 = vmatprep.subr.mxu0 0.0
        %719 = vmatpush2.msra.mxu0 0.0
        %720 = vmatprep.subr.mxu0 0.0
        %721 = vmatpush2.msra.mxu0 0.0
        %722 = vmatprep.subr.mxu0 0.0
        %723 = vmatpush2.msra.mxu0 0.0
        %724 = vmatprep.subr.mxu0 0.0
        %725 = vmatpush2.msra.mxu0 0.0
        %726 = vmatprep.subr.mxu0 0.0
        %727 = vmatpush2.msra.mxu0 0.0
        %728 = vmatprep.subr.mxu0 0.0
        %729 = vmatpush2.msra.mxu0 0.0
        %730 = vmatprep.subr.mxu0 0.0
        %731 = vmatpush2.msra.mxu0 0.0
        %732 = vmatprep.subr.mxu0 0.0
        %733 = vmatpush2.msra.mxu0 0.0
        %734 = vmatprep.subr.mxu0 0.0
        %735 = vmatpush2.msra.mxu0 0.0
        %736 = vmatprep.subr.mxu0 0.0
        %737 = vmatpush2.msra.mxu0 0.0
        %738 = vmatprep.subr.mxu0 0.0
        %739 = vmatpush2.msra.mxu0 0.0
        %740 = vmatprep.subr.mxu0 0.0
        %741 = vmatpush2.msra.mxu0 0.0
        %742 = vmatprep.subr.mxu0 0.0
        %743 = vmatpush2.msra.mxu0 0.0
        %744 = vmatprep.subr.mxu0 0.0
        %745 = vmatpush2.msra.mxu0 0.0
        %746 = vmatprep.subr.mxu0 0.0
        %747 = vmatpush2.msra.mxu0 0.0
        %748 = vmatprep.subr.mxu0 0.0
        %749 = vmatpush2.msra.mxu0 0.0
        %750 = vmatprep.mubr.f32.mxu0 0.0
        %751 = vmatmul.mubr.f32.gmra.mxu0 %v525
        %v752 = vpop.f32.mrf.mxu0
        %v753 = vadd.f32 %v513, %v752
        %v754 = vpop.f32.mrf.mxu0
        %v755 = vadd.f32 %v513, %v754
        %756 = vdwg.mxu0
        %757 = vmatprep.subr.mxu0 0.0
        %758 = vmatpush1.msra.mxu0 0.0
        %759 = vmatprep.subr.mxu0 0.0
        %760 = vmatpush1.msra.mxu0 0.0
        %761 = vmatprep.subr.mxu0 0.0
        %762 = vmatpush1.msra.mxu0 0.0
        %763 = vmatprep.subr.mxu0 0.0
        %764 = vmatpush1.msra.mxu0 0.0
        %765 = vmatprep.subr.mxu0 0.0
        %766 = vmatpush1.msra.mxu0 0.0
        %767 = vmatprep.subr.mxu0 0.0
        %768 = vmatpush1.msra.mxu0 0.0
        %769 = vmatprep.subr.mxu0 0.0
        %770 = vmatpush1.msra.mxu0 0.0
        %771 = vmatprep.subr.mxu0 0.0
        %772 = vmatpush1.msra.mxu0 0.0
        %773 = vmatprep.subr.mxu0 0.0
        %774 = vmatpush1.msra.mxu0 0.0
        %775 = vmatprep.subr.mxu0 0.0
        %776 = vmatpush1.msra.mxu0 0.0
        %777 = vmatprep.subr.mxu0 0.0
        %778 = vmatpush1.msra.mxu0 0.0
        %779 = vmatprep.subr.mxu0 0.0
        %780 = vmatpush1.msra.mxu0 0.0
        %781 = vmatprep.subr.mxu0 0.0
        %782 = vmatpush1.msra.mxu0 0.0
        %783 = vmatprep.subr.mxu0 0.0
        %784 = vmatpush1.msra.mxu0 0.0
        %785 = vmatprep.subr.mxu0 0.0
        %786 = vmatpush1.msra.mxu0 0.0
        %787 = vmatprep.subr.mxu0 %v542
        %788 = vmatpush1.msra.mxu0 %v540
        %789 = vmatprep.subr.mxu0 0.0
        %790 = vmatpush2.msra.mxu0 0.0
        %791 = vmatprep.subr.mxu0 0.0
        %792 = vmatpush2.msra.mxu0 0.0
        %793 = vmatprep.subr.mxu0 0.0
        %794 = vmatpush2.msra.mxu0 0.0
        %795 = vmatprep.subr.mxu0 0.0
        %796 = vmatpush2.msra.mxu0 0.0
        %797 = vmatprep.subr.mxu0 0.0
        %798 = vmatpush2.msra.mxu0 0.0
        %799 = vmatprep.subr.mxu0 0.0
        %800 = vmatpush2.msra.mxu0 0.0
        %801 = vmatprep.subr.mxu0 0.0
        %802 = vmatpush2.msra.mxu0 0.0
        %803 = vmatprep.subr.mxu0 0.0
        %804 = vmatpush2.msra.mxu0 0.0
        %805 = vmatprep.subr.mxu0 0.0
        %806 = vmatpush2.msra.mxu0 0.0
        %807 = vmatprep.subr.mxu0 0.0
        %808 = vmatpush2.msra.mxu0 0.0
        %809 = vmatprep.subr.mxu0 0.0
        %810 = vmatpush2.msra.mxu0 0.0
        %811 = vmatprep.subr.mxu0 0.0
        %812 = vmatpush2.msra.mxu0 0.0
        %813 = vmatprep.subr.mxu0 0.0
        %814 = vmatpush2.msra.mxu0 0.0
        %815 = vmatprep.subr.mxu0 0.0
        %816 = vmatpush2.msra.mxu0 0.0
        %817 = vmatprep.subr.mxu0 0.0
        %818 = vmatpush2.msra.mxu0 0.0
        %819 = vmatprep.subr.mxu0 0.0
        %820 = vmatpush2.msra.mxu0 0.0
        %821 = vmatprep.mubr.f32.mxu0 0.0
        %822 = vmatmul.mubr.f32.gmra.mxu0 %v525
        %v823 = vpop.f32.mrf.mxu0
        %v824 = vadd.f32 %v513, %v823
        %v825 = vpop.f32.mrf.mxu0
        %v826 = vadd.f32 %v513, %v825
        %827 = vdwg.mxu0
        %v828 = vld [vmem:[%s495] sm:$0xff]
        %v829 = vld [vmem:[%s495 + $0x8] sm:$0xff]
        %v830 = vld [vmem:[%s495 + $0x10] sm:$0xff]
        %v831 = vld [vmem:[%s495 + $0x18] sm:$0xff]
        %v832 = vld [vmem:[%s495 + $0x20] sm:$0xff]
        %v833 = vld [vmem:[%s495 + $0x28] sm:$0xff]
        %v834 = vld [vmem:[%s495 + $0x30] sm:$0xff]
        %v835 = vld [vmem:[%s495 + $0x38] sm:$0xff]
        %v836 = vpack.c.bf16 %v828, %v828
        %v837 = vpack.c.bf16 %v829, %v829
        %v838 = vpack.c.bf16 %v830, %v830
        %v839 = vpack.c.bf16 %v831, %v831
        %v840 = vpack.c.bf16 %v832, %v832
        %v841 = vpack.c.bf16 %v833, %v833
        %v842 = vpack.c.bf16 %v834, %v834
        %v843 = vpack.c.bf16 %v835, %v835
        %v844 = vld [vmem:[%s4] sm:$0xf]
        %v845 = vld [vmem:[%s4 + $0x4] sm:$0xf]
        %v846 = vld [vmem:[%s4 + $0x8] sm:$0xf]
        %v847 = vld [vmem:[%s4 + $0xc] sm:$0xf]
        %v848 = vld [vmem:[%s4 + $0x10] sm:$0xf]
        %v849 = vld [vmem:[%s4 + $0x14] sm:$0xf]
        %v850 = vld [vmem:[%s4 + $0x18] sm:$0xf]
        %v851 = vld [vmem:[%s4 + $0x1c] sm:$0xf]
        %v852 = vld [vmem:[%s4 + $0x20] sm:$0xf]
        %v853 = vld [vmem:[%s4 + $0x24] sm:$0xf]
        %v854 = vld [vmem:[%s4 + $0x28] sm:$0xf]
        %v855 = vld [vmem:[%s4 + $0x2c] sm:$0xf]
        %v856 = vld [vmem:[%s4 + $0x30] sm:$0xf]
        %v857 = vld [vmem:[%s4 + $0x34] sm:$0xf]
        %v858 = vld [vmem:[%s4 + $0x38] sm:$0xf]
        %v859 = vld [vmem:[%s4 + $0x3c] sm:$0xf]
        %v876 = vunpack.c.l.b16 %v844
        %v877 = vunpack.c.l.b16 %v845
        %v878 = vunpack.c.l.b16 %v846
        %v879 = vunpack.c.l.b16 %v847
        %v880 = vunpack.c.l.b16 %v848
        %v881 = vunpack.c.l.b16 %v849
        %v882 = vunpack.c.l.b16 %v850
        %v883 = vunpack.c.l.b16 %v851
        %v884 = vunpack.c.l.b16 %v852
        %v885 = vunpack.c.l.b16 %v853
        %v886 = vunpack.c.l.b16 %v854
        %v887 = vunpack.c.l.b16 %v855
        %v888 = vunpack.c.l.b16 %v856
        %v889 = vunpack.c.l.b16 %v857
        %v890 = vunpack.c.l.b16 %v858
        %v891 = vunpack.c.l.b16 %v859
        %v892 = vpack.c.b16 %v877, %v876
        %v893 = vpack.c.b16 %v879, %v878
        %v894 = vpack.c.b16 %v881, %v880
        %v895 = vpack.c.b16 %v883, %v882
        %v896 = vpack.c.b16 %v885, %v884
        %v897 = vpack.c.b16 %v887, %v886
        %v898 = vpack.c.b16 %v889, %v888
        %v899 = vpack.c.b16 %v891, %v890
        %vm900 = vcmask 64512
        %v902 = vsel %vm900, %v892, 0
        %v905 = vsel %vm900, %v893, 0
        %v908 = vsel %vm900, %v894, 0
        %v911 = vsel %vm900, %v895, 0
        %v914 = vsel %vm900, %v896, 0
        %v917 = vsel %vm900, %v897, 0
        %v920 = vsel %vm900, %v898, 0
        %v923 = vsel %vm900, %v899, 0
        %v926 = vsel %vm527, %v836, 0
        %v929 = vsel %vm527, %v837, 0
        %v932 = vsel %vm527, %v838, 0
        %v935 = vsel %vm527, %v839, 0
        %v938 = vsel %vm527, %v840, 0
        %v941 = vsel %vm527, %v841, 0
        %v944 = vsel %vm527, %v842, 0
        %v947 = vsel %vm527, %v843, 0
        %949 = vmatprep.subr.bf16.mxu0 0
        %950 = vmatpush1.bf16.msra.mxu0 0
        %951 = vmatprep.subr.bf16.mxu0 0
        %952 = vmatpush1.bf16.msra.mxu0 0
        %953 = vmatprep.subr.bf16.mxu0 0
        %954 = vmatpush1.bf16.msra.mxu0 0
        %955 = vmatprep.subr.bf16.mxu0 0
        %956 = vmatpush1.bf16.msra.mxu0 0
        %957 = vmatprep.subr.bf16.mxu0 0
        %958 = vmatpush1.bf16.msra.mxu0 0
        %959 = vmatprep.subr.bf16.mxu0 0
        %960 = vmatpush1.bf16.msra.mxu0 0
        %961 = vmatprep.subr.bf16.mxu0 0
        %962 = vmatpush1.bf16.msra.mxu0 0
        %963 = vmatprep.subr.bf16.mxu0 %v929
        %964 = vmatpush1.bf16.msra.mxu0 %v926
        %965 = vmatprep.subr.bf16.mxu0 0
        %966 = vmatpush2.bf16.msra.mxu0 0
        %967 = vmatprep.subr.bf16.mxu0 0
        %968 = vmatpush2.bf16.msra.mxu0 0
        %969 = vmatprep.subr.bf16.mxu0 0
        %970 = vmatpush2.bf16.msra.mxu0 0
        %971 = vmatprep.subr.bf16.mxu0 0
        %972 = vmatpush2.bf16.msra.mxu0 0
        %973 = vmatprep.subr.bf16.mxu0 0
        %974 = vmatpush2.bf16.msra.mxu0 0
        %975 = vmatprep.subr.bf16.mxu0 0
        %976 = vmatpush2.bf16.msra.mxu0 0
        %977 = vmatprep.subr.bf16.mxu0 0
        %978 = vmatpush2.bf16.msra.mxu0 0
        %979 = vmatprep.subr.bf16.mxu0 0
        %980 = vmatpush2.bf16.msra.mxu0 0
        %981 = vmatprep.mubr.bf16.mxu0 0
        %982 = vmatmul.mubr.bf16.gmra.mxu0 %v902
        %v983 = vpop.f32.mrf.mxu0
        %v984 = vadd.f32 0.0, %v983
        %v985 = vpop.f32.mrf.mxu0
        %v986 = vadd.f32 0.0, %v985
        %v987 = vpop.f32.mrf.mxu0
        %v988 = vadd.f32 0.0, %v987
        %v989 = vpop.f32.mrf.mxu0
        %v990 = vadd.f32 0.0, %v989
        %991 = vmatprep.mubr.bf16.mxu0 0
        %992 = vmatmul.mubr.bf16.gmra.mxu0 %v905
        %v993 = vpop.f32.mrf.mxu0
        %v994 = vadd.f32 0.0, %v993
        %v995 = vpop.f32.mrf.mxu0
        %v996 = vadd.f32 0.0, %v995
        %v997 = vpop.f32.mrf.mxu0
        %v998 = vadd.f32 0.0, %v997
        %v999 = vpop.f32.mrf.mxu0
        %v1000 = vadd.f32 0.0, %v999
        %1001 = vmatprep.mubr.bf16.mxu0 0
        %1002 = vmatmul.mubr.bf16.gmra.mxu0 %v908
        %v1003 = vpop.f32.mrf.mxu0
        %v1004 = vadd.f32 0.0, %v1003
        %v1005 = vpop.f32.mrf.mxu0
        %v1006 = vadd.f32 0.0, %v1005
        %v1007 = vpop.f32.mrf.mxu0
        %v1008 = vadd.f32 0.0, %v1007
        %v1009 = vpop.f32.mrf.mxu0
        %v1010 = vadd.f32 0.0, %v1009
        %1011 = vmatprep.mubr.bf16.mxu0 0
        %1012 = vmatmul.mubr.bf16.gmra.mxu0 %v911
        %v1013 = vpop.f32.mrf.mxu0
        %v1014 = vadd.f32 0.0, %v1013
        %v1015 = vpop.f32.mrf.mxu0
        %v1016 = vadd.f32 0.0, %v1015
        %v1017 = vpop.f32.mrf.mxu0
        %v1018 = vadd.f32 0.0, %v1017
        %v1019 = vpop.f32.mrf.mxu0
        %v1020 = vadd.f32 0.0, %v1019
        %1021 = vmatprep.mubr.bf16.mxu0 0
        %1022 = vmatmul.mubr.bf16.gmra.mxu0 %v914
        %v1023 = vpop.f32.mrf.mxu0
        %v1024 = vadd.f32 0.0, %v1023
        %v1025 = vpop.f32.mrf.mxu0
        %v1026 = vadd.f32 0.0, %v1025
        %v1027 = vpop.f32.mrf.mxu0
        %v1028 = vadd.f32 0.0, %v1027
        %v1029 = vpop.f32.mrf.mxu0
        %v1030 = vadd.f32 0.0, %v1029
        %1031 = vmatprep.mubr.bf16.mxu0 0
        %1032 = vmatmul.mubr.bf16.gmra.mxu0 %v917
        %v1033 = vpop.f32.mrf.mxu0
        %v1034 = vadd.f32 0.0, %v1033
        %v1035 = vpop.f32.mrf.mxu0
        %v1036 = vadd.f32 0.0, %v1035
        %v1037 = vpop.f32.mrf.mxu0
        %v1038 = vadd.f32 0.0, %v1037
        %v1039 = vpop.f32.mrf.mxu0
        %v1040 = vadd.f32 0.0, %v1039
        %1041 = vmatprep.mubr.bf16.mxu0 0
        %1042 = vmatmul.mubr.bf16.gmra.mxu0 %v920
        %v1043 = vpop.f32.mrf.mxu0
        %v1044 = vadd.f32 0.0, %v1043
        %v1045 = vpop.f32.mrf.mxu0
        %v1046 = vadd.f32 0.0, %v1045
        %v1047 = vpop.f32.mrf.mxu0
        %v1048 = vadd.f32 0.0, %v1047
        %v1049 = vpop.f32.mrf.mxu0
        %v1050 = vadd.f32 0.0, %v1049
        %1051 = vmatprep.mubr.bf16.mxu0 0
        %1052 = vmatmul.mubr.bf16.gmra.mxu0 %v923
        %v1053 = vpop.f32.mrf.mxu0
        %v1054 = vadd.f32 0.0, %v1053
        %v1055 = vpop.f32.mrf.mxu0
        %v1056 = vadd.f32 0.0, %v1055
        %v1057 = vpop.f32.mrf.mxu0
        %v1058 = vadd.f32 0.0, %v1057
        %v1059 = vpop.f32.mrf.mxu0
        %v1060 = vadd.f32 0.0, %v1059
        %1061 = vdwg.mxu0
        %1062 = vmatprep.subr.bf16.mxu0 0
        %1063 = vmatpush1.bf16.msra.mxu0 0
        %1064 = vmatprep.subr.bf16.mxu0 0
        %1065 = vmatpush1.bf16.msra.mxu0 0
        %1066 = vmatprep.subr.bf16.mxu0 0
        %1067 = vmatpush1.bf16.msra.mxu0 0
        %1068 = vmatprep.subr.bf16.mxu0 0
        %1069 = vmatpush1.bf16.msra.mxu0 0
        %1070 = vmatprep.subr.bf16.mxu0 0
        %1071 = vmatpush1.bf16.msra.mxu0 0
        %1072 = vmatprep.subr.bf16.mxu0 0
        %1073 = vmatpush1.bf16.msra.mxu0 0
        %1074 = vmatprep.subr.bf16.mxu0 0
        %1075 = vmatpush1.bf16.msra.mxu0 0
        %1076 = vmatprep.subr.bf16.mxu0 %v935
        %1077 = vmatpush1.bf16.msra.mxu0 %v932
        %1078 = vmatprep.subr.bf16.mxu0 0
        %1079 = vmatpush2.bf16.msra.mxu0 0
        %1080 = vmatprep.subr.bf16.mxu0 0
        %1081 = vmatpush2.bf16.msra.mxu0 0
        %1082 = vmatprep.subr.bf16.mxu0 0
        %1083 = vmatpush2.bf16.msra.mxu0 0
        %1084 = vmatprep.subr.bf16.mxu0 0
        %1085 = vmatpush2.bf16.msra.mxu0 0
        %1086 = vmatprep.subr.bf16.mxu0 0
        %1087 = vmatpush2.bf16.msra.mxu0 0
        %1088 = vmatprep.subr.bf16.mxu0 0
        %1089 = vmatpush2.bf16.msra.mxu0 0
        %1090 = vmatprep.subr.bf16.mxu0 0
        %1091 = vmatpush2.bf16.msra.mxu0 0
        %1092 = vmatprep.subr.bf16.mxu0 0
        %1093 = vmatpush2.bf16.msra.mxu0 0
        %1094 = vmatprep.mubr.bf16.mxu0 0
        %1095 = vmatmul.mubr.bf16.gmra.mxu0 %v902
        %v1096 = vpop.f32.mrf.mxu0
        %v1097 = vadd.f32 0.0, %v1096
        %v1098 = vpop.f32.mrf.mxu0
        %v1099 = vadd.f32 0.0, %v1098
        %v1100 = vpop.f32.mrf.mxu0
        %v1101 = vadd.f32 0.0, %v1100
        %v1102 = vpop.f32.mrf.mxu0
        %v1103 = vadd.f32 0.0, %v1102
        %1104 = vmatprep.mubr.bf16.mxu0 0
        %1105 = vmatmul.mubr.bf16.gmra.mxu0 %v905
        %v1106 = vpop.f32.mrf.mxu0
        %v1107 = vadd.f32 0.0, %v1106
        %v1108 = vpop.f32.mrf.mxu0
        %v1109 = vadd.f32 0.0, %v1108
        %v1110 = vpop.f32.mrf.mxu0
        %v1111 = vadd.f32 0.0, %v1110
        %v1112 = vpop.f32.mrf.mxu0
        %v1113 = vadd.f32 0.0, %v1112
        %1114 = vmatprep.mubr.bf16.mxu0 0
        %1115 = vmatmul.mubr.bf16.gmra.mxu0 %v908
        %v1116 = vpop.f32.mrf.mxu0
        %v1117 = vadd.f32 0.0, %v1116
        %v1118 = vpop.f32.mrf.mxu0
        %v1119 = vadd.f32 0.0, %v1118
        %v1120 = vpop.f32.mrf.mxu0
        %v1121 = vadd.f32 0.0, %v1120
        %v1122 = vpop.f32.mrf.mxu0
        %v1123 = vadd.f32 0.0, %v1122
        %1124 = vmatprep.mubr.bf16.mxu0 0
        %1125 = vmatmul.mubr.bf16.gmra.mxu0 %v911
        %v1126 = vpop.f32.mrf.mxu0
        %v1127 = vadd.f32 0.0, %v1126
        %v1128 = vpop.f32.mrf.mxu0
        %v1129 = vadd.f32 0.0, %v1128
        %v1130 = vpop.f32.mrf.mxu0
        %v1131 = vadd.f32 0.0, %v1130
        %v1132 = vpop.f32.mrf.mxu0
        %v1133 = vadd.f32 0.0, %v1132
        %1134 = vmatprep.mubr.bf16.mxu0 0
        %1135 = vmatmul.mubr.bf16.gmra.mxu0 %v914
        %v1136 = vpop.f32.mrf.mxu0
        %v1137 = vadd.f32 0.0, %v1136
        %v1138 = vpop.f32.mrf.mxu0
        %v1139 = vadd.f32 0.0, %v1138
        %v1140 = vpop.f32.mrf.mxu0
        %v1141 = vadd.f32 0.0, %v1140
        %v1142 = vpop.f32.mrf.mxu0
        %v1143 = vadd.f32 0.0, %v1142
        %1144 = vmatprep.mubr.bf16.mxu0 0
        %1145 = vmatmul.mubr.bf16.gmra.mxu0 %v917
        %v1146 = vpop.f32.mrf.mxu0
        %v1147 = vadd.f32 0.0, %v1146
        %v1148 = vpop.f32.mrf.mxu0
        %v1149 = vadd.f32 0.0, %v1148
        %v1150 = vpop.f32.mrf.mxu0
        %v1151 = vadd.f32 0.0, %v1150
        %v1152 = vpop.f32.mrf.mxu0
        %v1153 = vadd.f32 0.0, %v1152
        %1154 = vmatprep.mubr.bf16.mxu0 0
        %1155 = vmatmul.mubr.bf16.gmra.mxu0 %v920
        %v1156 = vpop.f32.mrf.mxu0
        %v1157 = vadd.f32 0.0, %v1156
        %v1158 = vpop.f32.mrf.mxu0
        %v1159 = vadd.f32 0.0, %v1158
        %v1160 = vpop.f32.mrf.mxu0
        %v1161 = vadd.f32 0.0, %v1160
        %v1162 = vpop.f32.mrf.mxu0
        %v1163 = vadd.f32 0.0, %v1162
        %1164 = vmatprep.mubr.bf16.mxu0 0
        %1165 = vmatmul.mubr.bf16.gmra.mxu0 %v923
        %v1166 = vpop.f32.mrf.mxu0
        %v1167 = vadd.f32 0.0, %v1166
        %v1168 = vpop.f32.mrf.mxu0
        %v1169 = vadd.f32 0.0, %v1168
        %v1170 = vpop.f32.mrf.mxu0
        %v1171 = vadd.f32 0.0, %v1170
        %v1172 = vpop.f32.mrf.mxu0
        %v1173 = vadd.f32 0.0, %v1172
        %1174 = vdwg.mxu0
        %1175 = vmatprep.subr.bf16.mxu0 0
        %1176 = vmatpush1.bf16.msra.mxu0 0
        %1177 = vmatprep.subr.bf16.mxu0 0
        %1178 = vmatpush1.bf16.msra.mxu0 0
        %1179 = vmatprep.subr.bf16.mxu0 0
        %1180 = vmatpush1.bf16.msra.mxu0 0
        %1181 = vmatprep.subr.bf16.mxu0 0
        %1182 = vmatpush1.bf16.msra.mxu0 0
        %1183 = vmatprep.subr.bf16.mxu0 0
        %1184 = vmatpush1.bf16.msra.mxu0 0
        %1185 = vmatprep.subr.bf16.mxu0 0
        %1186 = vmatpush1.bf16.msra.mxu0 0
        %1187 = vmatprep.subr.bf16.mxu0 0
        %1188 = vmatpush1.bf16.msra.mxu0 0
        %1189 = vmatprep.subr.bf16.mxu0 %v941
        %1190 = vmatpush1.bf16.msra.mxu0 %v938
        %1191 = vmatprep.subr.bf16.mxu0 0
        %1192 = vmatpush2.bf16.msra.mxu0 0
        %1193 = vmatprep.subr.bf16.mxu0 0
        %1194 = vmatpush2.bf16.msra.mxu0 0
        %1195 = vmatprep.subr.bf16.mxu0 0
        %1196 = vmatpush2.bf16.msra.mxu0 0
        %1197 = vmatprep.subr.bf16.mxu0 0
        %1198 = vmatpush2.bf16.msra.mxu0 0
        %1199 = vmatprep.subr.bf16.mxu0 0
        %1200 = vmatpush2.bf16.msra.mxu0 0
        %1201 = vmatprep.subr.bf16.mxu0 0
        %1202 = vmatpush2.bf16.msra.mxu0 0
        %1203 = vmatprep.subr.bf16.mxu0 0
        %1204 = vmatpush2.bf16.msra.mxu0 0
        %1205 = vmatprep.subr.bf16.mxu0 0
        %1206 = vmatpush2.bf16.msra.mxu0 0
        %1207 = vmatprep.mubr.bf16.mxu0 0
        %1208 = vmatmul.mubr.bf16.gmra.mxu0 %v902
        %v1209 = vpop.f32.mrf.mxu0
        %v1210 = vadd.f32 0.0, %v1209
        %v1211 = vpop.f32.mrf.mxu0
        %v1212 = vadd.f32 0.0, %v1211
        %v1213 = vpop.f32.mrf.mxu0
        %v1214 = vadd.f32 0.0, %v1213
        %v1215 = vpop.f32.mrf.mxu0
        %v1216 = vadd.f32 0.0, %v1215
        %1217 = vmatprep.mubr.bf16.mxu0 0
        %1218 = vmatmul.mubr.bf16.gmra.mxu0 %v905
        %v1219 = vpop.f32.mrf.mxu0
        %v1220 = vadd.f32 0.0, %v1219
        %v1221 = vpop.f32.mrf.mxu0
        %v1222 = vadd.f32 0.0, %v1221
        %v1223 = vpop.f32.mrf.mxu0
        %v1224 = vadd.f32 0.0, %v1223
        %v1225 = vpop.f32.mrf.mxu0
        %v1226 = vadd.f32 0.0, %v1225
        %1227 = vmatprep.mubr.bf16.mxu0 0
        %1228 = vmatmul.mubr.bf16.gmra.mxu0 %v908
        %v1229 = vpop.f32.mrf.mxu0
        %v1230 = vadd.f32 0.0, %v1229
        %v1231 = vpop.f32.mrf.mxu0
        %v1232 = vadd.f32 0.0, %v1231
        %v1233 = vpop.f32.mrf.mxu0
        %v1234 = vadd.f32 0.0, %v1233
        %v1235 = vpop.f32.mrf.mxu0
        %v1236 = vadd.f32 0.0, %v1235
        %1237 = vmatprep.mubr.bf16.mxu0 0
        %1238 = vmatmul.mubr.bf16.gmra.mxu0 %v911
        %v1239 = vpop.f32.mrf.mxu0
        %v1240 = vadd.f32 0.0, %v1239
        %v1241 = vpop.f32.mrf.mxu0
        %v1242 = vadd.f32 0.0, %v1241
        %v1243 = vpop.f32.mrf.mxu0
        %v1244 = vadd.f32 0.0, %v1243
        %v1245 = vpop.f32.mrf.mxu0
        %v1246 = vadd.f32 0.0, %v1245
        %1247 = vmatprep.mubr.bf16.mxu0 0
        %1248 = vmatmul.mubr.bf16.gmra.mxu0 %v914
        %v1249 = vpop.f32.mrf.mxu0
        %v1250 = vadd.f32 0.0, %v1249
        %v1251 = vpop.f32.mrf.mxu0
        %v1252 = vadd.f32 0.0, %v1251
        %v1253 = vpop.f32.mrf.mxu0
        %v1254 = vadd.f32 0.0, %v1253
        %v1255 = vpop.f32.mrf.mxu0
        %v1256 = vadd.f32 0.0, %v1255
        %1257 = vmatprep.mubr.bf16.mxu0 0
        %1258 = vmatmul.mubr.bf16.gmra.mxu0 %v917
        %v1259 = vpop.f32.mrf.mxu0
        %v1260 = vadd.f32 0.0, %v1259
        %v1261 = vpop.f32.mrf.mxu0
        %v1262 = vadd.f32 0.0, %v1261
        %v1263 = vpop.f32.mrf.mxu0
        %v1264 = vadd.f32 0.0, %v1263
        %v1265 = vpop.f32.mrf.mxu0
        %v1266 = vadd.f32 0.0, %v1265
        %1267 = vmatprep.mubr.bf16.mxu0 0
        %1268 = vmatmul.mubr.bf16.gmra.mxu0 %v920
        %v1269 = vpop.f32.mrf.mxu0
        %v1270 = vadd.f32 0.0, %v1269
        %v1271 = vpop.f32.mrf.mxu0
        %v1272 = vadd.f32 0.0, %v1271
        %v1273 = vpop.f32.mrf.mxu0
        %v1274 = vadd.f32 0.0, %v1273
        %v1275 = vpop.f32.mrf.mxu0
        %v1276 = vadd.f32 0.0, %v1275
        %1277 = vmatprep.mubr.bf16.mxu0 0
        %1278 = vmatmul.mubr.bf16.gmra.mxu0 %v923
        %v1279 = vpop.f32.mrf.mxu0
        %v1280 = vadd.f32 0.0, %v1279
        %v1281 = vpop.f32.mrf.mxu0
        %v1282 = vadd.f32 0.0, %v1281
        %v1283 = vpop.f32.mrf.mxu0
        %v1284 = vadd.f32 0.0, %v1283
        %v1285 = vpop.f32.mrf.mxu0
        %v1286 = vadd.f32 0.0, %v1285
        %1287 = vdwg.mxu0
        %1288 = vmatprep.subr.bf16.mxu0 0
        %1289 = vmatpush1.bf16.msra.mxu0 0
        %1290 = vmatprep.subr.bf16.mxu0 0
        %1291 = vmatpush1.bf16.msra.mxu0 0
        %1292 = vmatprep.subr.bf16.mxu0 0
        %1293 = vmatpush1.bf16.msra.mxu0 0
        %1294 = vmatprep.subr.bf16.mxu0 0
        %1295 = vmatpush1.bf16.msra.mxu0 0
        %1296 = vmatprep.subr.bf16.mxu0 0
        %1297 = vmatpush1.bf16.msra.mxu0 0
        %1298 = vmatprep.subr.bf16.mxu0 0
        %1299 = vmatpush1.bf16.msra.mxu0 0
        %1300 = vmatprep.subr.bf16.mxu0 0
        %1301 = vmatpush1.bf16.msra.mxu0 0
        %1302 = vmatprep.subr.bf16.mxu0 %v947
        %1303 = vmatpush1.bf16.msra.mxu0 %v944
        %1304 = vmatprep.subr.bf16.mxu0 0
        %1305 = vmatpush2.bf16.msra.mxu0 0
        %1306 = vmatprep.subr.bf16.mxu0 0
        %1307 = vmatpush2.bf16.msra.mxu0 0
        %1308 = vmatprep.subr.bf16.mxu0 0
        %1309 = vmatpush2.bf16.msra.mxu0 0
        %1310 = vmatprep.subr.bf16.mxu0 0
        %1311 = vmatpush2.bf16.msra.mxu0 0
        %1312 = vmatprep.subr.bf16.mxu0 0
        %1313 = vmatpush2.bf16.msra.mxu0 0
        %1314 = vmatprep.subr.bf16.mxu0 0
        %1315 = vmatpush2.bf16.msra.mxu0 0
        %1316 = vmatprep.subr.bf16.mxu0 0
        %1317 = vmatpush2.bf16.msra.mxu0 0
        %1318 = vmatprep.subr.bf16.mxu0 0
        %1319 = vmatpush2.bf16.msra.mxu0 0
        %1320 = vmatprep.mubr.bf16.mxu0 0
        %1321 = vmatmul.mubr.bf16.gmra.mxu0 %v902
        %v1322 = vpop.f32.mrf.mxu0
        %v1323 = vadd.f32 0.0, %v1322
        %v1324 = vpop.f32.mrf.mxu0
        %v1325 = vadd.f32 0.0, %v1324
        %v1326 = vpop.f32.mrf.mxu0
        %v1327 = vadd.f32 0.0, %v1326
        %v1328 = vpop.f32.mrf.mxu0
        %v1329 = vadd.f32 0.0, %v1328
        %1330 = vmatprep.mubr.bf16.mxu0 0
        %1331 = vmatmul.mubr.bf16.gmra.mxu0 %v905
        %v1332 = vpop.f32.mrf.mxu0
        %v1333 = vadd.f32 0.0, %v1332
        %v1334 = vpop.f32.mrf.mxu0
        %v1335 = vadd.f32 0.0, %v1334
        %v1336 = vpop.f32.mrf.mxu0
        %v1337 = vadd.f32 0.0, %v1336
        %v1338 = vpop.f32.mrf.mxu0
        %v1339 = vadd.f32 0.0, %v1338
        %1340 = vmatprep.mubr.bf16.mxu0 0
        %1341 = vmatmul.mubr.bf16.gmra.mxu0 %v908
        %v1342 = vpop.f32.mrf.mxu0
        %v1343 = vadd.f32 0.0, %v1342
        %v1344 = vpop.f32.mrf.mxu0
        %v1345 = vadd.f32 0.0, %v1344
        %v1346 = vpop.f32.mrf.mxu0
        %v1347 = vadd.f32 0.0, %v1346
        %v1348 = vpop.f32.mrf.mxu0
        %v1349 = vadd.f32 0.0, %v1348
        %1350 = vmatprep.mubr.bf16.mxu0 0
        %1351 = vmatmul.mubr.bf16.gmra.mxu0 %v911
        %v1352 = vpop.f32.mrf.mxu0
        %v1353 = vadd.f32 0.0, %v1352
        %v1354 = vpop.f32.mrf.mxu0
        %v1355 = vadd.f32 0.0, %v1354
        %v1356 = vpop.f32.mrf.mxu0
        %v1357 = vadd.f32 0.0, %v1356
        %v1358 = vpop.f32.mrf.mxu0
        %v1359 = vadd.f32 0.0, %v1358
        %1360 = vmatprep.mubr.bf16.mxu0 0
        %1361 = vmatmul.mubr.bf16.gmra.mxu0 %v914
        %v1362 = vpop.f32.mrf.mxu0
        %v1363 = vadd.f32 0.0, %v1362
        %v1364 = vpop.f32.mrf.mxu0
        %v1365 = vadd.f32 0.0, %v1364
        %v1366 = vpop.f32.mrf.mxu0
        %v1367 = vadd.f32 0.0, %v1366
        %v1368 = vpop.f32.mrf.mxu0
        %v1369 = vadd.f32 0.0, %v1368
        %1370 = vmatprep.mubr.bf16.mxu0 0
        %1371 = vmatmul.mubr.bf16.gmra.mxu0 %v917
        %v1372 = vpop.f32.mrf.mxu0
        %v1373 = vadd.f32 0.0, %v1372
        %v1374 = vpop.f32.mrf.mxu0
        %v1375 = vadd.f32 0.0, %v1374
        %v1376 = vpop.f32.mrf.mxu0
        %v1377 = vadd.f32 0.0, %v1376
        %v1378 = vpop.f32.mrf.mxu0
        %v1379 = vadd.f32 0.0, %v1378
        %1380 = vmatprep.mubr.bf16.mxu0 0
        %1381 = vmatmul.mubr.bf16.gmra.mxu0 %v920
        %v1382 = vpop.f32.mrf.mxu0
        %v1383 = vadd.f32 0.0, %v1382
        %v1384 = vpop.f32.mrf.mxu0
        %v1385 = vadd.f32 0.0, %v1384
        %v1386 = vpop.f32.mrf.mxu0
        %v1387 = vadd.f32 0.0, %v1386
        %v1388 = vpop.f32.mrf.mxu0
        %v1389 = vadd.f32 0.0, %v1388
        %1390 = vmatprep.mubr.bf16.mxu0 0
        %1391 = vmatmul.mubr.bf16.gmra.mxu0 %v923
        %v1392 = vpop.f32.mrf.mxu0
        %v1393 = vadd.f32 0.0, %v1392
        %v1394 = vpop.f32.mrf.mxu0
        %v1395 = vadd.f32 0.0, %v1394
        %v1396 = vpop.f32.mrf.mxu0
        %v1397 = vadd.f32 0.0, %v1396
        %v1398 = vpop.f32.mrf.mxu0
        %v1399 = vadd.f32 0.0, %v1398
        %1400 = vdwg.mxu0
        %v1401 = vld [vmem:[%s5] sm:$0xf]
        %v1402 = vld [vmem:[%s5 + $0x4] sm:$0xf]
        %v1403 = vld [vmem:[%s5 + $0x8] sm:$0xf]
        %v1404 = vld [vmem:[%s5 + $0xc] sm:$0xf]
        %v1405 = vld [vmem:[%s5 + $0x10] sm:$0xf]
        %v1406 = vld [vmem:[%s5 + $0x14] sm:$0xf]
        %v1407 = vld [vmem:[%s5 + $0x18] sm:$0xf]
        %v1408 = vld [vmem:[%s5 + $0x1c] sm:$0xf]
        %v1409 = vpack.c.bf16 %v611, %v611
        %v1410 = vpack.c.bf16 %v613, %v613
        %v1411 = vpack.c.bf16 %v682, %v682
        %v1412 = vpack.c.bf16 %v684, %v684
        %v1413 = vpack.c.bf16 %v753, %v753
        %v1414 = vpack.c.bf16 %v755, %v755
        %v1415 = vpack.c.bf16 %v824, %v824
        %v1416 = vpack.c.bf16 %v826, %v826
        %v1425 = vunpack.c.l.b16 %v1401
        %v1426 = vunpack.c.l.b16 %v1402
        %v1427 = vunpack.c.l.b16 %v1403
        %v1428 = vunpack.c.l.b16 %v1404
        %v1429 = vunpack.c.l.b16 %v1405
        %v1430 = vunpack.c.l.b16 %v1406
        %v1431 = vunpack.c.l.b16 %v1407
        %v1432 = vunpack.c.l.b16 %v1408
        %v1433 = vpack.c.b16 %v1426, %v1425
        %v1434 = vpack.c.b16 %v1428, %v1427
        %v1435 = vpack.c.b16 %v1430, %v1429
        %v1436 = vpack.c.b16 %v1432, %v1431
        %vm1437 = vcmask 15360
        %v1439 = vsel %vm1437, %v1433, 0
        %v1442 = vsel %vm1437, %v1434, 0
        %v1445 = vsel %vm1437, %v1435, 0
        %v1448 = vsel %vm1437, %v1436, 0
        %vm1450 = vcmask 1040384
        %v1452 = vsel %vm1450, %v1409, 0
        %v1455 = vsel %vm1450, %v1410, 0
        %v1458 = vsel %vm1450, %v1411, 0
        %v1461 = vsel %vm1450, %v1412, 0
        %v1464 = vsel %vm1450, %v1413, 0
        %v1467 = vsel %vm1450, %v1414, 0
        %v1470 = vsel %vm1450, %v1415, 0
        %v1473 = vsel %vm1450, %v1416, 0
        %1475 = vmatprep.subr.bf16.mxu0 0
        %1476 = vmatpush1.bf16.msra.mxu0 0
        %1477 = vmatprep.subr.bf16.mxu0 0
        %1478 = vmatpush1.bf16.msra.mxu0 0
        %1479 = vmatprep.subr.bf16.mxu0 0
        %1480 = vmatpush1.bf16.msra.mxu0 0
        %1481 = vmatprep.subr.bf16.mxu0 0
        %1482 = vmatpush1.bf16.msra.mxu0 0
        %1483 = vmatprep.subr.bf16.mxu0 0
        %1484 = vmatpush1.bf16.msra.mxu0 0
        %1485 = vmatprep.subr.bf16.mxu0 0
        %1486 = vmatpush1.bf16.msra.mxu0 0
        %1487 = vmatprep.subr.bf16.mxu0 0
        %1488 = vmatpush1.bf16.msra.mxu0 0
        %1489 = vmatprep.subr.bf16.mxu0 %v1455
        %1490 = vmatpush1.bf16.msra.mxu0 %v1452
        %1491 = vmatprep.subr.bf16.mxu0 0
        %1492 = vmatpush2.bf16.msra.mxu0 0
        %1493 = vmatprep.subr.bf16.mxu0 0
        %1494 = vmatpush2.bf16.msra.mxu0 0
        %1495 = vmatprep.subr.bf16.mxu0 0
        %1496 = vmatpush2.bf16.msra.mxu0 0
        %1497 = vmatprep.subr.bf16.mxu0 0
        %1498 = vmatpush2.bf16.msra.mxu0 0
        %1499 = vmatprep.subr.bf16.mxu0 0
        %1500 = vmatpush2.bf16.msra.mxu0 0
        %1501 = vmatprep.subr.bf16.mxu0 0
        %1502 = vmatpush2.bf16.msra.mxu0 0
        %1503 = vmatprep.subr.bf16.mxu0 0
        %1504 = vmatpush2.bf16.msra.mxu0 0
        %1505 = vmatprep.subr.bf16.mxu0 0
        %1506 = vmatpush2.bf16.msra.mxu0 0
        %1507 = vmatprep.mubr.bf16.mxu0 0
        %1508 = vmatmul.mubr.bf16.gmra.mxu0 %v1439
        %v1509 = vpop.f32.mrf.mxu0
        %v1510 = vadd.f32 %v984, %v1509
        %v1511 = vpop.f32.mrf.mxu0
        %v1512 = vadd.f32 %v986, %v1511
        %v1513 = vpop.f32.mrf.mxu0
        %v1514 = vadd.f32 %v988, %v1513
        %v1515 = vpop.f32.mrf.mxu0
        %v1516 = vadd.f32 %v990, %v1515
        %1517 = vmatprep.mubr.bf16.mxu0 0
        %1518 = vmatmul.mubr.bf16.gmra.mxu0 %v1442
        %v1519 = vpop.f32.mrf.mxu0
        %v1520 = vadd.f32 %v994, %v1519
        %v1521 = vpop.f32.mrf.mxu0
        %v1522 = vadd.f32 %v996, %v1521
        %v1523 = vpop.f32.mrf.mxu0
        %v1524 = vadd.f32 %v998, %v1523
        %v1525 = vpop.f32.mrf.mxu0
        %v1526 = vadd.f32 %v1000, %v1525
        %1527 = vmatprep.mubr.bf16.mxu0 0
        %1528 = vmatmul.mubr.bf16.gmra.mxu0 %v1445
        %v1529 = vpop.f32.mrf.mxu0
        %v1530 = vadd.f32 %v1004, %v1529
        %v1531 = vpop.f32.mrf.mxu0
        %v1532 = vadd.f32 %v1006, %v1531
        %v1533 = vpop.f32.mrf.mxu0
        %v1534 = vadd.f32 %v1008, %v1533
        %v1535 = vpop.f32.mrf.mxu0
        %v1536 = vadd.f32 %v1010, %v1535
        %1537 = vmatprep.mubr.bf16.mxu0 0
        %1538 = vmatmul.mubr.bf16.gmra.mxu0 %v1448
        %v1539 = vpop.f32.mrf.mxu0
        %v1540 = vadd.f32 %v1014, %v1539
        %v1541 = vpop.f32.mrf.mxu0
        %v1542 = vadd.f32 %v1016, %v1541
        %v1543 = vpop.f32.mrf.mxu0
        %v1544 = vadd.f32 %v1018, %v1543
        %v1545 = vpop.f32.mrf.mxu0
        %v1546 = vadd.f32 %v1020, %v1545
        %1547 = vdwg.mxu0
        %1548 = vmatprep.subr.bf16.mxu0 0
        %1549 = vmatpush1.bf16.msra.mxu0 0
        %1550 = vmatprep.subr.bf16.mxu0 0
        %1551 = vmatpush1.bf16.msra.mxu0 0
        %1552 = vmatprep.subr.bf16.mxu0 0
        %1553 = vmatpush1.bf16.msra.mxu0 0
        %1554 = vmatprep.subr.bf16.mxu0 0
        %1555 = vmatpush1.bf16.msra.mxu0 0
        %1556 = vmatprep.subr.bf16.mxu0 0
        %1557 = vmatpush1.bf16.msra.mxu0 0
        %1558 = vmatprep.subr.bf16.mxu0 0
        %1559 = vmatpush1.bf16.msra.mxu0 0
        %1560 = vmatprep.subr.bf16.mxu0 0
        %1561 = vmatpush1.bf16.msra.mxu0 0
        %1562 = vmatprep.subr.bf16.mxu0 %v1461
        %1563 = vmatpush1.bf16.msra.mxu0 %v1458
        %1564 = vmatprep.subr.bf16.mxu0 0
        %1565 = vmatpush2.bf16.msra.mxu0 0
        %1566 = vmatprep.subr.bf16.mxu0 0
        %1567 = vmatpush2.bf16.msra.mxu0 0
        %1568 = vmatprep.subr.bf16.mxu0 0
        %1569 = vmatpush2.bf16.msra.mxu0 0
        %1570 = vmatprep.subr.bf16.mxu0 0
        %1571 = vmatpush2.bf16.msra.mxu0 0
        %1572 = vmatprep.subr.bf16.mxu0 0
        %1573 = vmatpush2.bf16.msra.mxu0 0
        %1574 = vmatprep.subr.bf16.mxu0 0
        %1575 = vmatpush2.bf16.msra.mxu0 0
        %1576 = vmatprep.subr.bf16.mxu0 0
        %1577 = vmatpush2.bf16.msra.mxu0 0
        %1578 = vmatprep.subr.bf16.mxu0 0
        %1579 = vmatpush2.bf16.msra.mxu0 0
        %1580 = vmatprep.mubr.bf16.mxu0 0
        %1581 = vmatmul.mubr.bf16.gmra.mxu0 %v1439
        %v1582 = vpop.f32.mrf.mxu0
        %v1583 = vadd.f32 %v1097, %v1582
        %v1584 = vpop.f32.mrf.mxu0
        %v1585 = vadd.f32 %v1099, %v1584
        %v1586 = vpop.f32.mrf.mxu0
        %v1587 = vadd.f32 %v1101, %v1586
        %v1588 = vpop.f32.mrf.mxu0
        %v1589 = vadd.f32 %v1103, %v1588
        %1590 = vmatprep.mubr.bf16.mxu0 0
        %1591 = vmatmul.mubr.bf16.gmra.mxu0 %v1442
        %v1592 = vpop.f32.mrf.mxu0
        %v1593 = vadd.f32 %v1107, %v1592
        %v1594 = vpop.f32.mrf.mxu0
        %v1595 = vadd.f32 %v1109, %v1594
        %v1596 = vpop.f32.mrf.mxu0
        %v1597 = vadd.f32 %v1111, %v1596
        %v1598 = vpop.f32.mrf.mxu0
        %v1599 = vadd.f32 %v1113, %v1598
        %1600 = vmatprep.mubr.bf16.mxu0 0
        %1601 = vmatmul.mubr.bf16.gmra.mxu0 %v1445
        %v1602 = vpop.f32.mrf.mxu0
        %v1603 = vadd.f32 %v1117, %v1602
        %v1604 = vpop.f32.mrf.mxu0
        %v1605 = vadd.f32 %v1119, %v1604
        %v1606 = vpop.f32.mrf.mxu0
        %v1607 = vadd.f32 %v1121, %v1606
        %v1608 = vpop.f32.mrf.mxu0
        %v1609 = vadd.f32 %v1123, %v1608
        %1610 = vmatprep.mubr.bf16.mxu0 0
        %1611 = vmatmul.mubr.bf16.gmra.mxu0 %v1448
        %v1612 = vpop.f32.mrf.mxu0
        %v1613 = vadd.f32 %v1127, %v1612
        %v1614 = vpop.f32.mrf.mxu0
        %v1615 = vadd.f32 %v1129, %v1614
        %v1616 = vpop.f32.mrf.mxu0
        %v1617 = vadd.f32 %v1131, %v1616
        %v1618 = vpop.f32.mrf.mxu0
        %v1619 = vadd.f32 %v1133, %v1618
        %1620 = vdwg.mxu0
        %1621 = vmatprep.subr.bf16.mxu0 0
        %1622 = vmatpush1.bf16.msra.mxu0 0
        %1623 = vmatprep.subr.bf16.mxu0 0
        %1624 = vmatpush1.bf16.msra.mxu0 0
        %1625 = vmatprep.subr.bf16.mxu0 0
        %1626 = vmatpush1.bf16.msra.mxu0 0
        %1627 = vmatprep.subr.bf16.mxu0 0
        %1628 = vmatpush1.bf16.msra.mxu0 0
        %1629 = vmatprep.subr.bf16.mxu0 0
        %1630 = vmatpush1.bf16.msra.mxu0 0
        %1631 = vmatprep.subr.bf16.mxu0 0
        %1632 = vmatpush1.bf16.msra.mxu0 0
        %1633 = vmatprep.subr.bf16.mxu0 0
        %1634 = vmatpush1.bf16.msra.mxu0 0
        %1635 = vmatprep.subr.bf16.mxu0 %v1467
        %1636 = vmatpush1.bf16.msra.mxu0 %v1464
        %1637 = vmatprep.subr.bf16.mxu0 0
        %1638 = vmatpush2.bf16.msra.mxu0 0
        %1639 = vmatprep.subr.bf16.mxu0 0
        %1640 = vmatpush2.bf16.msra.mxu0 0
        %1641 = vmatprep.subr.bf16.mxu0 0
        %1642 = vmatpush2.bf16.msra.mxu0 0
        %1643 = vmatprep.subr.bf16.mxu0 0
        %1644 = vmatpush2.bf16.msra.mxu0 0
        %1645 = vmatprep.subr.bf16.mxu0 0
        %1646 = vmatpush2.bf16.msra.mxu0 0
        %1647 = vmatprep.subr.bf16.mxu0 0
        %1648 = vmatpush2.bf16.msra.mxu0 0
        %1649 = vmatprep.subr.bf16.mxu0 0
        %1650 = vmatpush2.bf16.msra.mxu0 0
        %1651 = vmatprep.subr.bf16.mxu0 0
        %1652 = vmatpush2.bf16.msra.mxu0 0
        %1653 = vmatprep.mubr.bf16.mxu0 0
        %1654 = vmatmul.mubr.bf16.gmra.mxu0 %v1439
        %v1655 = vpop.f32.mrf.mxu0
        %v1656 = vadd.f32 %v1210, %v1655
        %v1657 = vpop.f32.mrf.mxu0
        %v1658 = vadd.f32 %v1212, %v1657
        %v1659 = vpop.f32.mrf.mxu0
        %v1660 = vadd.f32 %v1214, %v1659
        %v1661 = vpop.f32.mrf.mxu0
        %v1662 = vadd.f32 %v1216, %v1661
        %1663 = vmatprep.mubr.bf16.mxu0 0
        %1664 = vmatmul.mubr.bf16.gmra.mxu0 %v1442
        %v1665 = vpop.f32.mrf.mxu0
        %v1666 = vadd.f32 %v1220, %v1665
        %v1667 = vpop.f32.mrf.mxu0
        %v1668 = vadd.f32 %v1222, %v1667
        %v1669 = vpop.f32.mrf.mxu0
        %v1670 = vadd.f32 %v1224, %v1669
        %v1671 = vpop.f32.mrf.mxu0
        %v1672 = vadd.f32 %v1226, %v1671
        %1673 = vmatprep.mubr.bf16.mxu0 0
        %1674 = vmatmul.mubr.bf16.gmra.mxu0 %v1445
        %v1675 = vpop.f32.mrf.mxu0
        %v1676 = vadd.f32 %v1230, %v1675
        %v1677 = vpop.f32.mrf.mxu0
        %v1678 = vadd.f32 %v1232, %v1677
        %v1679 = vpop.f32.mrf.mxu0
        %v1680 = vadd.f32 %v1234, %v1679
        %v1681 = vpop.f32.mrf.mxu0
        %v1682 = vadd.f32 %v1236, %v1681
        %1683 = vmatprep.mubr.bf16.mxu0 0
        %1684 = vmatmul.mubr.bf16.gmra.mxu0 %v1448
        %v1685 = vpop.f32.mrf.mxu0
        %v1686 = vadd.f32 %v1240, %v1685
        %v1687 = vpop.f32.mrf.mxu0
        %v1688 = vadd.f32 %v1242, %v1687
        %v1689 = vpop.f32.mrf.mxu0
        %v1690 = vadd.f32 %v1244, %v1689
        %v1691 = vpop.f32.mrf.mxu0
        %v1692 = vadd.f32 %v1246, %v1691
        %1693 = vdwg.mxu0
        %1694 = vmatprep.subr.bf16.mxu0 0
        %1695 = vmatpush1.bf16.msra.mxu0 0
        %1696 = vmatprep.subr.bf16.mxu0 0
        %1697 = vmatpush1.bf16.msra.mxu0 0
        %1698 = vmatprep.subr.bf16.mxu0 0
        %1699 = vmatpush1.bf16.msra.mxu0 0
        %1700 = vmatprep.subr.bf16.mxu0 0
        %1701 = vmatpush1.bf16.msra.mxu0 0
        %1702 = vmatprep.subr.bf16.mxu0 0
        %1703 = vmatpush1.bf16.msra.mxu0 0
        %1704 = vmatprep.subr.bf16.mxu0 0
        %1705 = vmatpush1.bf16.msra.mxu0 0
        %1706 = vmatprep.subr.bf16.mxu0 0
        %1707 = vmatpush1.bf16.msra.mxu0 0
        %1708 = vmatprep.subr.bf16.mxu0 %v1473
        %1709 = vmatpush1.bf16.msra.mxu0 %v1470
        %1710 = vmatprep.subr.bf16.mxu0 0
        %1711 = vmatpush2.bf16.msra.mxu0 0
        %1712 = vmatprep.subr.bf16.mxu0 0
        %1713 = vmatpush2.bf16.msra.mxu0 0
        %1714 = vmatprep.subr.bf16.mxu0 0
        %1715 = vmatpush2.bf16.msra.mxu0 0
        %1716 = vmatprep.subr.bf16.mxu0 0
        %1717 = vmatpush2.bf16.msra.mxu0 0
        %1718 = vmatprep.subr.bf16.mxu0 0
        %1719 = vmatpush2.bf16.msra.mxu0 0
        %1720 = vmatprep.subr.bf16.mxu0 0
        %1721 = vmatpush2.bf16.msra.mxu0 0
        %1722 = vmatprep.subr.bf16.mxu0 0
        %1723 = vmatpush2.bf16.msra.mxu0 0
        %1724 = vmatprep.subr.bf16.mxu0 0
        %1725 = vmatpush2.bf16.msra.mxu0 0
        %1726 = vmatprep.mubr.bf16.mxu0 0
        %1727 = vmatmul.mubr.bf16.gmra.mxu0 %v1439
        %v1728 = vpop.f32.mrf.mxu0
        %v1729 = vadd.f32 %v1323, %v1728
        %v1730 = vpop.f32.mrf.mxu0
        %v1731 = vadd.f32 %v1325, %v1730
        %v1732 = vpop.f32.mrf.mxu0
        %v1733 = vadd.f32 %v1327, %v1732
        %v1734 = vpop.f32.mrf.mxu0
        %v1735 = vadd.f32 %v1329, %v1734
        %1736 = vmatprep.mubr.bf16.mxu0 0
        %1737 = vmatmul.mubr.bf16.gmra.mxu0 %v1442
        %v1738 = vpop.f32.mrf.mxu0
        %v1739 = vadd.f32 %v1333, %v1738
        %v1740 = vpop.f32.mrf.mxu0
        %v1741 = vadd.f32 %v1335, %v1740
        %v1742 = vpop.f32.mrf.mxu0
        %v1743 = vadd.f32 %v1337, %v1742
        %v1744 = vpop.f32.mrf.mxu0
        %v1745 = vadd.f32 %v1339, %v1744
        %1746 = vmatprep.mubr.bf16.mxu0 0
        %1747 = vmatmul.mubr.bf16.gmra.mxu0 %v1445
        %v1748 = vpop.f32.mrf.mxu0
        %v1749 = vadd.f32 %v1343, %v1748
        %v1750 = vpop.f32.mrf.mxu0
        %v1751 = vadd.f32 %v1345, %v1750
        %v1752 = vpop.f32.mrf.mxu0
        %v1753 = vadd.f32 %v1347, %v1752
        %v1754 = vpop.f32.mrf.mxu0
        %v1755 = vadd.f32 %v1349, %v1754
        %1756 = vmatprep.mubr.bf16.mxu0 0
        %1757 = vmatmul.mubr.bf16.gmra.mxu0 %v1448
        %v1758 = vpop.f32.mrf.mxu0
        %v1759 = vadd.f32 %v1353, %v1758
        %v1760 = vpop.f32.mrf.mxu0
        %v1761 = vadd.f32 %v1355, %v1760
        %v1762 = vpop.f32.mrf.mxu0
        %v1763 = vadd.f32 %v1357, %v1762
        %v1764 = vpop.f32.mrf.mxu0
        %v1765 = vadd.f32 %v1359, %v1764
        %1766 = vdwg.mxu0
        %v1767 = vld [vmem:[%s6] sm:$0xff]
        %v1768 = vld [vmem:[%s6 + $0x8] sm:$0xff]
        %v1769 = vld [vmem:[%s6 + $0x10] sm:$0xff]
        %v1770 = vld [vmem:[%s6 + $0x18] sm:$0xff]
        %v1771 = vld [vmem:[%s6 + $0x20] sm:$0xff]
        %v1772 = vld [vmem:[%s6 + $0x28] sm:$0xff]
        %v1773 = vld [vmem:[%s6 + $0x30] sm:$0xff]
        %v1774 = vld [vmem:[%s6 + $0x38] sm:$0xff]
        %1776 = vset.pattern.permute.xlu0 0
        %1777 = vperm.xlu0 %1776, %v1767
        %v1778 = vpop.permute.xlu0 %1777
        %1781 = vset.pattern.permute.xlu0 0
        %1782 = vperm.xlu0 %1781, %v1768
        %v1783 = vpop.permute.xlu0 %1782
        %1786 = vset.pattern.permute.xlu0 0
        %1787 = vperm.xlu0 %1786, %v1769
        %v1788 = vpop.permute.xlu0 %1787
        %1791 = vset.pattern.permute.xlu0 0
        %1792 = vperm.xlu0 %1791, %v1770
        %v1793 = vpop.permute.xlu0 %1792
        %1796 = vset.pattern.permute.xlu0 0
        %1797 = vperm.xlu0 %1796, %v1771
        %v1798 = vpop.permute.xlu0 %1797
        %1801 = vset.pattern.permute.xlu0 0
        %1802 = vperm.xlu0 %1801, %v1772
        %v1803 = vpop.permute.xlu0 %1802
        %1806 = vset.pattern.permute.xlu0 0
        %1807 = vperm.xlu0 %1806, %v1773
        %v1808 = vpop.permute.xlu0 %1807
        %1811 = vset.pattern.permute.xlu0 0
        %1812 = vperm.xlu0 %1811, %v1774
        %v1813 = vpop.permute.xlu0 %1812
        %v1815 = vadd.f32 %v1510, %v1778
        %v1816 = vadd.f32 %v1512, %v1778
        %v1817 = vadd.f32 %v1583, %v1778
        %v1818 = vadd.f32 %v1585, %v1778
        %v1819 = vadd.f32 %v1656, %v1778
        %v1820 = vadd.f32 %v1658, %v1778
        %v1821 = vadd.f32 %v1729, %v1778
        %v1822 = vadd.f32 %v1731, %v1778
        %v1823 = vadd.f32 %v1514, %v1783
        %v1824 = vadd.f32 %v1516, %v1783
        %v1825 = vadd.f32 %v1587, %v1783
        %v1826 = vadd.f32 %v1589, %v1783
        %v1827 = vadd.f32 %v1660, %v1783
        %v1828 = vadd.f32 %v1662, %v1783
        %v1829 = vadd.f32 %v1733, %v1783
        %v1830 = vadd.f32 %v1735, %v1783
        %v1831 = vadd.f32 %v1520, %v1788
        %v1832 = vadd.f32 %v1522, %v1788
        %v1833 = vadd.f32 %v1593, %v1788
        %v1834 = vadd.f32 %v1595, %v1788
        %v1835 = vadd.f32 %v1666, %v1788
        %v1836 = vadd.f32 %v1668, %v1788
        %v1837 = vadd.f32 %v1739, %v1788
        %v1838 = vadd.f32 %v1741, %v1788
        %v1839 = vadd.f32 %v1524, %v1793
        %v1840 = vadd.f32 %v1526, %v1793
        %v1841 = vadd.f32 %v1597, %v1793
        %v1842 = vadd.f32 %v1599, %v1793
        %v1843 = vadd.f32 %v1670, %v1793
        %v1844 = vadd.f32 %v1672, %v1793
        %v1845 = vadd.f32 %v1743, %v1793
        %v1846 = vadd.f32 %v1745, %v1793
        %v1847 = vadd.f32 %v1530, %v1798
        %v1848 = vadd.f32 %v1532, %v1798
        %v1849 = vadd.f32 %v1603, %v1798
        %v1850 = vadd.f32 %v1605, %v1798
        %v1851 = vadd.f32 %v1676, %v1798
        %v1852 = vadd.f32 %v1678, %v1798
        %v1853 = vadd.f32 %v1749, %v1798
        %v1854 = vadd.f32 %v1751, %v1798
        %v1855 = vadd.f32 %v1534, %v1803
        %v1856 = vadd.f32 %v1536, %v1803
        %v1857 = vadd.f32 %v1607, %v1803
        %v1858 = vadd.f32 %v1609, %v1803
        %v1859 = vadd.f32 %v1680, %v1803
        %v1860 = vadd.f32 %v1682, %v1803
        %v1861 = vadd.f32 %v1753, %v1803
        %v1862 = vadd.f32 %v1755, %v1803
        %v1863 = vadd.f32 %v1540, %v1808
        %v1864 = vadd.f32 %v1542, %v1808
        %v1865 = vadd.f32 %v1613, %v1808
        %v1866 = vadd.f32 %v1615, %v1808
        %v1867 = vadd.f32 %v1686, %v1808
        %v1868 = vadd.f32 %v1688, %v1808
        %v1869 = vadd.f32 %v1759, %v1808
        %v1870 = vadd.f32 %v1761, %v1808
        %v1871 = vadd.f32 %v1544, %v1813
        %v1872 = vadd.f32 %v1546, %v1813
        %v1873 = vadd.f32 %v1617, %v1813
        %v1874 = vadd.f32 %v1619, %v1813
        %v1875 = vadd.f32 %v1690, %v1813
        %v1876 = vadd.f32 %v1692, %v1813
        %v1877 = vadd.f32 %v1763, %v1813
        %v1878 = vadd.f32 %v1765, %v1813
        %v1879 = vmax.f32 %v1815, 0.0
        %v1880 = vmax.f32 %v1816, 0.0
        %v1881 = vmax.f32 %v1817, 0.0
        %v1882 = vmax.f32 %v1818, 0.0
        %v1883 = vmax.f32 %v1819, 0.0
        %v1884 = vmax.f32 %v1820, 0.0
        %v1885 = vmax.f32 %v1821, 0.0
        %v1886 = vmax.f32 %v1822, 0.0
        %v1887 = vmax.f32 %v1823, 0.0
        %v1888 = vmax.f32 %v1824, 0.0
        %v1889 = vmax.f32 %v1825, 0.0
        %v1890 = vmax.f32 %v1826, 0.0
        %v1891 = vmax.f32 %v1827, 0.0
        %v1892 = vmax.f32 %v1828, 0.0
        %v1893 = vmax.f32 %v1829, 0.0
        %v1894 = vmax.f32 %v1830, 0.0
        %v1895 = vmax.f32 %v1831, 0.0
        %v1896 = vmax.f32 %v1832, 0.0
        %v1897 = vmax.f32 %v1833, 0.0
        %v1898 = vmax.f32 %v1834, 0.0
        %v1899 = vmax.f32 %v1835, 0.0
        %v1900 = vmax.f32 %v1836, 0.0
        %v1901 = vmax.f32 %v1837, 0.0
        %v1902 = vmax.f32 %v1838, 0.0
        %v1903 = vmax.f32 %v1839, 0.0
        %v1904 = vmax.f32 %v1840, 0.0
        %v1905 = vmax.f32 %v1841, 0.0
        %v1906 = vmax.f32 %v1842, 0.0
        %v1907 = vmax.f32 %v1843, 0.0
        %v1908 = vmax.f32 %v1844, 0.0
        %v1909 = vmax.f32 %v1845, 0.0
        %v1910 = vmax.f32 %v1846, 0.0
        %v1911 = vmax.f32 %v1847, 0.0
        %v1912 = vmax.f32 %v1848, 0.0
        %v1913 = vmax.f32 %v1849, 0.0
        %v1914 = vmax.f32 %v1850, 0.0
        %v1915 = vmax.f32 %v1851, 0.0
        %v1916 = vmax.f32 %v1852, 0.0
        %v1917 = vmax.f32 %v1853, 0.0
        %v1918 = vmax.f32 %v1854, 0.0
        %v1919 = vmax.f32 %v1855, 0.0
        %v1920 = vmax.f32 %v1856, 0.0
        %v1921 = vmax.f32 %v1857, 0.0
        %v1922 = vmax.f32 %v1858, 0.0
        %v1923 = vmax.f32 %v1859, 0.0
        %v1924 = vmax.f32 %v1860, 0.0
        %v1925 = vmax.f32 %v1861, 0.0
        %v1926 = vmax.f32 %v1862, 0.0
        %v1927 = vmax.f32 %v1863, 0.0
        %v1928 = vmax.f32 %v1864, 0.0
        %v1929 = vmax.f32 %v1865, 0.0
        %v1930 = vmax.f32 %v1866, 0.0
        %v1931 = vmax.f32 %v1867, 0.0
        %v1932 = vmax.f32 %v1868, 0.0
        %v1933 = vmax.f32 %v1869, 0.0
        %v1934 = vmax.f32 %v1870, 0.0
        %v1935 = vmax.f32 %v1871, 0.0
        %v1936 = vmax.f32 %v1872, 0.0
        %v1937 = vmax.f32 %v1873, 0.0
        %v1938 = vmax.f32 %v1874, 0.0
        %v1939 = vmax.f32 %v1875, 0.0
        %v1940 = vmax.f32 %v1876, 0.0
        %v1941 = vmax.f32 %v1877, 0.0
        %v1942 = vmax.f32 %v1878, 0.0
        %v1943 = vpack.c.bf16 %v1887, %v1879
        %v1944 = vpack.c.bf16 %v1888, %v1880
        %v1945 = vpack.c.bf16 %v1889, %v1881
        %v1946 = vpack.c.bf16 %v1890, %v1882
        %v1947 = vpack.c.bf16 %v1891, %v1883
        %v1948 = vpack.c.bf16 %v1892, %v1884
        %v1949 = vpack.c.bf16 %v1893, %v1885
        %v1950 = vpack.c.bf16 %v1894, %v1886
        %v1951 = vpack.c.bf16 %v1903, %v1895
        %v1952 = vpack.c.bf16 %v1904, %v1896
        %v1953 = vpack.c.bf16 %v1905, %v1897
        %v1954 = vpack.c.bf16 %v1906, %v1898
        %v1955 = vpack.c.bf16 %v1907, %v1899
        %v1956 = vpack.c.bf16 %v1908, %v1900
        %v1957 = vpack.c.bf16 %v1909, %v1901
        %v1958 = vpack.c.bf16 %v1910, %v1902
        %v1959 = vpack.c.bf16 %v1919, %v1911
        %v1960 = vpack.c.bf16 %v1920, %v1912
        %v1961 = vpack.c.bf16 %v1921, %v1913
        %v1962 = vpack.c.bf16 %v1922, %v1914
        %v1963 = vpack.c.bf16 %v1923, %v1915
        %v1964 = vpack.c.bf16 %v1924, %v1916
        %v1965 = vpack.c.bf16 %v1925, %v1917
        %v1966 = vpack.c.bf16 %v1926, %v1918
        %v1967 = vpack.c.bf16 %v1935, %v1927
        %v1968 = vpack.c.bf16 %v1936, %v1928
        %v1969 = vpack.c.bf16 %v1937, %v1929
        %v1970 = vpack.c.bf16 %v1938, %v1930
        %v1971 = vpack.c.bf16 %v1939, %v1931
        %v1972 = vpack.c.bf16 %v1940, %v1932
        %v1973 = vpack.c.bf16 %v1941, %v1933
        %v1974 = vpack.c.bf16 %v1942, %v1934
        %v1975 = vld [vmem:[%s7] sm:$0xf]
        %v1976 = vld [vmem:[%s7 + $0x4] sm:$0xf]
        %v1977 = vld [vmem:[%s7 + $0x8] sm:$0xf]
        %v1978 = vld [vmem:[%s7 + $0xc] sm:$0xf]
        %v1979 = vld [vmem:[%s7 + $0x10] sm:$0xf]
        %v1980 = vld [vmem:[%s7 + $0x14] sm:$0xf]
        %v1981 = vld [vmem:[%s7 + $0x18] sm:$0xf]
        %v1982 = vld [vmem:[%s7 + $0x1c] sm:$0xf]
        %v1983 = vld [vmem:[%s8] sm:$0xff]
        %v1984 = vld [vmem:[%s8 + $0x8] sm:$0xff]
        %v1985 = vld [vmem:[%s8 + $0x10] sm:$0xff]
        %v1986 = vld [vmem:[%s8 + $0x18] sm:$0xff]
        %v1987 = vld [vmem:[%s8 + $0x20] sm:$0xff]
        %v1988 = vld [vmem:[%s8 + $0x28] sm:$0xff]
        %v1989 = vld [vmem:[%s8 + $0x30] sm:$0xff]
        %v1990 = vld [vmem:[%s8 + $0x38] sm:$0xff]
        %1992 = vset.pattern.permute.xlu0 0
        %1993 = vperm.xlu0 %1992, %v1983
        %v1994 = vpop.permute.xlu0 %1993
        %1997 = vset.pattern.permute.xlu0 0
        %1998 = vperm.xlu0 %1997, %v1984
        %v1999 = vpop.permute.xlu0 %1998
        %2002 = vset.pattern.permute.xlu0 0
        %2003 = vperm.xlu0 %2002, %v1985
        %v2004 = vpop.permute.xlu0 %2003
        %2007 = vset.pattern.permute.xlu0 0
        %2008 = vperm.xlu0 %2007, %v1986
        %v2009 = vpop.permute.xlu0 %2008
        %2012 = vset.pattern.permute.xlu0 0
        %2013 = vperm.xlu0 %2012, %v1987
        %v2014 = vpop.permute.xlu0 %2013
        %2017 = vset.pattern.permute.xlu0 0
        %2018 = vperm.xlu0 %2017, %v1988
        %v2019 = vpop.permute.xlu0 %2018
        %2022 = vset.pattern.permute.xlu0 0
        %2023 = vperm.xlu0 %2022, %v1989
        %v2024 = vpop.permute.xlu0 %2023
        %2027 = vset.pattern.permute.xlu0 0
        %2028 = vperm.xlu0 %2027, %v1990
        %v2029 = vpop.permute.xlu0 %2028
        %v2039 = vunpack.c.l.b16 %v1975
        %v2040 = vunpack.c.l.b16 %v1976
        %v2041 = vunpack.c.l.b16 %v1977
        %v2042 = vunpack.c.l.b16 %v1978
        %v2043 = vunpack.c.l.b16 %v1979
        %v2044 = vunpack.c.l.b16 %v1980
        %v2045 = vunpack.c.l.b16 %v1981
        %v2046 = vunpack.c.l.b16 %v1982
        %v2047 = vpack.c.b16 %v2040, %v2039
        %v2048 = vpack.c.b16 %v2042, %v2041
        %v2049 = vpack.c.b16 %v2044, %v2043
        %v2050 = vpack.c.b16 %v2046, %v2045
        %vm2051 = vcmask 523264
        %v2053 = vsel %vm2051, %v2047, 0
        %v2056 = vsel %vm2051, %v2048, 0
        %v2059 = vsel %vm2051, %v2049, 0
        %v2062 = vsel %vm2051, %v2050, 0
        %2064 = vmatprep.subr.bf16.mxu0 0
        %2065 = vmatpush1.bf16.msra.mxu0 0
        %2066 = vmatprep.subr.bf16.mxu0 0
        %2067 = vmatpush1.bf16.msra.mxu0 0
        %2068 = vmatprep.subr.bf16.mxu0 0
        %2069 = vmatpush1.bf16.msra.mxu0 0
        %2070 = vmatprep.subr.bf16.mxu0 0
        %2071 = vmatpush1.bf16.msra.mxu0 0
        %2072 = vmatprep.subr.bf16.mxu0 %v1968
        %2073 = vmatpush1.bf16.msra.mxu0 %v1967
        %2074 = vmatprep.subr.bf16.mxu0 %v1960
        %2075 = vmatpush1.bf16.msra.mxu0 %v1959
        %2076 = vmatprep.subr.bf16.mxu0 %v1952
        %2077 = vmatpush1.bf16.msra.mxu0 %v1951
        %2078 = vmatprep.subr.bf16.mxu0 %v1944
        %2079 = vmatpush1.bf16.msra.mxu0 %v1943
        %2080 = vmatprep.subr.bf16.mxu0 0
        %2081 = vmatpush2.bf16.msra.mxu0 0
        %2082 = vmatprep.subr.bf16.mxu0 0
        %2083 = vmatpush2.bf16.msra.mxu0 0
        %2084 = vmatprep.subr.bf16.mxu0 0
        %2085 = vmatpush2.bf16.msra.mxu0 0
        %2086 = vmatprep.subr.bf16.mxu0 0
        %2087 = vmatpush2.bf16.msra.mxu0 0
        %2088 = vmatprep.subr.bf16.mxu0 0
        %2089 = vmatpush2.bf16.msra.mxu0 0
        %2090 = vmatprep.subr.bf16.mxu0 0
        %2091 = vmatpush2.bf16.msra.mxu0 0
        %2092 = vmatprep.subr.bf16.mxu0 0
        %2093 = vmatpush2.bf16.msra.mxu0 0
        %2094 = vmatprep.subr.bf16.mxu0 0
        %2095 = vmatpush2.bf16.msra.mxu0 0
        %2096 = vmatprep.mubr.bf16.mxu0 0
        %2097 = vmatmul.mubr.bf16.gmra.mxu0 %v2053
        %v2098 = vpop.f32.mrf.mxu0
        %v2099 = vadd.f32 %v1994, %v2098
        %v2100 = vpop.f32.mrf.mxu0
        %v2101 = vadd.f32 %v1994, %v2100
        %v2102 = vpop.f32.mrf.mxu0
        %v2103 = vadd.f32 %v1999, %v2102
        %v2104 = vpop.f32.mrf.mxu0
        %v2105 = vadd.f32 %v1999, %v2104
        %2106 = vmatprep.mubr.bf16.mxu0 0
        %2107 = vmatmul.mubr.bf16.gmra.mxu0 %v2056
        %v2108 = vpop.f32.mrf.mxu0
        %v2109 = vadd.f32 %v2004, %v2108
        %v2110 = vpop.f32.mrf.mxu0
        %v2111 = vadd.f32 %v2004, %v2110
        %v2112 = vpop.f32.mrf.mxu0
        %v2113 = vadd.f32 %v2009, %v2112
        %v2114 = vpop.f32.mrf.mxu0
        %v2115 = vadd.f32 %v2009, %v2114
        %2116 = vmatprep.mubr.bf16.mxu0 0
        %2117 = vmatmul.mubr.bf16.gmra.mxu0 %v2059
        %v2118 = vpop.f32.mrf.mxu0
        %v2119 = vadd.f32 %v2014, %v2118
        %v2120 = vpop.f32.mrf.mxu0
        %v2121 = vadd.f32 %v2014, %v2120
        %v2122 = vpop.f32.mrf.mxu0
        %v2123 = vadd.f32 %v2019, %v2122
        %v2124 = vpop.f32.mrf.mxu0
        %v2125 = vadd.f32 %v2019, %v2124
        %2126 = vmatprep.mubr.bf16.mxu0 0
        %2127 = vmatmul.mubr.bf16.gmra.mxu0 %v2062
        %v2128 = vpop.f32.mrf.mxu0
        %v2129 = vadd.f32 %v2024, %v2128
        %v2130 = vpop.f32.mrf.mxu0
        %v2131 = vadd.f32 %v2024, %v2130
        %v2132 = vpop.f32.mrf.mxu0
        %v2133 = vadd.f32 %v2029, %v2132
        %v2134 = vpop.f32.mrf.mxu0
        %v2135 = vadd.f32 %v2029, %v2134
        %2136 = vdwg.mxu0
        %2137 = vmatprep.subr.bf16.mxu0 0
        %2138 = vmatpush1.bf16.msra.mxu0 0
        %2139 = vmatprep.subr.bf16.mxu0 0
        %2140 = vmatpush1.bf16.msra.mxu0 0
        %2141 = vmatprep.subr.bf16.mxu0 0
        %2142 = vmatpush1.bf16.msra.mxu0 0
        %2143 = vmatprep.subr.bf16.mxu0 0
        %2144 = vmatpush1.bf16.msra.mxu0 0
        %2145 = vmatprep.subr.bf16.mxu0 %v1970
        %2146 = vmatpush1.bf16.msra.mxu0 %v1969
        %2147 = vmatprep.subr.bf16.mxu0 %v1962
        %2148 = vmatpush1.bf16.msra.mxu0 %v1961
        %2149 = vmatprep.subr.bf16.mxu0 %v1954
        %2150 = vmatpush1.bf16.msra.mxu0 %v1953
        %2151 = vmatprep.subr.bf16.mxu0 %v1946
        %2152 = vmatpush1.bf16.msra.mxu0 %v1945
        %2153 = vmatprep.subr.bf16.mxu0 0
        %2154 = vmatpush2.bf16.msra.mxu0 0
        %2155 = vmatprep.subr.bf16.mxu0 0
        %2156 = vmatpush2.bf16.msra.mxu0 0
        %2157 = vmatprep.subr.bf16.mxu0 0
        %2158 = vmatpush2.bf16.msra.mxu0 0
        %2159 = vmatprep.subr.bf16.mxu0 0
        %2160 = vmatpush2.bf16.msra.mxu0 0
        %2161 = vmatprep.subr.bf16.mxu0 0
        %2162 = vmatpush2.bf16.msra.mxu0 0
        %2163 = vmatprep.subr.bf16.mxu0 0
        %2164 = vmatpush2.bf16.msra.mxu0 0
        %2165 = vmatprep.subr.bf16.mxu0 0
        %2166 = vmatpush2.bf16.msra.mxu0 0
        %2167 = vmatprep.subr.bf16.mxu0 0
        %2168 = vmatpush2.bf16.msra.mxu0 0
        %2169 = vmatprep.mubr.bf16.mxu0 0
        %2170 = vmatmul.mubr.bf16.gmra.mxu0 %v2053
        %v2171 = vpop.f32.mrf.mxu0
        %v2172 = vadd.f32 %v1994, %v2171
        %v2173 = vpop.f32.mrf.mxu0
        %v2174 = vadd.f32 %v1994, %v2173
        %v2175 = vpop.f32.mrf.mxu0
        %v2176 = vadd.f32 %v1999, %v2175
        %v2177 = vpop.f32.mrf.mxu0
        %v2178 = vadd.f32 %v1999, %v2177
        %2179 = vmatprep.mubr.bf16.mxu0 0
        %2180 = vmatmul.mubr.bf16.gmra.mxu0 %v2056
        %v2181 = vpop.f32.mrf.mxu0
        %v2182 = vadd.f32 %v2004, %v2181
        %v2183 = vpop.f32.mrf.mxu0
        %v2184 = vadd.f32 %v2004, %v2183
        %v2185 = vpop.f32.mrf.mxu0
        %v2186 = vadd.f32 %v2009, %v2185
        %v2187 = vpop.f32.mrf.mxu0
        %v2188 = vadd.f32 %v2009, %v2187
        %2189 = vmatprep.mubr.bf16.mxu0 0
        %2190 = vmatmul.mubr.bf16.gmra.mxu0 %v2059
        %v2191 = vpop.f32.mrf.mxu0
        %v2192 = vadd.f32 %v2014, %v2191
        %v2193 = vpop.f32.mrf.mxu0
        %v2194 = vadd.f32 %v2014, %v2193
        %v2195 = vpop.f32.mrf.mxu0
        %v2196 = vadd.f32 %v2019, %v2195
        %v2197 = vpop.f32.mrf.mxu0
        %v2198 = vadd.f32 %v2019, %v2197
        %2199 = vmatprep.mubr.bf16.mxu0 0
        %2200 = vmatmul.mubr.bf16.gmra.mxu0 %v2062
        %v2201 = vpop.f32.mrf.mxu0
        %v2202 = vadd.f32 %v2024, %v2201
        %v2203 = vpop.f32.mrf.mxu0
        %v2204 = vadd.f32 %v2024, %v2203
        %v2205 = vpop.f32.mrf.mxu0
        %v2206 = vadd.f32 %v2029, %v2205
        %v2207 = vpop.f32.mrf.mxu0
        %v2208 = vadd.f32 %v2029, %v2207
        %2209 = vdwg.mxu0
        %2210 = vmatprep.subr.bf16.mxu0 0
        %2211 = vmatpush1.bf16.msra.mxu0 0
        %2212 = vmatprep.subr.bf16.mxu0 0
        %2213 = vmatpush1.bf16.msra.mxu0 0
        %2214 = vmatprep.subr.bf16.mxu0 0
        %2215 = vmatpush1.bf16.msra.mxu0 0
        %2216 = vmatprep.subr.bf16.mxu0 0
        %2217 = vmatpush1.bf16.msra.mxu0 0
        %2218 = vmatprep.subr.bf16.mxu0 %v1972
        %2219 = vmatpush1.bf16.msra.mxu0 %v1971
        %2220 = vmatprep.subr.bf16.mxu0 %v1964
        %2221 = vmatpush1.bf16.msra.mxu0 %v1963
        %2222 = vmatprep.subr.bf16.mxu0 %v1956
        %2223 = vmatpush1.bf16.msra.mxu0 %v1955
        %2224 = vmatprep.subr.bf16.mxu0 %v1948
        %2225 = vmatpush1.bf16.msra.mxu0 %v1947
        %2226 = vmatprep.subr.bf16.mxu0 0
        %2227 = vmatpush2.bf16.msra.mxu0 0
        %2228 = vmatprep.subr.bf16.mxu0 0
        %2229 = vmatpush2.bf16.msra.mxu0 0
        %2230 = vmatprep.subr.bf16.mxu0 0
        %2231 = vmatpush2.bf16.msra.mxu0 0
        %2232 = vmatprep.subr.bf16.mxu0 0
        %2233 = vmatpush2.bf16.msra.mxu0 0
        %2234 = vmatprep.subr.bf16.mxu0 0
        %2235 = vmatpush2.bf16.msra.mxu0 0
        %2236 = vmatprep.subr.bf16.mxu0 0
        %2237 = vmatpush2.bf16.msra.mxu0 0
        %2238 = vmatprep.subr.bf16.mxu0 0
        %2239 = vmatpush2.bf16.msra.mxu0 0
        %2240 = vmatprep.subr.bf16.mxu0 0
        %2241 = vmatpush2.bf16.msra.mxu0 0
        %2242 = vmatprep.mubr.bf16.mxu0 0
        %2243 = vmatmul.mubr.bf16.gmra.mxu0 %v2053
        %v2244 = vpop.f32.mrf.mxu0
        %v2245 = vadd.f32 %v1994, %v2244
        %v2246 = vpop.f32.mrf.mxu0
        %v2247 = vadd.f32 %v1994, %v2246
        %v2248 = vpop.f32.mrf.mxu0
        %v2249 = vadd.f32 %v1999, %v2248
        %v2250 = vpop.f32.mrf.mxu0
        %v2251 = vadd.f32 %v1999, %v2250
        %2252 = vmatprep.mubr.bf16.mxu0 0
        %2253 = vmatmul.mubr.bf16.gmra.mxu0 %v2056
        %v2254 = vpop.f32.mrf.mxu0
        %v2255 = vadd.f32 %v2004, %v2254
        %v2256 = vpop.f32.mrf.mxu0
        %v2257 = vadd.f32 %v2004, %v2256
        %v2258 = vpop.f32.mrf.mxu0
        %v2259 = vadd.f32 %v2009, %v2258
        %v2260 = vpop.f32.mrf.mxu0
        %v2261 = vadd.f32 %v2009, %v2260
        %2262 = vmatprep.mubr.bf16.mxu0 0
        %2263 = vmatmul.mubr.bf16.gmra.mxu0 %v2059
        %v2264 = vpop.f32.mrf.mxu0
        %v2265 = vadd.f32 %v2014, %v2264
        %v2266 = vpop.f32.mrf.mxu0
        %v2267 = vadd.f32 %v2014, %v2266
        %v2268 = vpop.f32.mrf.mxu0
        %v2269 = vadd.f32 %v2019, %v2268
        %v2270 = vpop.f32.mrf.mxu0
        %v2271 = vadd.f32 %v2019, %v2270
        %2272 = vmatprep.mubr.bf16.mxu0 0
        %2273 = vmatmul.mubr.bf16.gmra.mxu0 %v2062
        %v2274 = vpop.f32.mrf.mxu0
        %v2275 = vadd.f32 %v2024, %v2274
        %v2276 = vpop.f32.mrf.mxu0
        %v2277 = vadd.f32 %v2024, %v2276
        %v2278 = vpop.f32.mrf.mxu0
        %v2279 = vadd.f32 %v2029, %v2278
        %v2280 = vpop.f32.mrf.mxu0
        %v2281 = vadd.f32 %v2029, %v2280
        %2282 = vdwg.mxu0
        %2283 = vmatprep.subr.bf16.mxu0 0
        %2284 = vmatpush1.bf16.msra.mxu0 0
        %2285 = vmatprep.subr.bf16.mxu0 0
        %2286 = vmatpush1.bf16.msra.mxu0 0
        %2287 = vmatprep.subr.bf16.mxu0 0
        %2288 = vmatpush1.bf16.msra.mxu0 0
        %2289 = vmatprep.subr.bf16.mxu0 0
        %2290 = vmatpush1.bf16.msra.mxu0 0
        %2291 = vmatprep.subr.bf16.mxu0 %v1974
        %2292 = vmatpush1.bf16.msra.mxu0 %v1973
        %2293 = vmatprep.subr.bf16.mxu0 %v1966
        %2294 = vmatpush1.bf16.msra.mxu0 %v1965
        %2295 = vmatprep.subr.bf16.mxu0 %v1958
        %2296 = vmatpush1.bf16.msra.mxu0 %v1957
        %2297 = vmatprep.subr.bf16.mxu0 %v1950
        %2298 = vmatpush1.bf16.msra.mxu0 %v1949
        %2299 = vmatprep.subr.bf16.mxu0 0
        %2300 = vmatpush2.bf16.msra.mxu0 0
        %2301 = vmatprep.subr.bf16.mxu0 0
        %2302 = vmatpush2.bf16.msra.mxu0 0
        %2303 = vmatprep.subr.bf16.mxu0 0
        %2304 = vmatpush2.bf16.msra.mxu0 0
        %2305 = vmatprep.subr.bf16.mxu0 0
        %2306 = vmatpush2.bf16.msra.mxu0 0
        %2307 = vmatprep.subr.bf16.mxu0 0
        %2308 = vmatpush2.bf16.msra.mxu0 0
        %2309 = vmatprep.subr.bf16.mxu0 0
        %2310 = vmatpush2.bf16.msra.mxu0 0
        %2311 = vmatprep.subr.bf16.mxu0 0
        %2312 = vmatpush2.bf16.msra.mxu0 0
        %2313 = vmatprep.subr.bf16.mxu0 0
        %2314 = vmatpush2.bf16.msra.mxu0 0
        %2315 = vmatprep.mubr.bf16.mxu0 0
        %2316 = vmatmul.mubr.bf16.gmra.mxu0 %v2053
        %v2317 = vpop.f32.mrf.mxu0
        %v2318 = vadd.f32 %v1994, %v2317
        %v2319 = vpop.f32.mrf.mxu0
        %v2320 = vadd.f32 %v1994, %v2319
        %v2321 = vpop.f32.mrf.mxu0
        %v2322 = vadd.f32 %v1999, %v2321
        %v2323 = vpop.f32.mrf.mxu0
        %v2324 = vadd.f32 %v1999, %v2323
        %2325 = vmatprep.mubr.bf16.mxu0 0
        %2326 = vmatmul.mubr.bf16.gmra.mxu0 %v2056
        %v2327 = vpop.f32.mrf.mxu0
        %v2328 = vadd.f32 %v2004, %v2327
        %v2329 = vpop.f32.mrf.mxu0
        %v2330 = vadd.f32 %v2004, %v2329
        %v2331 = vpop.f32.mrf.mxu0
        %v2332 = vadd.f32 %v2009, %v2331
        %v2333 = vpop.f32.mrf.mxu0
        %v2334 = vadd.f32 %v2009, %v2333
        %2335 = vmatprep.mubr.bf16.mxu0 0
        %2336 = vmatmul.mubr.bf16.gmra.mxu0 %v2059
        %v2337 = vpop.f32.mrf.mxu0
        %v2338 = vadd.f32 %v2014, %v2337
        %v2339 = vpop.f32.mrf.mxu0
        %v2340 = vadd.f32 %v2014, %v2339
        %v2341 = vpop.f32.mrf.mxu0
        %v2342 = vadd.f32 %v2019, %v2341
        %v2343 = vpop.f32.mrf.mxu0
        %v2344 = vadd.f32 %v2019, %v2343
        %2345 = vmatprep.mubr.bf16.mxu0 0
        %2346 = vmatmul.mubr.bf16.gmra.mxu0 %v2062
        %v2347 = vpop.f32.mrf.mxu0
        %v2348 = vadd.f32 %v2024, %v2347
        %v2349 = vpop.f32.mrf.mxu0
        %v2350 = vadd.f32 %v2024, %v2349
        %v2351 = vpop.f32.mrf.mxu0
        %v2352 = vadd.f32 %v2029, %v2351
        %v2353 = vpop.f32.mrf.mxu0
        %v2354 = vadd.f32 %v2029, %v2353
        %2355 = vdwg.mxu0
        %v2356 = vmax.f32 %v2099, 0.0
        %v2357 = vmax.f32 %v2101, 0.0
        %v2358 = vmax.f32 %v2172, 0.0
        %v2359 = vmax.f32 %v2174, 0.0
        %v2360 = vmax.f32 %v2245, 0.0
        %v2361 = vmax.f32 %v2247, 0.0
        %v2362 = vmax.f32 %v2318, 0.0
        %v2363 = vmax.f32 %v2320, 0.0
        %v2364 = vmax.f32 %v2103, 0.0
        %v2365 = vmax.f32 %v2105, 0.0
        %v2366 = vmax.f32 %v2176, 0.0
        %v2367 = vmax.f32 %v2178, 0.0
        %v2368 = vmax.f32 %v2249, 0.0
        %v2369 = vmax.f32 %v2251, 0.0
        %v2370 = vmax.f32 %v2322, 0.0
        %v2371 = vmax.f32 %v2324, 0.0
        %v2372 = vmax.f32 %v2109, 0.0
        %v2373 = vmax.f32 %v2111, 0.0
        %v2374 = vmax.f32 %v2182, 0.0
        %v2375 = vmax.f32 %v2184, 0.0
        %v2376 = vmax.f32 %v2255, 0.0
        %v2377 = vmax.f32 %v2257, 0.0
        %v2378 = vmax.f32 %v2328, 0.0
        %v2379 = vmax.f32 %v2330, 0.0
        %v2380 = vmax.f32 %v2113, 0.0
        %v2381 = vmax.f32 %v2115, 0.0
        %v2382 = vmax.f32 %v2186, 0.0
        %v2383 = vmax.f32 %v2188, 0.0
        %v2384 = vmax.f32 %v2259, 0.0
        %v2385 = vmax.f32 %v2261, 0.0
        %v2386 = vmax.f32 %v2332, 0.0
        %v2387 = vmax.f32 %v2334, 0.0
        %v2388 = vmax.f32 %v2119, 0.0
        %v2389 = vmax.f32 %v2121, 0.0
        %v2390 = vmax.f32 %v2192, 0.0
        %v2391 = vmax.f32 %v2194, 0.0
        %v2392 = vmax.f32 %v2265, 0.0
        %v2393 = vmax.f32 %v2267, 0.0
        %v2394 = vmax.f32 %v2338, 0.0
        %v2395 = vmax.f32 %v2340, 0.0
        %v2396 = vmax.f32 %v2123, 0.0
        %v2397 = vmax.f32 %v2125, 0.0
        %v2398 = vmax.f32 %v2196, 0.0
        %v2399 = vmax.f32 %v2198, 0.0
        %v2400 = vmax.f32 %v2269, 0.0
        %v2401 = vmax.f32 %v2271, 0.0
        %v2402 = vmax.f32 %v2342, 0.0
        %v2403 = vmax.f32 %v2344, 0.0
        %v2404 = vmax.f32 %v2129, 0.0
        %v2405 = vmax.f32 %v2131, 0.0
        %v2406 = vmax.f32 %v2202, 0.0
        %v2407 = vmax.f32 %v2204, 0.0
        %v2408 = vmax.f32 %v2275, 0.0
        %v2409 = vmax.f32 %v2277, 0.0
        %v2410 = vmax.f32 %v2348, 0.0
        %v2411 = vmax.f32 %v2350, 0.0
        %v2412 = vmax.f32 %v2133, 0.0
        %v2413 = vmax.f32 %v2135, 0.0
        %v2414 = vmax.f32 %v2206, 0.0
        %v2415 = vmax.f32 %v2208, 0.0
        %v2416 = vmax.f32 %v2279, 0.0
        %v2417 = vmax.f32 %v2281, 0.0
        %v2418 = vmax.f32 %v2352, 0.0
        %v2419 = vmax.f32 %v2354, 0.0
        %v2420 = vpack.c.bf16 %v2364, %v2356
        %v2421 = vpack.c.bf16 %v2365, %v2357
        %v2422 = vpack.c.bf16 %v2366, %v2358
        %v2423 = vpack.c.bf16 %v2367, %v2359
        %v2424 = vpack.c.bf16 %v2368, %v2360
        %v2425 = vpack.c.bf16 %v2369, %v2361
        %v2426 = vpack.c.bf16 %v2370, %v2362
        %v2427 = vpack.c.bf16 %v2371, %v2363
        %v2428 = vpack.c.bf16 %v2380, %v2372
        %v2429 = vpack.c.bf16 %v2381, %v2373
        %v2430 = vpack.c.bf16 %v2382, %v2374
        %v2431 = vpack.c.bf16 %v2383, %v2375
        %v2432 = vpack.c.bf16 %v2384, %v2376
        %v2433 = vpack.c.bf16 %v2385, %v2377
        %v2434 = vpack.c.bf16 %v2386, %v2378
        %v2435 = vpack.c.bf16 %v2387, %v2379
        %v2436 = vpack.c.bf16 %v2396, %v2388
        %v2437 = vpack.c.bf16 %v2397, %v2389
        %v2438 = vpack.c.bf16 %v2398, %v2390
        %v2439 = vpack.c.bf16 %v2399, %v2391
        %v2440 = vpack.c.bf16 %v2400, %v2392
        %v2441 = vpack.c.bf16 %v2401, %v2393
        %v2442 = vpack.c.bf16 %v2402, %v2394
        %v2443 = vpack.c.bf16 %v2403, %v2395
        %v2444 = vpack.c.bf16 %v2412, %v2404
        %v2445 = vpack.c.bf16 %v2413, %v2405
        %v2446 = vpack.c.bf16 %v2414, %v2406
        %v2447 = vpack.c.bf16 %v2415, %v2407
        %v2448 = vpack.c.bf16 %v2416, %v2408
        %v2449 = vpack.c.bf16 %v2417, %v2409
        %v2450 = vpack.c.bf16 %v2418, %v2410
        %v2451 = vpack.c.bf16 %v2419, %v2411
        %v2452 = vld [vmem:[%s9] sm:$0xf]
        %v2453 = vld [vmem:[%s9 + $0x4] sm:$0xf]
        %v2454 = vld [vmem:[%s9 + $0x8] sm:$0xf]
        %v2455 = vld [vmem:[%s9 + $0xc] sm:$0xf]
        %v2456 = vld [vmem:[%s9 + $0x10] sm:$0xf]
        %v2457 = vld [vmem:[%s9 + $0x14] sm:$0xf]
        %v2458 = vld [vmem:[%s9 + $0x18] sm:$0xf]
        %v2459 = vld [vmem:[%s9 + $0x1c] sm:$0xf]
        %v2460 = vld [vmem:[%s10] sm:$0xff]
        %v2461 = vld [vmem:[%s10 + $0x8] sm:$0xff]
        %v2462 = vld [vmem:[%s10 + $0x10] sm:$0xff]
        %v2463 = vld [vmem:[%s10 + $0x18] sm:$0xff]
        %v2464 = vld [vmem:[%s10 + $0x20] sm:$0xff]
        %v2465 = vld [vmem:[%s10 + $0x28] sm:$0xff]
        %v2466 = vld [vmem:[%s10 + $0x30] sm:$0xff]
        %v2467 = vld [vmem:[%s10 + $0x38] sm:$0xff]
        %2469 = vset.pattern.permute.xlu0 0
        %2470 = vperm.xlu0 %2469, %v2460
        %v2471 = vpop.permute.xlu0 %2470
        %2474 = vset.pattern.permute.xlu0 0
        %2475 = vperm.xlu0 %2474, %v2461
        %v2476 = vpop.permute.xlu0 %2475
        %2479 = vset.pattern.permute.xlu0 0
        %2480 = vperm.xlu0 %2479, %v2462
        %v2481 = vpop.permute.xlu0 %2480
        %2484 = vset.pattern.permute.xlu0 0
        %2485 = vperm.xlu0 %2484, %v2463
        %v2486 = vpop.permute.xlu0 %2485
        %2489 = vset.pattern.permute.xlu0 0
        %2490 = vperm.xlu0 %2489, %v2464
        %v2491 = vpop.permute.xlu0 %2490
        %2494 = vset.pattern.permute.xlu0 0
        %2495 = vperm.xlu0 %2494, %v2465
        %v2496 = vpop.permute.xlu0 %2495
        %2499 = vset.pattern.permute.xlu0 0
        %2500 = vperm.xlu0 %2499, %v2466
        %v2501 = vpop.permute.xlu0 %2500
        %2504 = vset.pattern.permute.xlu0 0
        %2505 = vperm.xlu0 %2504, %v2467
        %v2506 = vpop.permute.xlu0 %2505
        %v2516 = vunpack.c.l.b16 %v2452
        %v2517 = vunpack.c.l.b16 %v2453
        %v2518 = vunpack.c.l.b16 %v2454
        %v2519 = vunpack.c.l.b16 %v2455
        %v2520 = vunpack.c.l.b16 %v2456
        %v2521 = vunpack.c.l.b16 %v2457
        %v2522 = vunpack.c.l.b16 %v2458
        %v2523 = vunpack.c.l.b16 %v2459
        %v2524 = vpack.c.b16 %v2517, %v2516
        %v2525 = vpack.c.b16 %v2519, %v2518
        %v2526 = vpack.c.b16 %v2521, %v2520
        %v2527 = vpack.c.b16 %v2523, %v2522
        %v2529 = vsel %vm2051, %v2524, 0
        %v2532 = vsel %vm2051, %v2525, 0
        %v2535 = vsel %vm2051, %v2526, 0
        %v2538 = vsel %vm2051, %v2527, 0
        %2540 = vmatprep.subr.bf16.mxu0 0
        %2541 = vmatpush1.bf16.msra.mxu0 0
        %2542 = vmatprep.subr.bf16.mxu0 0
        %2543 = vmatpush1.bf16.msra.mxu0 0
        %2544 = vmatprep.subr.bf16.mxu0 0
        %2545 = vmatpush1.bf16.msra.mxu0 0
        %2546 = vmatprep.subr.bf16.mxu0 0
        %2547 = vmatpush1.bf16.msra.mxu0 0
        %2548 = vmatprep.subr.bf16.mxu0 %v2445
        %2549 = vmatpush1.bf16.msra.mxu0 %v2444
        %2550 = vmatprep.subr.bf16.mxu0 %v2437
        %2551 = vmatpush1.bf16.msra.mxu0 %v2436
        %2552 = vmatprep.subr.bf16.mxu0 %v2429
        %2553 = vmatpush1.bf16.msra.mxu0 %v2428
        %2554 = vmatprep.subr.bf16.mxu0 %v2421
        %2555 = vmatpush1.bf16.msra.mxu0 %v2420
        %2556 = vmatprep.subr.bf16.mxu0 0
        %2557 = vmatpush2.bf16.msra.mxu0 0
        %2558 = vmatprep.subr.bf16.mxu0 0
        %2559 = vmatpush2.bf16.msra.mxu0 0
        %2560 = vmatprep.subr.bf16.mxu0 0
        %2561 = vmatpush2.bf16.msra.mxu0 0
        %2562 = vmatprep.subr.bf16.mxu0 0
        %2563 = vmatpush2.bf16.msra.mxu0 0
        %2564 = vmatprep.subr.bf16.mxu0 0
        %2565 = vmatpush2.bf16.msra.mxu0 0
        %2566 = vmatprep.subr.bf16.mxu0 0
        %2567 = vmatpush2.bf16.msra.mxu0 0
        %2568 = vmatprep.subr.bf16.mxu0 0
        %2569 = vmatpush2.bf16.msra.mxu0 0
        %2570 = vmatprep.subr.bf16.mxu0 0
        %2571 = vmatpush2.bf16.msra.mxu0 0
        %2572 = vmatprep.mubr.bf16.mxu0 0
        %2573 = vmatmul.mubr.bf16.gmra.mxu0 %v2529
        %v2574 = vpop.f32.mrf.mxu0
        %v2575 = vadd.f32 %v2471, %v2574
        %v2576 = vpop.f32.mrf.mxu0
        %v2577 = vadd.f32 %v2471, %v2576
        %v2578 = vpop.f32.mrf.mxu0
        %v2579 = vadd.f32 %v2476, %v2578
        %v2580 = vpop.f32.mrf.mxu0
        %v2581 = vadd.f32 %v2476, %v2580
        %2582 = vmatprep.mubr.bf16.mxu0 0
        %2583 = vmatmul.mubr.bf16.gmra.mxu0 %v2532
        %v2584 = vpop.f32.mrf.mxu0
        %v2585 = vadd.f32 %v2481, %v2584
        %v2586 = vpop.f32.mrf.mxu0
        %v2587 = vadd.f32 %v2481, %v2586
        %v2588 = vpop.f32.mrf.mxu0
        %v2589 = vadd.f32 %v2486, %v2588
        %v2590 = vpop.f32.mrf.mxu0
        %v2591 = vadd.f32 %v2486, %v2590
        %2592 = vmatprep.mubr.bf16.mxu0 0
        %2593 = vmatmul.mubr.bf16.gmra.mxu0 %v2535
        %v2594 = vpop.f32.mrf.mxu0
        %v2595 = vadd.f32 %v2491, %v2594
        %v2596 = vpop.f32.mrf.mxu0
        %v2597 = vadd.f32 %v2491, %v2596
        %v2598 = vpop.f32.mrf.mxu0
        %v2599 = vadd.f32 %v2496, %v2598
        %v2600 = vpop.f32.mrf.mxu0
        %v2601 = vadd.f32 %v2496, %v2600
        %2602 = vmatprep.mubr.bf16.mxu0 0
        %2603 = vmatmul.mubr.bf16.gmra.mxu0 %v2538
        %v2604 = vpop.f32.mrf.mxu0
        %v2605 = vadd.f32 %v2501, %v2604
        %v2606 = vpop.f32.mrf.mxu0
        %v2607 = vadd.f32 %v2501, %v2606
        %v2608 = vpop.f32.mrf.mxu0
        %v2609 = vadd.f32 %v2506, %v2608
        %v2610 = vpop.f32.mrf.mxu0
        %v2611 = vadd.f32 %v2506, %v2610
        %2612 = vdwg.mxu0
        %2613 = vmatprep.subr.bf16.mxu0 0
        %2614 = vmatpush1.bf16.msra.mxu0 0
        %2615 = vmatprep.subr.bf16.mxu0 0
        %2616 = vmatpush1.bf16.msra.mxu0 0
        %2617 = vmatprep.subr.bf16.mxu0 0
        %2618 = vmatpush1.bf16.msra.mxu0 0
        %2619 = vmatprep.subr.bf16.mxu0 0
        %2620 = vmatpush1.bf16.msra.mxu0 0
        %2621 = vmatprep.subr.bf16.mxu0 %v2447
        %2622 = vmatpush1.bf16.msra.mxu0 %v2446
        %2623 = vmatprep.subr.bf16.mxu0 %v2439
        %2624 = vmatpush1.bf16.msra.mxu0 %v2438
        %2625 = vmatprep.subr.bf16.mxu0 %v2431
        %2626 = vmatpush1.bf16.msra.mxu0 %v2430
        %2627 = vmatprep.subr.bf16.mxu0 %v2423
        %2628 = vmatpush1.bf16.msra.mxu0 %v2422
        %2629 = vmatprep.subr.bf16.mxu0 0
        %2630 = vmatpush2.bf16.msra.mxu0 0
        %2631 = vmatprep.subr.bf16.mxu0 0
        %2632 = vmatpush2.bf16.msra.mxu0 0
        %2633 = vmatprep.subr.bf16.mxu0 0
        %2634 = vmatpush2.bf16.msra.mxu0 0
        %2635 = vmatprep.subr.bf16.mxu0 0
        %2636 = vmatpush2.bf16.msra.mxu0 0
        %2637 = vmatprep.subr.bf16.mxu0 0
        %2638 = vmatpush2.bf16.msra.mxu0 0
        %2639 = vmatprep.subr.bf16.mxu0 0
        %2640 = vmatpush2.bf16.msra.mxu0 0
        %2641 = vmatprep.subr.bf16.mxu0 0
        %2642 = vmatpush2.bf16.msra.mxu0 0
        %2643 = vmatprep.subr.bf16.mxu0 0
        %2644 = vmatpush2.bf16.msra.mxu0 0
        %2645 = vmatprep.mubr.bf16.mxu0 0
        %2646 = vmatmul.mubr.bf16.gmra.mxu0 %v2529
        %v2647 = vpop.f32.mrf.mxu0
        %v2648 = vadd.f32 %v2471, %v2647
        %v2649 = vpop.f32.mrf.mxu0
        %v2650 = vadd.f32 %v2471, %v2649
        %v2651 = vpop.f32.mrf.mxu0
        %v2652 = vadd.f32 %v2476, %v2651
        %v2653 = vpop.f32.mrf.mxu0
        %v2654 = vadd.f32 %v2476, %v2653
        %2655 = vmatprep.mubr.bf16.mxu0 0
        %2656 = vmatmul.mubr.bf16.gmra.mxu0 %v2532
        %v2657 = vpop.f32.mrf.mxu0
        %v2658 = vadd.f32 %v2481, %v2657
        %v2659 = vpop.f32.mrf.mxu0
        %v2660 = vadd.f32 %v2481, %v2659
        %v2661 = vpop.f32.mrf.mxu0
        %v2662 = vadd.f32 %v2486, %v2661
        %v2663 = vpop.f32.mrf.mxu0
        %v2664 = vadd.f32 %v2486, %v2663
        %2665 = vmatprep.mubr.bf16.mxu0 0
        %2666 = vmatmul.mubr.bf16.gmra.mxu0 %v2535
        %v2667 = vpop.f32.mrf.mxu0
        %v2668 = vadd.f32 %v2491, %v2667
        %v2669 = vpop.f32.mrf.mxu0
        %v2670 = vadd.f32 %v2491, %v2669
        %v2671 = vpop.f32.mrf.mxu0
        %v2672 = vadd.f32 %v2496, %v2671
        %v2673 = vpop.f32.mrf.mxu0
        %v2674 = vadd.f32 %v2496, %v2673
        %2675 = vmatprep.mubr.bf16.mxu0 0
        %2676 = vmatmul.mubr.bf16.gmra.mxu0 %v2538
        %v2677 = vpop.f32.mrf.mxu0
        %v2678 = vadd.f32 %v2501, %v2677
        %v2679 = vpop.f32.mrf.mxu0
        %v2680 = vadd.f32 %v2501, %v2679
        %v2681 = vpop.f32.mrf.mxu0
        %v2682 = vadd.f32 %v2506, %v2681
        %v2683 = vpop.f32.mrf.mxu0
        %v2684 = vadd.f32 %v2506, %v2683
        %2685 = vdwg.mxu0
        %2686 = vmatprep.subr.bf16.mxu0 0
        %2687 = vmatpush1.bf16.msra.mxu0 0
        %2688 = vmatprep.subr.bf16.mxu0 0
        %2689 = vmatpush1.bf16.msra.mxu0 0
        %2690 = vmatprep.subr.bf16.mxu0 0
        %2691 = vmatpush1.bf16.msra.mxu0 0
        %2692 = vmatprep.subr.bf16.mxu0 0
        %2693 = vmatpush1.bf16.msra.mxu0 0
        %2694 = vmatprep.subr.bf16.mxu0 %v2449
        %2695 = vmatpush1.bf16.msra.mxu0 %v2448
        %2696 = vmatprep.subr.bf16.mxu0 %v2441
        %2697 = vmatpush1.bf16.msra.mxu0 %v2440
        %2698 = vmatprep.subr.bf16.mxu0 %v2433
        %2699 = vmatpush1.bf16.msra.mxu0 %v2432
        %2700 = vmatprep.subr.bf16.mxu0 %v2425
        %2701 = vmatpush1.bf16.msra.mxu0 %v2424
        %2702 = vmatprep.subr.bf16.mxu0 0
        %2703 = vmatpush2.bf16.msra.mxu0 0
        %2704 = vmatprep.subr.bf16.mxu0 0
        %2705 = vmatpush2.bf16.msra.mxu0 0
        %2706 = vmatprep.subr.bf16.mxu0 0
        %2707 = vmatpush2.bf16.msra.mxu0 0
        %2708 = vmatprep.subr.bf16.mxu0 0
        %2709 = vmatpush2.bf16.msra.mxu0 0
        %2710 = vmatprep.subr.bf16.mxu0 0
        %2711 = vmatpush2.bf16.msra.mxu0 0
        %2712 = vmatprep.subr.bf16.mxu0 0
        %2713 = vmatpush2.bf16.msra.mxu0 0
        %2714 = vmatprep.subr.bf16.mxu0 0
        %2715 = vmatpush2.bf16.msra.mxu0 0
        %2716 = vmatprep.subr.bf16.mxu0 0
        %2717 = vmatpush2.bf16.msra.mxu0 0
        %2718 = vmatprep.mubr.bf16.mxu0 0
        %2719 = vmatmul.mubr.bf16.gmra.mxu0 %v2529
        %v2720 = vpop.f32.mrf.mxu0
        %v2721 = vadd.f32 %v2471, %v2720
        %v2722 = vpop.f32.mrf.mxu0
        %v2723 = vadd.f32 %v2471, %v2722
        %v2724 = vpop.f32.mrf.mxu0
        %v2725 = vadd.f32 %v2476, %v2724
        %v2726 = vpop.f32.mrf.mxu0
        %v2727 = vadd.f32 %v2476, %v2726
        %2728 = vmatprep.mubr.bf16.mxu0 0
        %2729 = vmatmul.mubr.bf16.gmra.mxu0 %v2532
        %v2730 = vpop.f32.mrf.mxu0
        %v2731 = vadd.f32 %v2481, %v2730
        %v2732 = vpop.f32.mrf.mxu0
        %v2733 = vadd.f32 %v2481, %v2732
        %v2734 = vpop.f32.mrf.mxu0
        %v2735 = vadd.f32 %v2486, %v2734
        %v2736 = vpop.f32.mrf.mxu0
        %v2737 = vadd.f32 %v2486, %v2736
        %2738 = vmatprep.mubr.bf16.mxu0 0
        %2739 = vmatmul.mubr.bf16.gmra.mxu0 %v2535
        %v2740 = vpop.f32.mrf.mxu0
        %v2741 = vadd.f32 %v2491, %v2740
        %v2742 = vpop.f32.mrf.mxu0
        %v2743 = vadd.f32 %v2491, %v2742
        %v2744 = vpop.f32.mrf.mxu0
        %v2745 = vadd.f32 %v2496, %v2744
        %v2746 = vpop.f32.mrf.mxu0
        %v2747 = vadd.f32 %v2496, %v2746
        %2748 = vmatprep.mubr.bf16.mxu0 0
        %2749 = vmatmul.mubr.bf16.gmra.mxu0 %v2538
        %v2750 = vpop.f32.mrf.mxu0
        %v2751 = vadd.f32 %v2501, %v2750
        %v2752 = vpop.f32.mrf.mxu0
        %v2753 = vadd.f32 %v2501, %v2752
        %v2754 = vpop.f32.mrf.mxu0
        %v2755 = vadd.f32 %v2506, %v2754
        %v2756 = vpop.f32.mrf.mxu0
        %v2757 = vadd.f32 %v2506, %v2756
        %2758 = vdwg.mxu0
        %2759 = vmatprep.subr.bf16.mxu0 0
        %2760 = vmatpush1.bf16.msra.mxu0 0
        %2761 = vmatprep.subr.bf16.mxu0 0
        %2762 = vmatpush1.bf16.msra.mxu0 0
        %2763 = vmatprep.subr.bf16.mxu0 0
        %2764 = vmatpush1.bf16.msra.mxu0 0
        %2765 = vmatprep.subr.bf16.mxu0 0
        %2766 = vmatpush1.bf16.msra.mxu0 0
        %2767 = vmatprep.subr.bf16.mxu0 %v2451
        %2768 = vmatpush1.bf16.msra.mxu0 %v2450
        %2769 = vmatprep.subr.bf16.mxu0 %v2443
        %2770 = vmatpush1.bf16.msra.mxu0 %v2442
        %2771 = vmatprep.subr.bf16.mxu0 %v2435
        %2772 = vmatpush1.bf16.msra.mxu0 %v2434
        %2773 = vmatprep.subr.bf16.mxu0 %v2427
        %2774 = vmatpush1.bf16.msra.mxu0 %v2426
        %2775 = vmatprep.subr.bf16.mxu0 0
        %2776 = vmatpush2.bf16.msra.mxu0 0
        %2777 = vmatprep.subr.bf16.mxu0 0
        %2778 = vmatpush2.bf16.msra.mxu0 0
        %2779 = vmatprep.subr.bf16.mxu0 0
        %2780 = vmatpush2.bf16.msra.mxu0 0
        %2781 = vmatprep.subr.bf16.mxu0 0
        %2782 = vmatpush2.bf16.msra.mxu0 0
        %2783 = vmatprep.subr.bf16.mxu0 0
        %2784 = vmatpush2.bf16.msra.mxu0 0
        %2785 = vmatprep.subr.bf16.mxu0 0
        %2786 = vmatpush2.bf16.msra.mxu0 0
        %2787 = vmatprep.subr.bf16.mxu0 0
        %2788 = vmatpush2.bf16.msra.mxu0 0
        %2789 = vmatprep.subr.bf16.mxu0 0
        %2790 = vmatpush2.bf16.msra.mxu0 0
        %2791 = vmatprep.mubr.bf16.mxu0 0
        %2792 = vmatmul.mubr.bf16.gmra.mxu0 %v2529
        %v2793 = vpop.f32.mrf.mxu0
        %v2794 = vadd.f32 %v2471, %v2793
        %v2795 = vpop.f32.mrf.mxu0
        %v2796 = vadd.f32 %v2471, %v2795
        %v2797 = vpop.f32.mrf.mxu0
        %v2798 = vadd.f32 %v2476, %v2797
        %v2799 = vpop.f32.mrf.mxu0
        %v2800 = vadd.f32 %v2476, %v2799
        %2801 = vmatprep.mubr.bf16.mxu0 0
        %2802 = vmatmul.mubr.bf16.gmra.mxu0 %v2532
        %v2803 = vpop.f32.mrf.mxu0
        %v2804 = vadd.f32 %v2481, %v2803
        %v2805 = vpop.f32.mrf.mxu0
        %v2806 = vadd.f32 %v2481, %v2805
        %v2807 = vpop.f32.mrf.mxu0
        %v2808 = vadd.f32 %v2486, %v2807
        %v2809 = vpop.f32.mrf.mxu0
        %v2810 = vadd.f32 %v2486, %v2809
        %2811 = vmatprep.mubr.bf16.mxu0 0
        %2812 = vmatmul.mubr.bf16.gmra.mxu0 %v2535
        %v2813 = vpop.f32.mrf.mxu0
        %v2814 = vadd.f32 %v2491, %v2813
        %v2815 = vpop.f32.mrf.mxu0
        %v2816 = vadd.f32 %v2491, %v2815
        %v2817 = vpop.f32.mrf.mxu0
        %v2818 = vadd.f32 %v2496, %v2817
        %v2819 = vpop.f32.mrf.mxu0
        %v2820 = vadd.f32 %v2496, %v2819
        %2821 = vmatprep.mubr.bf16.mxu0 0
        %2822 = vmatmul.mubr.bf16.gmra.mxu0 %v2538
        %v2823 = vpop.f32.mrf.mxu0
        %v2824 = vadd.f32 %v2501, %v2823
        %v2825 = vpop.f32.mrf.mxu0
        %v2826 = vadd.f32 %v2501, %v2825
        %v2827 = vpop.f32.mrf.mxu0
        %v2828 = vadd.f32 %v2506, %v2827
        %v2829 = vpop.f32.mrf.mxu0
        %v2830 = vadd.f32 %v2506, %v2829
        %2831 = vdwg.mxu0
        %v2832 = vmax.f32 %v2575, 0.0
        %v2833 = vmax.f32 %v2577, 0.0
        %v2834 = vmax.f32 %v2648, 0.0
        %v2835 = vmax.f32 %v2650, 0.0
        %v2836 = vmax.f32 %v2721, 0.0
        %v2837 = vmax.f32 %v2723, 0.0
        %v2838 = vmax.f32 %v2794, 0.0
        %v2839 = vmax.f32 %v2796, 0.0
        %v2840 = vmax.f32 %v2579, 0.0
        %v2841 = vmax.f32 %v2581, 0.0
        %v2842 = vmax.f32 %v2652, 0.0
        %v2843 = vmax.f32 %v2654, 0.0
        %v2844 = vmax.f32 %v2725, 0.0
        %v2845 = vmax.f32 %v2727, 0.0
        %v2846 = vmax.f32 %v2798, 0.0
        %v2847 = vmax.f32 %v2800, 0.0
        %v2848 = vmax.f32 %v2585, 0.0
        %v2849 = vmax.f32 %v2587, 0.0
        %v2850 = vmax.f32 %v2658, 0.0
        %v2851 = vmax.f32 %v2660, 0.0
        %v2852 = vmax.f32 %v2731, 0.0
        %v2853 = vmax.f32 %v2733, 0.0
        %v2854 = vmax.f32 %v2804, 0.0
        %v2855 = vmax.f32 %v2806, 0.0
        %v2856 = vmax.f32 %v2589, 0.0
        %v2857 = vmax.f32 %v2591, 0.0
        %v2858 = vmax.f32 %v2662, 0.0
        %v2859 = vmax.f32 %v2664, 0.0
        %v2860 = vmax.f32 %v2735, 0.0
        %v2861 = vmax.f32 %v2737, 0.0
        %v2862 = vmax.f32 %v2808, 0.0
        %v2863 = vmax.f32 %v2810, 0.0
        %v2864 = vmax.f32 %v2595, 0.0
        %v2865 = vmax.f32 %v2597, 0.0
        %v2866 = vmax.f32 %v2668, 0.0
        %v2867 = vmax.f32 %v2670, 0.0
        %v2868 = vmax.f32 %v2741, 0.0
        %v2869 = vmax.f32 %v2743, 0.0
        %v2870 = vmax.f32 %v2814, 0.0
        %v2871 = vmax.f32 %v2816, 0.0
        %v2872 = vmax.f32 %v2599, 0.0
        %v2873 = vmax.f32 %v2601, 0.0
        %v2874 = vmax.f32 %v2672, 0.0
        %v2875 = vmax.f32 %v2674, 0.0
        %v2876 = vmax.f32 %v2745, 0.0
        %v2877 = vmax.f32 %v2747, 0.0
        %v2878 = vmax.f32 %v2818, 0.0
        %v2879 = vmax.f32 %v2820, 0.0
        %v2880 = vmax.f32 %v2605, 0.0
        %v2881 = vmax.f32 %v2607, 0.0
        %v2882 = vmax.f32 %v2678, 0.0
        %v2883 = vmax.f32 %v2680, 0.0
        %v2884 = vmax.f32 %v2751, 0.0
        %v2885 = vmax.f32 %v2753, 0.0
        %v2886 = vmax.f32 %v2824, 0.0
        %v2887 = vmax.f32 %v2826, 0.0
        %v2888 = vmax.f32 %v2609, 0.0
        %v2889 = vmax.f32 %v2611, 0.0
        %v2890 = vmax.f32 %v2682, 0.0
        %v2891 = vmax.f32 %v2684, 0.0
        %v2892 = vmax.f32 %v2755, 0.0
        %v2893 = vmax.f32 %v2757, 0.0
        %v2894 = vmax.f32 %v2828, 0.0
        %v2895 = vmax.f32 %v2830, 0.0
        %v2896 = vpack.c.bf16 %v2840, %v2832
        %v2897 = vpack.c.bf16 %v2841, %v2833
        %v2898 = vpack.c.bf16 %v2842, %v2834
        %v2899 = vpack.c.bf16 %v2843, %v2835
        %v2900 = vpack.c.bf16 %v2844, %v2836
        %v2901 = vpack.c.bf16 %v2845, %v2837
        %v2902 = vpack.c.bf16 %v2846, %v2838
        %v2903 = vpack.c.bf16 %v2847, %v2839
        %v2904 = vpack.c.bf16 %v2856, %v2848
        %v2905 = vpack.c.bf16 %v2857, %v2849
        %v2906 = vpack.c.bf16 %v2858, %v2850
        %v2907 = vpack.c.bf16 %v2859, %v2851
        %v2908 = vpack.c.bf16 %v2860, %v2852
        %v2909 = vpack.c.bf16 %v2861, %v2853
        %v2910 = vpack.c.bf16 %v2862, %v2854
        %v2911 = vpack.c.bf16 %v2863, %v2855
        %v2912 = vpack.c.bf16 %v2872, %v2864
        %v2913 = vpack.c.bf16 %v2873, %v2865
        %v2914 = vpack.c.bf16 %v2874, %v2866
        %v2915 = vpack.c.bf16 %v2875, %v2867
        %v2916 = vpack.c.bf16 %v2876, %v2868
        %v2917 = vpack.c.bf16 %v2877, %v2869
        %v2918 = vpack.c.bf16 %v2878, %v2870
        %v2919 = vpack.c.bf16 %v2879, %v2871
        %v2920 = vpack.c.bf16 %v2888, %v2880
        %v2921 = vpack.c.bf16 %v2889, %v2881
        %v2922 = vpack.c.bf16 %v2890, %v2882
        %v2923 = vpack.c.bf16 %v2891, %v2883
        %v2924 = vpack.c.bf16 %v2892, %v2884
        %v2925 = vpack.c.bf16 %v2893, %v2885
        %v2926 = vpack.c.bf16 %v2894, %v2886
        %v2927 = vpack.c.bf16 %v2895, %v2887
        %v2928 = vld [vmem:[%s11] sm:$0x3]
        %v2929 = vld [vmem:[%s12] sm:$0xf]
        %2931 = vset.pattern.permute.xlu0 0
        %2932 = vperm.xlu0 %2931, %v2929
        %v2933 = vpop.permute.xlu0 %2932
        %v2936 = vsel %vm2051, %v2928, 0
        %2938 = vmatprep.subr.bf16.mxu0 0
        %2939 = vmatpush1.bf16.msra.mxu0 0
        %2940 = vmatprep.subr.bf16.mxu0 0
        %2941 = vmatpush1.bf16.msra.mxu0 0
        %2942 = vmatprep.subr.bf16.mxu0 0
        %2943 = vmatpush1.bf16.msra.mxu0 0
        %2944 = vmatprep.subr.bf16.mxu0 0
        %2945 = vmatpush1.bf16.msra.mxu0 0
        %2946 = vmatprep.subr.bf16.mxu0 %v2921
        %2947 = vmatpush1.bf16.msra.mxu0 %v2920
        %2948 = vmatprep.subr.bf16.mxu0 %v2913
        %2949 = vmatpush1.bf16.msra.mxu0 %v2912
        %2950 = vmatprep.subr.bf16.mxu0 %v2905
        %2951 = vmatpush1.bf16.msra.mxu0 %v2904
        %2952 = vmatprep.subr.bf16.mxu0 %v2897
        %2953 = vmatpush1.bf16.msra.mxu0 %v2896
        %2954 = vmatprep.subr.bf16.mxu0 0
        %2955 = vmatpush2.bf16.msra.mxu0 0
        %2956 = vmatprep.subr.bf16.mxu0 0
        %2957 = vmatpush2.bf16.msra.mxu0 0
        %2958 = vmatprep.subr.bf16.mxu0 0
        %2959 = vmatpush2.bf16.msra.mxu0 0
        %2960 = vmatprep.subr.bf16.mxu0 0
        %2961 = vmatpush2.bf16.msra.mxu0 0
        %2962 = vmatprep.subr.bf16.mxu0 0
        %2963 = vmatpush2.bf16.msra.mxu0 0
        %2964 = vmatprep.subr.bf16.mxu0 0
        %2965 = vmatpush2.bf16.msra.mxu0 0
        %2966 = vmatprep.subr.bf16.mxu0 0
        %2967 = vmatpush2.bf16.msra.mxu0 0
        %2968 = vmatprep.subr.bf16.mxu0 0
        %2969 = vmatpush2.bf16.msra.mxu0 0
        %2970 = vmatprep.mubr.bf16.mxu0 0
        %2971 = vmatmul.mubr.bf16.gmra.mxu0 %v2936
        %v2972 = vpop.f32.mrf.mxu0
        %v2973 = vadd.f32 %v2933, %v2972
        %v2974 = vpop.f32.mrf.mxu0
        %v2975 = vadd.f32 %v2933, %v2974
        %v2976 = vpop.f32.mrf.mxu0
        %v2977 = vpop.f32.mrf.mxu0
        %2978 = vdwg.mxu0
        %2979 = vmatprep.subr.bf16.mxu0 0
        %2980 = vmatpush1.bf16.msra.mxu0 0
        %2981 = vmatprep.subr.bf16.mxu0 0
        %2982 = vmatpush1.bf16.msra.mxu0 0
        %2983 = vmatprep.subr.bf16.mxu0 0
        %2984 = vmatpush1.bf16.msra.mxu0 0
        %2985 = vmatprep.subr.bf16.mxu0 0
        %2986 = vmatpush1.bf16.msra.mxu0 0
        %2987 = vmatprep.subr.bf16.mxu0 %v2923
        %2988 = vmatpush1.bf16.msra.mxu0 %v2922
        %2989 = vmatprep.subr.bf16.mxu0 %v2915
        %2990 = vmatpush1.bf16.msra.mxu0 %v2914
        %2991 = vmatprep.subr.bf16.mxu0 %v2907
        %2992 = vmatpush1.bf16.msra.mxu0 %v2906
        %2993 = vmatprep.subr.bf16.mxu0 %v2899
        %2994 = vmatpush1.bf16.msra.mxu0 %v2898
        %2995 = vmatprep.subr.bf16.mxu0 0
        %2996 = vmatpush2.bf16.msra.mxu0 0
        %2997 = vmatprep.subr.bf16.mxu0 0
        %2998 = vmatpush2.bf16.msra.mxu0 0
        %2999 = vmatprep.subr.bf16.mxu0 0
        %3000 = vmatpush2.bf16.msra.mxu0 0
        %3001 = vmatprep.subr.bf16.mxu0 0
        %3002 = vmatpush2.bf16.msra.mxu0 0
        %3003 = vmatprep.subr.bf16.mxu0 0
        %3004 = vmatpush2.bf16.msra.mxu0 0
        %3005 = vmatprep.subr.bf16.mxu0 0
        %3006 = vmatpush2.bf16.msra.mxu0 0
        %3007 = vmatprep.subr.bf16.mxu0 0
        %3008 = vmatpush2.bf16.msra.mxu0 0
        %3009 = vmatprep.subr.bf16.mxu0 0
        %3010 = vmatpush2.bf16.msra.mxu0 0
        %3011 = vmatprep.mubr.bf16.mxu0 0
        %3012 = vmatmul.mubr.bf16.gmra.mxu0 %v2936
        %v3013 = vpop.f32.mrf.mxu0
        %v3014 = vadd.f32 %v2933, %v3013
        %v3015 = vpop.f32.mrf.mxu0
        %v3016 = vadd.f32 %v2933, %v3015
        %v3017 = vpop.f32.mrf.mxu0
        %v3018 = vpop.f32.mrf.mxu0
        %3019 = vdwg.mxu0
        %3020 = vmatprep.subr.bf16.mxu0 0
        %3021 = vmatpush1.bf16.msra.mxu0 0
        %3022 = vmatprep.subr.bf16.mxu0 0
        %3023 = vmatpush1.bf16.msra.mxu0 0
        %3024 = vmatprep.subr.bf16.mxu0 0
        %3025 = vmatpush1.bf16.msra.mxu0 0
        %3026 = vmatprep.subr.bf16.mxu0 0
        %3027 = vmatpush1.bf16.msra.mxu0 0
        %3028 = vmatprep.subr.bf16.mxu0 %v2925
        %3029 = vmatpush1.bf16.msra.mxu0 %v2924
        %3030 = vmatprep.subr.bf16.mxu0 %v2917
        %3031 = vmatpush1.bf16.msra.mxu0 %v2916
        %3032 = vmatprep.subr.bf16.mxu0 %v2909
        %3033 = vmatpush1.bf16.msra.mxu0 %v2908
        %3034 = vmatprep.subr.bf16.mxu0 %v2901
        %3035 = vmatpush1.bf16.msra.mxu0 %v2900
        %3036 = vmatprep.subr.bf16.mxu0 0
        %3037 = vmatpush2.bf16.msra.mxu0 0
        %3038 = vmatprep.subr.bf16.mxu0 0
        %3039 = vmatpush2.bf16.msra.mxu0 0
        %3040 = vmatprep.subr.bf16.mxu0 0
        %3041 = vmatpush2.bf16.msra.mxu0 0
        %3042 = vmatprep.subr.bf16.mxu0 0
        %3043 = vmatpush2.bf16.msra.mxu0 0
        %3044 = vmatprep.subr.bf16.mxu0 0
        %3045 = vmatpush2.bf16.msra.mxu0 0
        %3046 = vmatprep.subr.bf16.mxu0 0
        %3047 = vmatpush2.bf16.msra.mxu0 0
        %3048 = vmatprep.subr.bf16.mxu0 0
        %3049 = vmatpush2.bf16.msra.mxu0 0
        %3050 = vmatprep.subr.bf16.mxu0 0
        %3051 = vmatpush2.bf16.msra.mxu0 0
        %3052 = vmatprep.mubr.bf16.mxu0 0
        %3053 = vmatmul.mubr.bf16.gmra.mxu0 %v2936
        %v3054 = vpop.f32.mrf.mxu0
        %v3055 = vadd.f32 %v2933, %v3054
        %v3056 = vpop.f32.mrf.mxu0
        %v3057 = vadd.f32 %v2933, %v3056
        %v3058 = vpop.f32.mrf.mxu0
        %v3059 = vpop.f32.mrf.mxu0
        %3060 = vdwg.mxu0
        %3061 = vmatprep.subr.bf16.mxu0 0
        %3062 = vmatpush1.bf16.msra.mxu0 0
        %3063 = vmatprep.subr.bf16.mxu0 0
        %3064 = vmatpush1.bf16.msra.mxu0 0
        %3065 = vmatprep.subr.bf16.mxu0 0
        %3066 = vmatpush1.bf16.msra.mxu0 0
        %3067 = vmatprep.subr.bf16.mxu0 0
        %3068 = vmatpush1.bf16.msra.mxu0 0
        %3069 = vmatprep.subr.bf16.mxu0 %v2927
        %3070 = vmatpush1.bf16.msra.mxu0 %v2926
        %3071 = vmatprep.subr.bf16.mxu0 %v2919
        %3072 = vmatpush1.bf16.msra.mxu0 %v2918
        %3073 = vmatprep.subr.bf16.mxu0 %v2911
        %3074 = vmatpush1.bf16.msra.mxu0 %v2910
        %3075 = vmatprep.subr.bf16.mxu0 %v2903
        %3076 = vmatpush1.bf16.msra.mxu0 %v2902
        %3077 = vmatprep.subr.bf16.mxu0 0
        %3078 = vmatpush2.bf16.msra.mxu0 0
        %3079 = vmatprep.subr.bf16.mxu0 0
        %3080 = vmatpush2.bf16.msra.mxu0 0
        %3081 = vmatprep.subr.bf16.mxu0 0
        %3082 = vmatpush2.bf16.msra.mxu0 0
        %3083 = vmatprep.subr.bf16.mxu0 0
        %3084 = vmatpush2.bf16.msra.mxu0 0
        %3085 = vmatprep.subr.bf16.mxu0 0
        %3086 = vmatpush2.bf16.msra.mxu0 0
        %3087 = vmatprep.subr.bf16.mxu0 0
        %3088 = vmatpush2.bf16.msra.mxu0 0
        %3089 = vmatprep.subr.bf16.mxu0 0
        %3090 = vmatpush2.bf16.msra.mxu0 0
        %3091 = vmatprep.subr.bf16.mxu0 0
        %3092 = vmatpush2.bf16.msra.mxu0 0
        %3093 = vmatprep.mubr.bf16.mxu0 0
        %3094 = vmatmul.mubr.bf16.gmra.mxu0 %v2936
        %v3095 = vpop.f32.mrf.mxu0
        %v3096 = vadd.f32 %v2933, %v3095
        %v3097 = vpop.f32.mrf.mxu0
        %v3098 = vadd.f32 %v2933, %v3097
        %v3099 = vpop.f32.mrf.mxu0
        %v3100 = vpop.f32.mrf.mxu0
        %3101 = vdwg.mxu0
        %v3102 = vrcp.pop 1.9
        %v3103 = vmul.f32 %v2973, %v3102
        %v3104 = vmul.f32 %v2975, %v3102
        %v3105 = vmul.f32 %v3014, %v3102
        %v3106 = vmul.f32 %v3016, %v3102
        %v3107 = vmul.f32 %v3055, %v3102
        %v3108 = vmul.f32 %v3057, %v3102
        %v3109 = vmul.f32 %v3096, %v3102
        %v3110 = vmul.f32 %v3098, %v3102
        %v3111 = vtanh.pop %v3103
        %v3112 = vtanh.pop %v3104
        %v3113 = vtanh.pop %v3105
        %v3114 = vtanh.pop %v3106
        %v3115 = vtanh.pop %v3107
        %v3116 = vtanh.pop %v3108
        %v3117 = vtanh.pop %v3109
        %v3118 = vtanh.pop %v3110
        %v3119 = vmul.f32 %v3111, 1.9
        %v3120 = vmul.f32 %v3112, 1.9
        %v3121 = vmul.f32 %v3113, 1.9
        %v3122 = vmul.f32 %v3114, 1.9
        %v3123 = vmul.f32 %v3115, 1.9
        %v3124 = vmul.f32 %v3116, 1.9
        %v3125 = vmul.f32 %v3117, 1.9
        %v3126 = vmul.f32 %v3118, 1.9
        %v3127 = vmul.f32 %v3119, 1.442695
        %v3128 = vpow.pop %v3127
        %v3129 = vmul.f32 %v3120, 1.442695
        %v3130 = vpow.pop %v3129
        %v3131 = vmul.f32 %v3121, 1.442695
        %v3132 = vpow.pop %v3131
        %v3133 = vmul.f32 %v3122, 1.442695
        %v3134 = vpow.pop %v3133
        %v3135 = vmul.f32 %v3123, 1.442695
        %v3136 = vpow.pop %v3135
        %v3137 = vmul.f32 %v3124, 1.442695
        %v3138 = vpow.pop %v3137
        %v3139 = vmul.f32 %v3125, 1.442695
        %v3140 = vpow.pop %v3139
        %v3141 = vmul.f32 %v3126, 1.442695
        %v3142 = vpow.pop %v3141
        %v3151 = vrot.slane %v3128, 6
        %v3152 = vrot.slane %v3130, 6
        %v3153 = vrot.slane %v3132, 6
        %v3154 = vrot.slane %v3134, 6
        %v3155 = vrot.slane %v3136, 6
        %v3156 = vrot.slane %v3138, 6
        %v3157 = vrot.slane %v3140, 6
        %v3158 = vrot.slane %v3142, 6
        %v3167 = vmul.f32 %v611, %v3151
        %v3168 = vmul.f32 %v613, %v3152
        %v3169 = vmul.f32 %v682, %v3153
        %v3170 = vmul.f32 %v684, %v3154
        %v3171 = vmul.f32 %v753, %v3155
        %v3172 = vmul.f32 %v755, %v3156
        %v3173 = vmul.f32 %v824, %v3157
        %v3174 = vmul.f32 %v826, %v3158
        %v3175 = vadd.f32 %v3167, %v2973
        %v3176 = vadd.f32 %v3168, %v2975
        %v3177 = vadd.f32 %v3169, %v3014
        %v3178 = vadd.f32 %v3170, %v3016
        %v3179 = vadd.f32 %v3171, %v3055
        %v3180 = vadd.f32 %v3172, %v3057
        %v3181 = vadd.f32 %v3173, %v3096
        %v3182 = vadd.f32 %v3174, %v3098
        %s3183 = scalar_lea.vmem %s5, 32
        %v3184 = vld [vmem:[%s3183] sm:$0xf]
        %v3185 = vld [vmem:[%s3183 + $0x4] sm:$0xf]
        %v3186 = vld [vmem:[%s3183 + $0x8] sm:$0xf]
        %v3187 = vld [vmem:[%s3183 + $0xc] sm:$0xf]
        %v3188 = vld [vmem:[%s3183 + $0x10] sm:$0xf]
        %v3189 = vld [vmem:[%s3183 + $0x14] sm:$0xf]
        %v3190 = vld [vmem:[%s3183 + $0x18] sm:$0xf]
        %v3191 = vld [vmem:[%s3183 + $0x1c] sm:$0xf]
        %v3192 = vpack.c.bf16 %v3175, %v3175
        %v3193 = vpack.c.bf16 %v3176, %v3176
        %v3194 = vpack.c.bf16 %v3177, %v3177
        %v3195 = vpack.c.bf16 %v3178, %v3178
        %v3196 = vpack.c.bf16 %v3179, %v3179
        %v3197 = vpack.c.bf16 %v3180, %v3180
        %v3198 = vpack.c.bf16 %v3181, %v3181
        %v3199 = vpack.c.bf16 %v3182, %v3182
        %v3208 = vunpack.c.l.b16 %v3184
        %v3209 = vunpack.c.l.b16 %v3185
        %v3210 = vunpack.c.l.b16 %v3186
        %v3211 = vunpack.c.l.b16 %v3187
        %v3212 = vunpack.c.l.b16 %v3188
        %v3213 = vunpack.c.l.b16 %v3189
        %v3214 = vunpack.c.l.b16 %v3190
        %v3215 = vunpack.c.l.b16 %v3191
        %v3216 = vpack.c.b16 %v3209, %v3208
        %v3217 = vpack.c.b16 %v3211, %v3210
        %v3218 = vpack.c.b16 %v3213, %v3212
        %v3219 = vpack.c.b16 %v3215, %v3214
        %v3228 = vrot.slane %v3192, 1
        %v3229 = vrot.slane %v3193, 1
        %v3230 = vrot.slane %v3194, 1
        %v3231 = vrot.slane %v3195, 1
        %v3232 = vrot.slane %v3196, 1
        %v3233 = vrot.slane %v3197, 1
        %v3234 = vrot.slane %v3198, 1
        %v3235 = vrot.slane %v3199, 1
        %v3237 = vsel %vm1437, %v3216, 0
        %v3240 = vsel %vm1437, %v3217, 0
        %v3243 = vsel %vm1437, %v3218, 0
        %v3246 = vsel %vm1437, %v3219, 0
        %v3249 = vsel %vm1450, %v3228, 0
        %v3252 = vsel %vm1450, %v3229, 0
        %v3255 = vsel %vm1450, %v3230, 0
        %v3258 = vsel %vm1450, %v3231, 0
        %v3261 = vsel %vm1450, %v3232, 0
        %v3264 = vsel %vm1450, %v3233, 0
        %v3267 = vsel %vm1450, %v3234, 0
        %v3270 = vsel %vm1450, %v3235, 0
        %3272 = vmatprep.subr.bf16.mxu0 0
        %3273 = vmatpush1.bf16.msra.mxu0 0
        %3274 = vmatprep.subr.bf16.mxu0 0
        %3275 = vmatpush1.bf16.msra.mxu0 0
        %3276 = vmatprep.subr.bf16.mxu0 0
        %3277 = vmatpush1.bf16.msra.mxu0 0
        %3278 = vmatprep.subr.bf16.mxu0 0
        %3279 = vmatpush1.bf16.msra.mxu0 0
        %3280 = vmatprep.subr.bf16.mxu0 0
        %3281 = vmatpush1.bf16.msra.mxu0 0
        %3282 = vmatprep.subr.bf16.mxu0 0
        %3283 = vmatpush1.bf16.msra.mxu0 0
        %3284 = vmatprep.subr.bf16.mxu0 0
        %3285 = vmatpush1.bf16.msra.mxu0 0
        %3286 = vmatprep.subr.bf16.mxu0 %v3252
        %3287 = vmatpush1.bf16.msra.mxu0 %v3249
        %3288 = vmatprep.subr.bf16.mxu0 0
        %3289 = vmatpush2.bf16.msra.mxu0 0
        %3290 = vmatprep.subr.bf16.mxu0 0
        %3291 = vmatpush2.bf16.msra.mxu0 0
        %3292 = vmatprep.subr.bf16.mxu0 0
        %3293 = vmatpush2.bf16.msra.mxu0 0
        %3294 = vmatprep.subr.bf16.mxu0 0
        %3295 = vmatpush2.bf16.msra.mxu0 0
        %3296 = vmatprep.subr.bf16.mxu0 0
        %3297 = vmatpush2.bf16.msra.mxu0 0
        %3298 = vmatprep.subr.bf16.mxu0 0
        %3299 = vmatpush2.bf16.msra.mxu0 0
        %3300 = vmatprep.subr.bf16.mxu0 0
        %3301 = vmatpush2.bf16.msra.mxu0 0
        %3302 = vmatprep.subr.bf16.mxu0 0
        %3303 = vmatpush2.bf16.msra.mxu0 0
        %3304 = vmatprep.mubr.bf16.mxu0 0
        %3305 = vmatmul.mubr.bf16.gmra.mxu0 %v3237
        %v3306 = vpop.f32.mrf.mxu0
        %v3307 = vadd.f32 %v1024, %v3306
        %v3308 = vpop.f32.mrf.mxu0
        %v3309 = vadd.f32 %v1026, %v3308
        %v3310 = vpop.f32.mrf.mxu0
        %v3311 = vadd.f32 %v1028, %v3310
        %v3312 = vpop.f32.mrf.mxu0
        %v3313 = vadd.f32 %v1030, %v3312
        %3314 = vmatprep.mubr.bf16.mxu0 0
        %3315 = vmatmul.mubr.bf16.gmra.mxu0 %v3240
        %v3316 = vpop.f32.mrf.mxu0
        %v3317 = vadd.f32 %v1034, %v3316
        %v3318 = vpop.f32.mrf.mxu0
        %v3319 = vadd.f32 %v1036, %v3318
        %v3320 = vpop.f32.mrf.mxu0
        %v3321 = vadd.f32 %v1038, %v3320
        %v3322 = vpop.f32.mrf.mxu0
        %v3323 = vadd.f32 %v1040, %v3322
        %3324 = vmatprep.mubr.bf16.mxu0 0
        %3325 = vmatmul.mubr.bf16.gmra.mxu0 %v3243
        %v3326 = vpop.f32.mrf.mxu0
        %v3327 = vadd.f32 %v1044, %v3326
        %v3328 = vpop.f32.mrf.mxu0
        %v3329 = vadd.f32 %v1046, %v3328
        %v3330 = vpop.f32.mrf.mxu0
        %v3331 = vadd.f32 %v1048, %v3330
        %v3332 = vpop.f32.mrf.mxu0
        %v3333 = vadd.f32 %v1050, %v3332
        %3334 = vmatprep.mubr.bf16.mxu0 0
        %3335 = vmatmul.mubr.bf16.gmra.mxu0 %v3246
        %v3336 = vpop.f32.mrf.mxu0
        %v3337 = vadd.f32 %v1054, %v3336
        %v3338 = vpop.f32.mrf.mxu0
        %v3339 = vadd.f32 %v1056, %v3338
        %v3340 = vpop.f32.mrf.mxu0
        %v3341 = vadd.f32 %v1058, %v3340
        %v3342 = vpop.f32.mrf.mxu0
        %v3343 = vadd.f32 %v1060, %v3342
        %3344 = vdwg.mxu0
        %3345 = vmatprep.subr.bf16.mxu0 0
        %3346 = vmatpush1.bf16.msra.mxu0 0
        %3347 = vmatprep.subr.bf16.mxu0 0
        %3348 = vmatpush1.bf16.msra.mxu0 0
        %3349 = vmatprep.subr.bf16.mxu0 0
        %3350 = vmatpush1.bf16.msra.mxu0 0
        %3351 = vmatprep.subr.bf16.mxu0 0
        %3352 = vmatpush1.bf16.msra.mxu0 0
        %3353 = vmatprep.subr.bf16.mxu0 0
        %3354 = vmatpush1.bf16.msra.mxu0 0
        %3355 = vmatprep.subr.bf16.mxu0 0
        %3356 = vmatpush1.bf16.msra.mxu0 0
        %3357 = vmatprep.subr.bf16.mxu0 0
        %3358 = vmatpush1.bf16.msra.mxu0 0
        %3359 = vmatprep.subr.bf16.mxu0 %v3258
        %3360 = vmatpush1.bf16.msra.mxu0 %v3255
        %3361 = vmatprep.subr.bf16.mxu0 0
        %3362 = vmatpush2.bf16.msra.mxu0 0
        %3363 = vmatprep.subr.bf16.mxu0 0
        %3364 = vmatpush2.bf16.msra.mxu0 0
        %3365 = vmatprep.subr.bf16.mxu0 0
        %3366 = vmatpush2.bf16.msra.mxu0 0
        %3367 = vmatprep.subr.bf16.mxu0 0
        %3368 = vmatpush2.bf16.msra.mxu0 0
        %3369 = vmatprep.subr.bf16.mxu0 0
        %3370 = vmatpush2.bf16.msra.mxu0 0
        %3371 = vmatprep.subr.bf16.mxu0 0
        %3372 = vmatpush2.bf16.msra.mxu0 0
        %3373 = vmatprep.subr.bf16.mxu0 0
        %3374 = vmatpush2.bf16.msra.mxu0 0
        %3375 = vmatprep.subr.bf16.mxu0 0
        %3376 = vmatpush2.bf16.msra.mxu0 0
        %3377 = vmatprep.mubr.bf16.mxu0 0
        %3378 = vmatmul.mubr.bf16.gmra.mxu0 %v3237
        %v3379 = vpop.f32.mrf.mxu0
        %v3380 = vadd.f32 %v1137, %v3379
        %v3381 = vpop.f32.mrf.mxu0
        %v3382 = vadd.f32 %v1139, %v3381
        %v3383 = vpop.f32.mrf.mxu0
        %v3384 = vadd.f32 %v1141, %v3383
        %v3385 = vpop.f32.mrf.mxu0
        %v3386 = vadd.f32 %v1143, %v3385
        %3387 = vmatprep.mubr.bf16.mxu0 0
        %3388 = vmatmul.mubr.bf16.gmra.mxu0 %v3240
        %v3389 = vpop.f32.mrf.mxu0
        %v3390 = vadd.f32 %v1147, %v3389
        %v3391 = vpop.f32.mrf.mxu0
        %v3392 = vadd.f32 %v1149, %v3391
        %v3393 = vpop.f32.mrf.mxu0
        %v3394 = vadd.f32 %v1151, %v3393
        %v3395 = vpop.f32.mrf.mxu0
        %v3396 = vadd.f32 %v1153, %v3395
        %3397 = vmatprep.mubr.bf16.mxu0 0
        %3398 = vmatmul.mubr.bf16.gmra.mxu0 %v3243
        %v3399 = vpop.f32.mrf.mxu0
        %v3400 = vadd.f32 %v1157, %v3399
        %v3401 = vpop.f32.mrf.mxu0
        %v3402 = vadd.f32 %v1159, %v3401
        %v3403 = vpop.f32.mrf.mxu0
        %v3404 = vadd.f32 %v1161, %v3403
        %v3405 = vpop.f32.mrf.mxu0
        %v3406 = vadd.f32 %v1163, %v3405
        %3407 = vmatprep.mubr.bf16.mxu0 0
        %3408 = vmatmul.mubr.bf16.gmra.mxu0 %v3246
        %v3409 = vpop.f32.mrf.mxu0
        %v3410 = vadd.f32 %v1167, %v3409
        %v3411 = vpop.f32.mrf.mxu0
        %v3412 = vadd.f32 %v1169, %v3411
        %v3413 = vpop.f32.mrf.mxu0
        %v3414 = vadd.f32 %v1171, %v3413
        %v3415 = vpop.f32.mrf.mxu0
        %v3416 = vadd.f32 %v1173, %v3415
        %3417 = vdwg.mxu0
        %3418 = vmatprep.subr.bf16.mxu0 0
        %3419 = vmatpush1.bf16.msra.mxu0 0
        %3420 = vmatprep.subr.bf16.mxu0 0
        %3421 = vmatpush1.bf16.msra.mxu0 0
        %3422 = vmatprep.subr.bf16.mxu0 0
        %3423 = vmatpush1.bf16.msra.mxu0 0
        %3424 = vmatprep.subr.bf16.mxu0 0
        %3425 = vmatpush1.bf16.msra.mxu0 0
        %3426 = vmatprep.subr.bf16.mxu0 0
        %3427 = vmatpush1.bf16.msra.mxu0 0
        %3428 = vmatprep.subr.bf16.mxu0 0
        %3429 = vmatpush1.bf16.msra.mxu0 0
        %3430 = vmatprep.subr.bf16.mxu0 0
        %3431 = vmatpush1.bf16.msra.mxu0 0
        %3432 = vmatprep.subr.bf16.mxu0 %v3264
        %3433 = vmatpush1.bf16.msra.mxu0 %v3261
        %3434 = vmatprep.subr.bf16.mxu0 0
        %3435 = vmatpush2.bf16.msra.mxu0 0
        %3436 = vmatprep.subr.bf16.mxu0 0
        %3437 = vmatpush2.bf16.msra.mxu0 0
        %3438 = vmatprep.subr.bf16.mxu0 0
        %3439 = vmatpush2.bf16.msra.mxu0 0
        %3440 = vmatprep.subr.bf16.mxu0 0
        %3441 = vmatpush2.bf16.msra.mxu0 0
        %3442 = vmatprep.subr.bf16.mxu0 0
        %3443 = vmatpush2.bf16.msra.mxu0 0
        %3444 = vmatprep.subr.bf16.mxu0 0
        %3445 = vmatpush2.bf16.msra.mxu0 0
        %3446 = vmatprep.subr.bf16.mxu0 0
        %3447 = vmatpush2.bf16.msra.mxu0 0
        %3448 = vmatprep.subr.bf16.mxu0 0
        %3449 = vmatpush2.bf16.msra.mxu0 0
        %3450 = vmatprep.mubr.bf16.mxu0 0
        %3451 = vmatmul.mubr.bf16.gmra.mxu0 %v3237
        %v3452 = vpop.f32.mrf.mxu0
        %v3453 = vadd.f32 %v1250, %v3452
        %v3454 = vpop.f32.mrf.mxu0
        %v3455 = vadd.f32 %v1252, %v3454
        %v3456 = vpop.f32.mrf.mxu0
        %v3457 = vadd.f32 %v1254, %v3456
        %v3458 = vpop.f32.mrf.mxu0
        %v3459 = vadd.f32 %v1256, %v3458
        %3460 = vmatprep.mubr.bf16.mxu0 0
        %3461 = vmatmul.mubr.bf16.gmra.mxu0 %v3240
        %v3462 = vpop.f32.mrf.mxu0
        %v3463 = vadd.f32 %v1260, %v3462
        %v3464 = vpop.f32.mrf.mxu0
        %v3465 = vadd.f32 %v1262, %v3464
        %v3466 = vpop.f32.mrf.mxu0
        %v3467 = vadd.f32 %v1264, %v3466
        %v3468 = vpop.f32.mrf.mxu0
        %v3469 = vadd.f32 %v1266, %v3468
        %3470 = vmatprep.mubr.bf16.mxu0 0
        %3471 = vmatmul.mubr.bf16.gmra.mxu0 %v3243
        %v3472 = vpop.f32.mrf.mxu0
        %v3473 = vadd.f32 %v1270, %v3472
        %v3474 = vpop.f32.mrf.mxu0
        %v3475 = vadd.f32 %v1272, %v3474
        %v3476 = vpop.f32.mrf.mxu0
        %v3477 = vadd.f32 %v1274, %v3476
        %v3478 = vpop.f32.mrf.mxu0
        %v3479 = vadd.f32 %v1276, %v3478
        %3480 = vmatprep.mubr.bf16.mxu0 0
        %3481 = vmatmul.mubr.bf16.gmra.mxu0 %v3246
        %v3482 = vpop.f32.mrf.mxu0
        %v3483 = vadd.f32 %v1280, %v3482
        %v3484 = vpop.f32.mrf.mxu0
        %v3485 = vadd.f32 %v1282, %v3484
        %v3486 = vpop.f32.mrf.mxu0
        %v3487 = vadd.f32 %v1284, %v3486
        %v3488 = vpop.f32.mrf.mxu0
        %v3489 = vadd.f32 %v1286, %v3488
        %3490 = vdwg.mxu0
        %3491 = vmatprep.subr.bf16.mxu0 0
        %3492 = vmatpush1.bf16.msra.mxu0 0
        %3493 = vmatprep.subr.bf16.mxu0 0
        %3494 = vmatpush1.bf16.msra.mxu0 0
        %3495 = vmatprep.subr.bf16.mxu0 0
        %3496 = vmatpush1.bf16.msra.mxu0 0
        %3497 = vmatprep.subr.bf16.mxu0 0
        %3498 = vmatpush1.bf16.msra.mxu0 0
        %3499 = vmatprep.subr.bf16.mxu0 0
        %3500 = vmatpush1.bf16.msra.mxu0 0
        %3501 = vmatprep.subr.bf16.mxu0 0
        %3502 = vmatpush1.bf16.msra.mxu0 0
        %3503 = vmatprep.subr.bf16.mxu0 0
        %3504 = vmatpush1.bf16.msra.mxu0 0
        %3505 = vmatprep.subr.bf16.mxu0 %v3270
        %3506 = vmatpush1.bf16.msra.mxu0 %v3267
        %3507 = vmatprep.subr.bf16.mxu0 0
        %3508 = vmatpush2.bf16.msra.mxu0 0
        %3509 = vmatprep.subr.bf16.mxu0 0
        %3510 = vmatpush2.bf16.msra.mxu0 0
        %3511 = vmatprep.subr.bf16.mxu0 0
        %3512 = vmatpush2.bf16.msra.mxu0 0
        %3513 = vmatprep.subr.bf16.mxu0 0
        %3514 = vmatpush2.bf16.msra.mxu0 0
        %3515 = vmatprep.subr.bf16.mxu0 0
        %3516 = vmatpush2.bf16.msra.mxu0 0
        %3517 = vmatprep.subr.bf16.mxu0 0
        %3518 = vmatpush2.bf16.msra.mxu0 0
        %3519 = vmatprep.subr.bf16.mxu0 0
        %3520 = vmatpush2.bf16.msra.mxu0 0
        %3521 = vmatprep.subr.bf16.mxu0 0
        %3522 = vmatpush2.bf16.msra.mxu0 0
        %3523 = vmatprep.mubr.bf16.mxu0 0
        %3524 = vmatmul.mubr.bf16.gmra.mxu0 %v3237
        %v3525 = vpop.f32.mrf.mxu0
        %v3526 = vadd.f32 %v1363, %v3525
        %v3527 = vpop.f32.mrf.mxu0
        %v3528 = vadd.f32 %v1365, %v3527
        %v3529 = vpop.f32.mrf.mxu0
        %v3530 = vadd.f32 %v1367, %v3529
        %v3531 = vpop.f32.mrf.mxu0
        %v3532 = vadd.f32 %v1369, %v3531
        %3533 = vmatprep.mubr.bf16.mxu0 0
        %3534 = vmatmul.mubr.bf16.gmra.mxu0 %v3240
        %v3535 = vpop.f32.mrf.mxu0
        %v3536 = vadd.f32 %v1373, %v3535
        %v3537 = vpop.f32.mrf.mxu0
        %v3538 = vadd.f32 %v1375, %v3537
        %v3539 = vpop.f32.mrf.mxu0
        %v3540 = vadd.f32 %v1377, %v3539
        %v3541 = vpop.f32.mrf.mxu0
        %v3542 = vadd.f32 %v1379, %v3541
        %3543 = vmatprep.mubr.bf16.mxu0 0
        %3544 = vmatmul.mubr.bf16.gmra.mxu0 %v3243
        %v3545 = vpop.f32.mrf.mxu0
        %v3546 = vadd.f32 %v1383, %v3545
        %v3547 = vpop.f32.mrf.mxu0
        %v3548 = vadd.f32 %v1385, %v3547
        %v3549 = vpop.f32.mrf.mxu0
        %v3550 = vadd.f32 %v1387, %v3549
        %v3551 = vpop.f32.mrf.mxu0
        %v3552 = vadd.f32 %v1389, %v3551
        %3553 = vmatprep.mubr.bf16.mxu0 0
        %3554 = vmatmul.mubr.bf16.gmra.mxu0 %v3246
        %v3555 = vpop.f32.mrf.mxu0
        %v3556 = vadd.f32 %v1393, %v3555
        %v3557 = vpop.f32.mrf.mxu0
        %v3558 = vadd.f32 %v1395, %v3557
        %v3559 = vpop.f32.mrf.mxu0
        %v3560 = vadd.f32 %v1397, %v3559
        %v3561 = vpop.f32.mrf.mxu0
        %v3562 = vadd.f32 %v1399, %v3561
        %3563 = vdwg.mxu0
        %s3564 = scalar_lea.vmem %s6, 64
        %v3565 = vld [vmem:[%s3564] sm:$0xff]
        %v3566 = vld [vmem:[%s3564 + $0x8] sm:$0xff]
        %v3567 = vld [vmem:[%s3564 + $0x10] sm:$0xff]
        %v3568 = vld [vmem:[%s3564 + $0x18] sm:$0xff]
        %v3569 = vld [vmem:[%s3564 + $0x20] sm:$0xff]
        %v3570 = vld [vmem:[%s3564 + $0x28] sm:$0xff]
        %v3571 = vld [vmem:[%s3564 + $0x30] sm:$0xff]
        %v3572 = vld [vmem:[%s3564 + $0x38] sm:$0xff]
        %3574 = vset.pattern.permute.xlu0 0
        %3575 = vperm.xlu0 %3574, %v3565
        %v3576 = vpop.permute.xlu0 %3575
        %3579 = vset.pattern.permute.xlu0 0
        %3580 = vperm.xlu0 %3579, %v3566
        %v3581 = vpop.permute.xlu0 %3580
        %3584 = vset.pattern.permute.xlu0 0
        %3585 = vperm.xlu0 %3584, %v3567
        %v3586 = vpop.permute.xlu0 %3585
        %3589 = vset.pattern.permute.xlu0 0
        %3590 = vperm.xlu0 %3589, %v3568
        %v3591 = vpop.permute.xlu0 %3590
        %3594 = vset.pattern.permute.xlu0 0
        %3595 = vperm.xlu0 %3594, %v3569
        %v3596 = vpop.permute.xlu0 %3595
        %3599 = vset.pattern.permute.xlu0 0
        %3600 = vperm.xlu0 %3599, %v3570
        %v3601 = vpop.permute.xlu0 %3600
        %3604 = vset.pattern.permute.xlu0 0
        %3605 = vperm.xlu0 %3604, %v3571
        %v3606 = vpop.permute.xlu0 %3605
        %3609 = vset.pattern.permute.xlu0 0
        %3610 = vperm.xlu0 %3609, %v3572
        %v3611 = vpop.permute.xlu0 %3610
        %v3613 = vadd.f32 %v3307, %v3576
        %v3614 = vadd.f32 %v3309, %v3576
        %v3615 = vadd.f32 %v3380, %v3576
        %v3616 = vadd.f32 %v3382, %v3576
        %v3617 = vadd.f32 %v3453, %v3576
        %v3618 = vadd.f32 %v3455, %v3576
        %v3619 = vadd.f32 %v3526, %v3576
        %v3620 = vadd.f32 %v3528, %v3576
        %v3621 = vadd.f32 %v3311, %v3581
        %v3622 = vadd.f32 %v3313, %v3581
        %v3623 = vadd.f32 %v3384, %v3581
        %v3624 = vadd.f32 %v3386, %v3581
        %v3625 = vadd.f32 %v3457, %v3581
        %v3626 = vadd.f32 %v3459, %v3581
        %v3627 = vadd.f32 %v3530, %v3581
        %v3628 = vadd.f32 %v3532, %v3581
        %v3629 = vadd.f32 %v3317, %v3586
        %v3630 = vadd.f32 %v3319, %v3586
        %v3631 = vadd.f32 %v3390, %v3586
        %v3632 = vadd.f32 %v3392, %v3586
        %v3633 = vadd.f32 %v3463, %v3586
        %v3634 = vadd.f32 %v3465, %v3586
        %v3635 = vadd.f32 %v3536, %v3586
        %v3636 = vadd.f32 %v3538, %v3586
        %v3637 = vadd.f32 %v3321, %v3591
        %v3638 = vadd.f32 %v3323, %v3591
        %v3639 = vadd.f32 %v3394, %v3591
        %v3640 = vadd.f32 %v3396, %v3591
        %v3641 = vadd.f32 %v3467, %v3591
        %v3642 = vadd.f32 %v3469, %v3591
        %v3643 = vadd.f32 %v3540, %v3591
        %v3644 = vadd.f32 %v3542, %v3591
        %v3645 = vadd.f32 %v3327, %v3596
        %v3646 = vadd.f32 %v3329, %v3596
        %v3647 = vadd.f32 %v3400, %v3596
        %v3648 = vadd.f32 %v3402, %v3596
        %v3649 = vadd.f32 %v3473, %v3596
        %v3650 = vadd.f32 %v3475, %v3596
        %v3651 = vadd.f32 %v3546, %v3596
        %v3652 = vadd.f32 %v3548, %v3596
        %v3653 = vadd.f32 %v3331, %v3601
        %v3654 = vadd.f32 %v3333, %v3601
        %v3655 = vadd.f32 %v3404, %v3601
        %v3656 = vadd.f32 %v3406, %v3601
        %v3657 = vadd.f32 %v3477, %v3601
        %v3658 = vadd.f32 %v3479, %v3601
        %v3659 = vadd.f32 %v3550, %v3601
        %v3660 = vadd.f32 %v3552, %v3601
        %v3661 = vadd.f32 %v3337, %v3606
        %v3662 = vadd.f32 %v3339, %v3606
        %v3663 = vadd.f32 %v3410, %v3606
        %v3664 = vadd.f32 %v3412, %v3606
        %v3665 = vadd.f32 %v3483, %v3606
        %v3666 = vadd.f32 %v3485, %v3606
        %v3667 = vadd.f32 %v3556, %v3606
        %v3668 = vadd.f32 %v3558, %v3606
        %v3669 = vadd.f32 %v3341, %v3611
        %v3670 = vadd.f32 %v3343, %v3611
        %v3671 = vadd.f32 %v3414, %v3611
        %v3672 = vadd.f32 %v3416, %v3611
        %v3673 = vadd.f32 %v3487, %v3611
        %v3674 = vadd.f32 %v3489, %v3611
        %v3675 = vadd.f32 %v3560, %v3611
        %v3676 = vadd.f32 %v3562, %v3611
        %v3677 = vmax.f32 %v3613, 0.0
        %v3678 = vmax.f32 %v3614, 0.0
        %v3679 = vmax.f32 %v3615, 0.0
        %v3680 = vmax.f32 %v3616, 0.0
        %v3681 = vmax.f32 %v3617, 0.0
        %v3682 = vmax.f32 %v3618, 0.0
        %v3683 = vmax.f32 %v3619, 0.0
        %v3684 = vmax.f32 %v3620, 0.0
        %v3685 = vmax.f32 %v3621, 0.0
        %v3686 = vmax.f32 %v3622, 0.0
        %v3687 = vmax.f32 %v3623, 0.0
        %v3688 = vmax.f32 %v3624, 0.0
        %v3689 = vmax.f32 %v3625, 0.0
        %v3690 = vmax.f32 %v3626, 0.0
        %v3691 = vmax.f32 %v3627, 0.0
        %v3692 = vmax.f32 %v3628, 0.0
        %v3693 = vmax.f32 %v3629, 0.0
        %v3694 = vmax.f32 %v3630, 0.0
        %v3695 = vmax.f32 %v3631, 0.0
        %v3696 = vmax.f32 %v3632, 0.0
        %v3697 = vmax.f32 %v3633, 0.0
        %v3698 = vmax.f32 %v3634, 0.0
        %v3699 = vmax.f32 %v3635, 0.0
        %v3700 = vmax.f32 %v3636, 0.0
        %v3701 = vmax.f32 %v3637, 0.0
        %v3702 = vmax.f32 %v3638, 0.0
        %v3703 = vmax.f32 %v3639, 0.0
        %v3704 = vmax.f32 %v3640, 0.0
        %v3705 = vmax.f32 %v3641, 0.0
        %v3706 = vmax.f32 %v3642, 0.0
        %v3707 = vmax.f32 %v3643, 0.0
        %v3708 = vmax.f32 %v3644, 0.0
        %v3709 = vmax.f32 %v3645, 0.0
        %v3710 = vmax.f32 %v3646, 0.0
        %v3711 = vmax.f32 %v3647, 0.0
        %v3712 = vmax.f32 %v3648, 0.0
        %v3713 = vmax.f32 %v3649, 0.0
        %v3714 = vmax.f32 %v3650, 0.0
        %v3715 = vmax.f32 %v3651, 0.0
        %v3716 = vmax.f32 %v3652, 0.0
        %v3717 = vmax.f32 %v3653, 0.0
        %v3718 = vmax.f32 %v3654, 0.0
        %v3719 = vmax.f32 %v3655, 0.0
        %v3720 = vmax.f32 %v3656, 0.0
        %v3721 = vmax.f32 %v3657, 0.0
        %v3722 = vmax.f32 %v3658, 0.0
        %v3723 = vmax.f32 %v3659, 0.0
        %v3724 = vmax.f32 %v3660, 0.0
        %v3725 = vmax.f32 %v3661, 0.0
        %v3726 = vmax.f32 %v3662, 0.0
        %v3727 = vmax.f32 %v3663, 0.0
        %v3728 = vmax.f32 %v3664, 0.0
        %v3729 = vmax.f32 %v3665, 0.0
        %v3730 = vmax.f32 %v3666, 0.0
        %v3731 = vmax.f32 %v3667, 0.0
        %v3732 = vmax.f32 %v3668, 0.0
        %v3733 = vmax.f32 %v3669, 0.0
        %v3734 = vmax.f32 %v3670, 0.0
        %v3735 = vmax.f32 %v3671, 0.0
        %v3736 = vmax.f32 %v3672, 0.0
        %v3737 = vmax.f32 %v3673, 0.0
        %v3738 = vmax.f32 %v3674, 0.0
        %v3739 = vmax.f32 %v3675, 0.0
        %v3740 = vmax.f32 %v3676, 0.0
        %v3741 = vpack.c.bf16 %v3685, %v3677
        %v3742 = vpack.c.bf16 %v3686, %v3678
        %v3743 = vpack.c.bf16 %v3687, %v3679
        %v3744 = vpack.c.bf16 %v3688, %v3680
        %v3745 = vpack.c.bf16 %v3689, %v3681
        %v3746 = vpack.c.bf16 %v3690, %v3682
        %v3747 = vpack.c.bf16 %v3691, %v3683
        %v3748 = vpack.c.bf16 %v3692, %v3684
        %v3749 = vpack.c.bf16 %v3701, %v3693
        %v3750 = vpack.c.bf16 %v3702, %v3694
        %v3751 = vpack.c.bf16 %v3703, %v3695
        %v3752 = vpack.c.bf16 %v3704, %v3696
        %v3753 = vpack.c.bf16 %v3705, %v3697
        %v3754 = vpack.c.bf16 %v3706, %v3698
        %v3755 = vpack.c.bf16 %v3707, %v3699
        %v3756 = vpack.c.bf16 %v3708, %v3700
        %v3757 = vpack.c.bf16 %v3717, %v3709
        %v3758 = vpack.c.bf16 %v3718, %v3710
        %v3759 = vpack.c.bf16 %v3719, %v3711
        %v3760 = vpack.c.bf16 %v3720, %v3712
        %v3761 = vpack.c.bf16 %v3721, %v3713
        %v3762 = vpack.c.bf16 %v3722, %v3714
        %v3763 = vpack.c.bf16 %v3723, %v3715
        %v3764 = vpack.c.bf16 %v3724, %v3716
        %v3765 = vpack.c.bf16 %v3733, %v3725
        %v3766 = vpack.c.bf16 %v3734, %v3726
        %v3767 = vpack.c.bf16 %v3735, %v3727
        %v3768 = vpack.c.bf16 %v3736, %v3728
        %v3769 = vpack.c.bf16 %v3737, %v3729
        %v3770 = vpack.c.bf16 %v3738, %v3730
        %v3771 = vpack.c.bf16 %v3739, %v3731
        %v3772 = vpack.c.bf16 %v3740, %v3732
        %s3773 = scalar_lea.vmem %s7, 32
        %v3774 = vld [vmem:[%s3773] sm:$0xf]
        %v3775 = vld [vmem:[%s3773 + $0x4] sm:$0xf]
        %v3776 = vld [vmem:[%s3773 + $0x8] sm:$0xf]
        %v3777 = vld [vmem:[%s3773 + $0xc] sm:$0xf]
        %v3778 = vld [vmem:[%s3773 + $0x10] sm:$0xf]
        %v3779 = vld [vmem:[%s3773 + $0x14] sm:$0xf]
        %v3780 = vld [vmem:[%s3773 + $0x18] sm:$0xf]
        %v3781 = vld [vmem:[%s3773 + $0x1c] sm:$0xf]
        %s3782 = scalar_lea.vmem %s8, 64
        %v3783 = vld [vmem:[%s3782] sm:$0xff]
        %v3784 = vld [vmem:[%s3782 + $0x8] sm:$0xff]
        %v3785 = vld [vmem:[%s3782 + $0x10] sm:$0xff]
        %v3786 = vld [vmem:[%s3782 + $0x18] sm:$0xff]
        %v3787 = vld [vmem:[%s3782 + $0x20] sm:$0xff]
        %v3788 = vld [vmem:[%s3782 + $0x28] sm:$0xff]
        %v3789 = vld [vmem:[%s3782 + $0x30] sm:$0xff]
        %v3790 = vld [vmem:[%s3782 + $0x38] sm:$0xff]
        %3792 = vset.pattern.permute.xlu0 0
        %3793 = vperm.xlu0 %3792, %v3783
        %v3794 = vpop.permute.xlu0 %3793
        %3797 = vset.pattern.permute.xlu0 0
        %3798 = vperm.xlu0 %3797, %v3784
        %v3799 = vpop.permute.xlu0 %3798
        %3802 = vset.pattern.permute.xlu0 0
        %3803 = vperm.xlu0 %3802, %v3785
        %v3804 = vpop.permute.xlu0 %3803
        %3807 = vset.pattern.permute.xlu0 0
        %3808 = vperm.xlu0 %3807, %v3786
        %v3809 = vpop.permute.xlu0 %3808
        %3812 = vset.pattern.permute.xlu0 0
        %3813 = vperm.xlu0 %3812, %v3787
        %v3814 = vpop.permute.xlu0 %3813
        %3817 = vset.pattern.permute.xlu0 0
        %3818 = vperm.xlu0 %3817, %v3788
        %v3819 = vpop.permute.xlu0 %3818
        %3822 = vset.pattern.permute.xlu0 0
        %3823 = vperm.xlu0 %3822, %v3789
        %v3824 = vpop.permute.xlu0 %3823
        %3827 = vset.pattern.permute.xlu0 0
        %3828 = vperm.xlu0 %3827, %v3790
        %v3829 = vpop.permute.xlu0 %3828
        %v3839 = vunpack.c.l.b16 %v3774
        %v3840 = vunpack.c.l.b16 %v3775
        %v3841 = vunpack.c.l.b16 %v3776
        %v3842 = vunpack.c.l.b16 %v3777
        %v3843 = vunpack.c.l.b16 %v3778
        %v3844 = vunpack.c.l.b16 %v3779
        %v3845 = vunpack.c.l.b16 %v3780
        %v3846 = vunpack.c.l.b16 %v3781
        %v3847 = vpack.c.b16 %v3840, %v3839
        %v3848 = vpack.c.b16 %v3842, %v3841
        %v3849 = vpack.c.b16 %v3844, %v3843
        %v3850 = vpack.c.b16 %v3846, %v3845
        %v3852 = vsel %vm2051, %v3847, 0
        %v3855 = vsel %vm2051, %v3848, 0
        %v3858 = vsel %vm2051, %v3849, 0
        %v3861 = vsel %vm2051, %v3850, 0
        %3863 = vmatprep.subr.bf16.mxu0 0
        %3864 = vmatpush1.bf16.msra.mxu0 0
        %3865 = vmatprep.subr.bf16.mxu0 0
        %3866 = vmatpush1.bf16.msra.mxu0 0
        %3867 = vmatprep.subr.bf16.mxu0 0
        %3868 = vmatpush1.bf16.msra.mxu0 0
        %3869 = vmatprep.subr.bf16.mxu0 0
        %3870 = vmatpush1.bf16.msra.mxu0 0
        %3871 = vmatprep.subr.bf16.mxu0 %v3766
        %3872 = vmatpush1.bf16.msra.mxu0 %v3765
        %3873 = vmatprep.subr.bf16.mxu0 %v3758
        %3874 = vmatpush1.bf16.msra.mxu0 %v3757
        %3875 = vmatprep.subr.bf16.mxu0 %v3750
        %3876 = vmatpush1.bf16.msra.mxu0 %v3749
        %3877 = vmatprep.subr.bf16.mxu0 %v3742
        %3878 = vmatpush1.bf16.msra.mxu0 %v3741
        %3879 = vmatprep.subr.bf16.mxu0 0
        %3880 = vmatpush2.bf16.msra.mxu0 0
        %3881 = vmatprep.subr.bf16.mxu0 0
        %3882 = vmatpush2.bf16.msra.mxu0 0
        %3883 = vmatprep.subr.bf16.mxu0 0
        %3884 = vmatpush2.bf16.msra.mxu0 0
        %3885 = vmatprep.subr.bf16.mxu0 0
        %3886 = vmatpush2.bf16.msra.mxu0 0
        %3887 = vmatprep.subr.bf16.mxu0 0
        %3888 = vmatpush2.bf16.msra.mxu0 0
        %3889 = vmatprep.subr.bf16.mxu0 0
        %3890 = vmatpush2.bf16.msra.mxu0 0
        %3891 = vmatprep.subr.bf16.mxu0 0
        %3892 = vmatpush2.bf16.msra.mxu0 0
        %3893 = vmatprep.subr.bf16.mxu0 0
        %3894 = vmatpush2.bf16.msra.mxu0 0
        %3895 = vmatprep.mubr.bf16.mxu0 0
        %3896 = vmatmul.mubr.bf16.gmra.mxu0 %v3852
        %v3897 = vpop.f32.mrf.mxu0
        %v3898 = vadd.f32 %v3794, %v3897
        %v3899 = vpop.f32.mrf.mxu0
        %v3900 = vadd.f32 %v3794, %v3899
        %v3901 = vpop.f32.mrf.mxu0
        %v3902 = vadd.f32 %v3799, %v3901
        %v3903 = vpop.f32.mrf.mxu0
        %v3904 = vadd.f32 %v3799, %v3903
        %3905 = vmatprep.mubr.bf16.mxu0 0
        %3906 = vmatmul.mubr.bf16.gmra.mxu0 %v3855
        %v3907 = vpop.f32.mrf.mxu0
        %v3908 = vadd.f32 %v3804, %v3907
        %v3909 = vpop.f32.mrf.mxu0
        %v3910 = vadd.f32 %v3804, %v3909
        %v3911 = vpop.f32.mrf.mxu0
        %v3912 = vadd.f32 %v3809, %v3911
        %v3913 = vpop.f32.mrf.mxu0
        %v3914 = vadd.f32 %v3809, %v3913
        %3915 = vmatprep.mubr.bf16.mxu0 0
        %3916 = vmatmul.mubr.bf16.gmra.mxu0 %v3858
        %v3917 = vpop.f32.mrf.mxu0
        %v3918 = vadd.f32 %v3814, %v3917
        %v3919 = vpop.f32.mrf.mxu0
        %v3920 = vadd.f32 %v3814, %v3919
        %v3921 = vpop.f32.mrf.mxu0
        %v3922 = vadd.f32 %v3819, %v3921
        %v3923 = vpop.f32.mrf.mxu0
        %v3924 = vadd.f32 %v3819, %v3923
        %3925 = vmatprep.mubr.bf16.mxu0 0
        %3926 = vmatmul.mubr.bf16.gmra.mxu0 %v3861
        %v3927 = vpop.f32.mrf.mxu0
        %v3928 = vadd.f32 %v3824, %v3927
        %v3929 = vpop.f32.mrf.mxu0
        %v3930 = vadd.f32 %v3824, %v3929
        %v3931 = vpop.f32.mrf.mxu0
        %v3932 = vadd.f32 %v3829, %v3931
        %v3933 = vpop.f32.mrf.mxu0
        %v3934 = vadd.f32 %v3829, %v3933
        %3935 = vdwg.mxu0
        %3936 = vmatprep.subr.bf16.mxu0 0
        %3937 = vmatpush1.bf16.msra.mxu0 0
        %3938 = vmatprep.subr.bf16.mxu0 0
        %3939 = vmatpush1.bf16.msra.mxu0 0
        %3940 = vmatprep.subr.bf16.mxu0 0
        %3941 = vmatpush1.bf16.msra.mxu0 0
        %3942 = vmatprep.subr.bf16.mxu0 0
        %3943 = vmatpush1.bf16.msra.mxu0 0
        %3944 = vmatprep.subr.bf16.mxu0 %v3768
        %3945 = vmatpush1.bf16.msra.mxu0 %v3767
        %3946 = vmatprep.subr.bf16.mxu0 %v3760
        %3947 = vmatpush1.bf16.msra.mxu0 %v3759
        %3948 = vmatprep.subr.bf16.mxu0 %v3752
        %3949 = vmatpush1.bf16.msra.mxu0 %v3751
        %3950 = vmatprep.subr.bf16.mxu0 %v3744
        %3951 = vmatpush1.bf16.msra.mxu0 %v3743
        %3952 = vmatprep.subr.bf16.mxu0 0
        %3953 = vmatpush2.bf16.msra.mxu0 0
        %3954 = vmatprep.subr.bf16.mxu0 0
        %3955 = vmatpush2.bf16.msra.mxu0 0
        %3956 = vmatprep.subr.bf16.mxu0 0
        %3957 = vmatpush2.bf16.msra.mxu0 0
        %3958 = vmatprep.subr.bf16.mxu0 0
        %3959 = vmatpush2.bf16.msra.mxu0 0
        %3960 = vmatprep.subr.bf16.mxu0 0
        %3961 = vmatpush2.bf16.msra.mxu0 0
        %3962 = vmatprep.subr.bf16.mxu0 0
        %3963 = vmatpush2.bf16.msra.mxu0 0
        %3964 = vmatprep.subr.bf16.mxu0 0
        %3965 = vmatpush2.bf16.msra.mxu0 0
        %3966 = vmatprep.subr.bf16.mxu0 0
        %3967 = vmatpush2.bf16.msra.mxu0 0
        %3968 = vmatprep.mubr.bf16.mxu0 0
        %3969 = vmatmul.mubr.bf16.gmra.mxu0 %v3852
        %v3970 = vpop.f32.mrf.mxu0
        %v3971 = vadd.f32 %v3794, %v3970
        %v3972 = vpop.f32.mrf.mxu0
        %v3973 = vadd.f32 %v3794, %v3972
        %v3974 = vpop.f32.mrf.mxu0
        %v3975 = vadd.f32 %v3799, %v3974
        %v3976 = vpop.f32.mrf.mxu0
        %v3977 = vadd.f32 %v3799, %v3976
        %3978 = vmatprep.mubr.bf16.mxu0 0
        %3979 = vmatmul.mubr.bf16.gmra.mxu0 %v3855
        %v3980 = vpop.f32.mrf.mxu0
        %v3981 = vadd.f32 %v3804, %v3980
        %v3982 = vpop.f32.mrf.mxu0
        %v3983 = vadd.f32 %v3804, %v3982
        %v3984 = vpop.f32.mrf.mxu0
        %v3985 = vadd.f32 %v3809, %v3984
        %v3986 = vpop.f32.mrf.mxu0
        %v3987 = vadd.f32 %v3809, %v3986
        %3988 = vmatprep.mubr.bf16.mxu0 0
        %3989 = vmatmul.mubr.bf16.gmra.mxu0 %v3858
        %v3990 = vpop.f32.mrf.mxu0
        %v3991 = vadd.f32 %v3814, %v3990
        %v3992 = vpop.f32.mrf.mxu0
        %v3993 = vadd.f32 %v3814, %v3992
        %v3994 = vpop.f32.mrf.mxu0
        %v3995 = vadd.f32 %v3819, %v3994
        %v3996 = vpop.f32.mrf.mxu0
        %v3997 = vadd.f32 %v3819, %v3996
        %3998 = vmatprep.mubr.bf16.mxu0 0
        %3999 = vmatmul.mubr.bf16.gmra.mxu0 %v3861
        %v4000 = vpop.f32.mrf.mxu0
        %v4001 = vadd.f32 %v3824, %v4000
        %v4002 = vpop.f32.mrf.mxu0
        %v4003 = vadd.f32 %v3824, %v4002
        %v4004 = vpop.f32.mrf.mxu0
        %v4005 = vadd.f32 %v3829, %v4004
        %v4006 = vpop.f32.mrf.mxu0
        %v4007 = vadd.f32 %v3829, %v4006
        %4008 = vdwg.mxu0
        %4009 = vmatprep.subr.bf16.mxu0 0
        %4010 = vmatpush1.bf16.msra.mxu0 0
        %4011 = vmatprep.subr.bf16.mxu0 0
        %4012 = vmatpush1.bf16.msra.mxu0 0
        %4013 = vmatprep.subr.bf16.mxu0 0
        %4014 = vmatpush1.bf16.msra.mxu0 0
        %4015 = vmatprep.subr.bf16.mxu0 0
        %4016 = vmatpush1.bf16.msra.mxu0 0
        %4017 = vmatprep.subr.bf16.mxu0 %v3770
        %4018 = vmatpush1.bf16.msra.mxu0 %v3769
        %4019 = vmatprep.subr.bf16.mxu0 %v3762
        %4020 = vmatpush1.bf16.msra.mxu0 %v3761
        %4021 = vmatprep.subr.bf16.mxu0 %v3754
        %4022 = vmatpush1.bf16.msra.mxu0 %v3753
        %4023 = vmatprep.subr.bf16.mxu0 %v3746
        %4024 = vmatpush1.bf16.msra.mxu0 %v3745
        %4025 = vmatprep.subr.bf16.mxu0 0
        %4026 = vmatpush2.bf16.msra.mxu0 0
        %4027 = vmatprep.subr.bf16.mxu0 0
        %4028 = vmatpush2.bf16.msra.mxu0 0
        %4029 = vmatprep.subr.bf16.mxu0 0
        %4030 = vmatpush2.bf16.msra.mxu0 0
        %4031 = vmatprep.subr.bf16.mxu0 0
        %4032 = vmatpush2.bf16.msra.mxu0 0
        %4033 = vmatprep.subr.bf16.mxu0 0
        %4034 = vmatpush2.bf16.msra.mxu0 0
        %4035 = vmatprep.subr.bf16.mxu0 0
        %4036 = vmatpush2.bf16.msra.mxu0 0
        %4037 = vmatprep.subr.bf16.mxu0 0
        %4038 = vmatpush2.bf16.msra.mxu0 0
        %4039 = vmatprep.subr.bf16.mxu0 0
        %4040 = vmatpush2.bf16.msra.mxu0 0
        %4041 = vmatprep.mubr.bf16.mxu0 0
        %4042 = vmatmul.mubr.bf16.gmra.mxu0 %v3852
        %v4043 = vpop.f32.mrf.mxu0
        %v4044 = vadd.f32 %v3794, %v4043
        %v4045 = vpop.f32.mrf.mxu0
        %v4046 = vadd.f32 %v3794, %v4045
        %v4047 = vpop.f32.mrf.mxu0
        %v4048 = vadd.f32 %v3799, %v4047
        %v4049 = vpop.f32.mrf.mxu0
        %v4050 = vadd.f32 %v3799, %v4049
        %4051 = vmatprep.mubr.bf16.mxu0 0
        %4052 = vmatmul.mubr.bf16.gmra.mxu0 %v3855
        %v4053 = vpop.f32.mrf.mxu0
        %v4054 = vadd.f32 %v3804, %v4053
        %v4055 = vpop.f32.mrf.mxu0
        %v4056 = vadd.f32 %v3804, %v4055
        %v4057 = vpop.f32.mrf.mxu0
        %v4058 = vadd.f32 %v3809, %v4057
        %v4059 = vpop.f32.mrf.mxu0
        %v4060 = vadd.f32 %v3809, %v4059
        %4061 = vmatprep.mubr.bf16.mxu0 0
        %4062 = vmatmul.mubr.bf16.gmra.mxu0 %v3858
        %v4063 = vpop.f32.mrf.mxu0
        %v4064 = vadd.f32 %v3814, %v4063
        %v4065 = vpop.f32.mrf.mxu0
        %v4066 = vadd.f32 %v3814, %v4065
        %v4067 = vpop.f32.mrf.mxu0
        %v4068 = vadd.f32 %v3819, %v4067
        %v4069 = vpop.f32.mrf.mxu0
        %v4070 = vadd.f32 %v3819, %v4069
        %4071 = vmatprep.mubr.bf16.mxu0 0
        %4072 = vmatmul.mubr.bf16.gmra.mxu0 %v3861
        %v4073 = vpop.f32.mrf.mxu0
        %v4074 = vadd.f32 %v3824, %v4073
        %v4075 = vpop.f32.mrf.mxu0
        %v4076 = vadd.f32 %v3824, %v4075
        %v4077 = vpop.f32.mrf.mxu0
        %v4078 = vadd.f32 %v3829, %v4077
        %v4079 = vpop.f32.mrf.mxu0
        %v4080 = vadd.f32 %v3829, %v4079
        %4081 = vdwg.mxu0
        %4082 = vmatprep.subr.bf16.mxu0 0
        %4083 = vmatpush1.bf16.msra.mxu0 0
        %4084 = vmatprep.subr.bf16.mxu0 0
        %4085 = vmatpush1.bf16.msra.mxu0 0
        %4086 = vmatprep.subr.bf16.mxu0 0
        %4087 = vmatpush1.bf16.msra.mxu0 0
        %4088 = vmatprep.subr.bf16.mxu0 0
        %4089 = vmatpush1.bf16.msra.mxu0 0
        %4090 = vmatprep.subr.bf16.mxu0 %v3772
        %4091 = vmatpush1.bf16.msra.mxu0 %v3771
        %4092 = vmatprep.subr.bf16.mxu0 %v3764
        %4093 = vmatpush1.bf16.msra.mxu0 %v3763
        %4094 = vmatprep.subr.bf16.mxu0 %v3756
        %4095 = vmatpush1.bf16.msra.mxu0 %v3755
        %4096 = vmatprep.subr.bf16.mxu0 %v3748
        %4097 = vmatpush1.bf16.msra.mxu0 %v3747
        %4098 = vmatprep.subr.bf16.mxu0 0
        %4099 = vmatpush2.bf16.msra.mxu0 0
        %4100 = vmatprep.subr.bf16.mxu0 0
        %4101 = vmatpush2.bf16.msra.mxu0 0
        %4102 = vmatprep.subr.bf16.mxu0 0
        %4103 = vmatpush2.bf16.msra.mxu0 0
        %4104 = vmatprep.subr.bf16.mxu0 0
        %4105 = vmatpush2.bf16.msra.mxu0 0
        %4106 = vmatprep.subr.bf16.mxu0 0
        %4107 = vmatpush2.bf16.msra.mxu0 0
        %4108 = vmatprep.subr.bf16.mxu0 0
        %4109 = vmatpush2.bf16.msra.mxu0 0
        %4110 = vmatprep.subr.bf16.mxu0 0
        %4111 = vmatpush2.bf16.msra.mxu0 0
        %4112 = vmatprep.subr.bf16.mxu0 0
        %4113 = vmatpush2.bf16.msra.mxu0 0
        %4114 = vmatprep.mubr.bf16.mxu0 0
        %4115 = vmatmul.mubr.bf16.gmra.mxu0 %v3852
        %v4116 = vpop.f32.mrf.mxu0
        %v4117 = vadd.f32 %v3794, %v4116
        %v4118 = vpop.f32.mrf.mxu0
        %v4119 = vadd.f32 %v3794, %v4118
        %v4120 = vpop.f32.mrf.mxu0
        %v4121 = vadd.f32 %v3799, %v4120
        %v4122 = vpop.f32.mrf.mxu0
        %v4123 = vadd.f32 %v3799, %v4122
        %4124 = vmatprep.mubr.bf16.mxu0 0
        %4125 = vmatmul.mubr.bf16.gmra.mxu0 %v3855
        %v4126 = vpop.f32.mrf.mxu0
        %v4127 = vadd.f32 %v3804, %v4126
        %v4128 = vpop.f32.mrf.mxu0
        %v4129 = vadd.f32 %v3804, %v4128
        %v4130 = vpop.f32.mrf.mxu0
        %v4131 = vadd.f32 %v3809, %v4130
        %v4132 = vpop.f32.mrf.mxu0
        %v4133 = vadd.f32 %v3809, %v4132
        %4134 = vmatprep.mubr.bf16.mxu0 0
        %4135 = vmatmul.mubr.bf16.gmra.mxu0 %v3858
        %v4136 = vpop.f32.mrf.mxu0
        %v4137 = vadd.f32 %v3814, %v4136
        %v4138 = vpop.f32.mrf.mxu0
        %v4139 = vadd.f32 %v3814, %v4138
        %v4140 = vpop.f32.mrf.mxu0
        %v4141 = vadd.f32 %v3819, %v4140
        %v4142 = vpop.f32.mrf.mxu0
        %v4143 = vadd.f32 %v3819, %v4142
        %4144 = vmatprep.mubr.bf16.mxu0 0
        %4145 = vmatmul.mubr.bf16.gmra.mxu0 %v3861
        %v4146 = vpop.f32.mrf.mxu0
        %v4147 = vadd.f32 %v3824, %v4146
        %v4148 = vpop.f32.mrf.mxu0
        %v4149 = vadd.f32 %v3824, %v4148
        %v4150 = vpop.f32.mrf.mxu0
        %v4151 = vadd.f32 %v3829, %v4150
        %v4152 = vpop.f32.mrf.mxu0
        %v4153 = vadd.f32 %v3829, %v4152
        %4154 = vdwg.mxu0
        %v4155 = vmax.f32 %v3898, 0.0
        %v4156 = vmax.f32 %v3900, 0.0
        %v4157 = vmax.f32 %v3971, 0.0
        %v4158 = vmax.f32 %v3973, 0.0
        %v4159 = vmax.f32 %v4044, 0.0
        %v4160 = vmax.f32 %v4046, 0.0
        %v4161 = vmax.f32 %v4117, 0.0
        %v4162 = vmax.f32 %v4119, 0.0
        %v4163 = vmax.f32 %v3902, 0.0
        %v4164 = vmax.f32 %v3904, 0.0
        %v4165 = vmax.f32 %v3975, 0.0
        %v4166 = vmax.f32 %v3977, 0.0
        %v4167 = vmax.f32 %v4048, 0.0
        %v4168 = vmax.f32 %v4050, 0.0
        %v4169 = vmax.f32 %v4121, 0.0
        %v4170 = vmax.f32 %v4123, 0.0
        %v4171 = vmax.f32 %v3908, 0.0
        %v4172 = vmax.f32 %v3910, 0.0
        %v4173 = vmax.f32 %v3981, 0.0
        %v4174 = vmax.f32 %v3983, 0.0
        %v4175 = vmax.f32 %v4054, 0.0
        %v4176 = vmax.f32 %v4056, 0.0
        %v4177 = vmax.f32 %v4127, 0.0
        %v4178 = vmax.f32 %v4129, 0.0
        %v4179 = vmax.f32 %v3912, 0.0
        %v4180 = vmax.f32 %v3914, 0.0
        %v4181 = vmax.f32 %v3985, 0.0
        %v4182 = vmax.f32 %v3987, 0.0
        %v4183 = vmax.f32 %v4058, 0.0
        %v4184 = vmax.f32 %v4060, 0.0
        %v4185 = vmax.f32 %v4131, 0.0
        %v4186 = vmax.f32 %v4133, 0.0
        %v4187 = vmax.f32 %v3918, 0.0
        %v4188 = vmax.f32 %v3920, 0.0
        %v4189 = vmax.f32 %v3991, 0.0
        %v4190 = vmax.f32 %v3993, 0.0
        %v4191 = vmax.f32 %v4064, 0.0
        %v4192 = vmax.f32 %v4066, 0.0
        %v4193 = vmax.f32 %v4137, 0.0
        %v4194 = vmax.f32 %v4139, 0.0
        %v4195 = vmax.f32 %v3922, 0.0
        %v4196 = vmax.f32 %v3924, 0.0
        %v4197 = vmax.f32 %v3995, 0.0
        %v4198 = vmax.f32 %v3997, 0.0
        %v4199 = vmax.f32 %v4068, 0.0
        %v4200 = vmax.f32 %v4070, 0.0
        %v4201 = vmax.f32 %v4141, 0.0
        %v4202 = vmax.f32 %v4143, 0.0
        %v4203 = vmax.f32 %v3928, 0.0
        %v4204 = vmax.f32 %v3930, 0.0
        %v4205 = vmax.f32 %v4001, 0.0
        %v4206 = vmax.f32 %v4003, 0.0
        %v4207 = vmax.f32 %v4074, 0.0
        %v4208 = vmax.f32 %v4076, 0.0
        %v4209 = vmax.f32 %v4147, 0.0
        %v4210 = vmax.f32 %v4149, 0.0
        %v4211 = vmax.f32 %v3932, 0.0
        %v4212 = vmax.f32 %v3934, 0.0
        %v4213 = vmax.f32 %v4005, 0.0
        %v4214 = vmax.f32 %v4007, 0.0
        %v4215 = vmax.f32 %v4078, 0.0
        %v4216 = vmax.f32 %v4080, 0.0
        %v4217 = vmax.f32 %v4151, 0.0
        %v4218 = vmax.f32 %v4153, 0.0
        %v4219 = vpack.c.bf16 %v4163, %v4155
        %v4220 = vpack.c.bf16 %v4164, %v4156
        %v4221 = vpack.c.bf16 %v4165, %v4157
        %v4222 = vpack.c.bf16 %v4166, %v4158
        %v4223 = vpack.c.bf16 %v4167, %v4159
        %v4224 = vpack.c.bf16 %v4168, %v4160
        %v4225 = vpack.c.bf16 %v4169, %v4161
        %v4226 = vpack.c.bf16 %v4170, %v4162
        %v4227 = vpack.c.bf16 %v4179, %v4171
        %v4228 = vpack.c.bf16 %v4180, %v4172
        %v4229 = vpack.c.bf16 %v4181, %v4173
        %v4230 = vpack.c.bf16 %v4182, %v4174
        %v4231 = vpack.c.bf16 %v4183, %v4175
        %v4232 = vpack.c.bf16 %v4184, %v4176
        %v4233 = vpack.c.bf16 %v4185, %v4177
        %v4234 = vpack.c.bf16 %v4186, %v4178
        %v4235 = vpack.c.bf16 %v4195, %v4187
        %v4236 = vpack.c.bf16 %v4196, %v4188
        %v4237 = vpack.c.bf16 %v4197, %v4189
        %v4238 = vpack.c.bf16 %v4198, %v4190
        %v4239 = vpack.c.bf16 %v4199, %v4191
        %v4240 = vpack.c.bf16 %v4200, %v4192
        %v4241 = vpack.c.bf16 %v4201, %v4193
        %v4242 = vpack.c.bf16 %v4202, %v4194
        %v4243 = vpack.c.bf16 %v4211, %v4203
        %v4244 = vpack.c.bf16 %v4212, %v4204
        %v4245 = vpack.c.bf16 %v4213, %v4205
        %v4246 = vpack.c.bf16 %v4214, %v4206
        %v4247 = vpack.c.bf16 %v4215, %v4207
        %v4248 = vpack.c.bf16 %v4216, %v4208
        %v4249 = vpack.c.bf16 %v4217, %v4209
        %v4250 = vpack.c.bf16 %v4218, %v4210
        %s4251 = scalar_lea.vmem %s9, 32
        %v4252 = vld [vmem:[%s4251] sm:$0xf]
        %v4253 = vld [vmem:[%s4251 + $0x4] sm:$0xf]
        %v4254 = vld [vmem:[%s4251 + $0x8] sm:$0xf]
        %v4255 = vld [vmem:[%s4251 + $0xc] sm:$0xf]
        %v4256 = vld [vmem:[%s4251 + $0x10] sm:$0xf]
        %v4257 = vld [vmem:[%s4251 + $0x14] sm:$0xf]
        %v4258 = vld [vmem:[%s4251 + $0x18] sm:$0xf]
        %v4259 = vld [vmem:[%s4251 + $0x1c] sm:$0xf]
        %s4260 = scalar_lea.vmem %s10, 64
        %v4261 = vld [vmem:[%s4260] sm:$0xff]
        %v4262 = vld [vmem:[%s4260 + $0x8] sm:$0xff]
        %v4263 = vld [vmem:[%s4260 + $0x10] sm:$0xff]
        %v4264 = vld [vmem:[%s4260 + $0x18] sm:$0xff]
        %v4265 = vld [vmem:[%s4260 + $0x20] sm:$0xff]
        %v4266 = vld [vmem:[%s4260 + $0x28] sm:$0xff]
        %v4267 = vld [vmem:[%s4260 + $0x30] sm:$0xff]
        %v4268 = vld [vmem:[%s4260 + $0x38] sm:$0xff]
        %4270 = vset.pattern.permute.xlu0 0
        %4271 = vperm.xlu0 %4270, %v4261
        %v4272 = vpop.permute.xlu0 %4271
        %4275 = vset.pattern.permute.xlu0 0
        %4276 = vperm.xlu0 %4275, %v4262
        %v4277 = vpop.permute.xlu0 %4276
        %4280 = vset.pattern.permute.xlu0 0
        %4281 = vperm.xlu0 %4280, %v4263
        %v4282 = vpop.permute.xlu0 %4281
        %4285 = vset.pattern.permute.xlu0 0
        %4286 = vperm.xlu0 %4285, %v4264
        %v4287 = vpop.permute.xlu0 %4286
        %4290 = vset.pattern.permute.xlu0 0
        %4291 = vperm.xlu0 %4290, %v4265
        %v4292 = vpop.permute.xlu0 %4291
        %4295 = vset.pattern.permute.xlu0 0
        %4296 = vperm.xlu0 %4295, %v4266
        %v4297 = vpop.permute.xlu0 %4296
        %4300 = vset.pattern.permute.xlu0 0
        %4301 = vperm.xlu0 %4300, %v4267
        %v4302 = vpop.permute.xlu0 %4301
        %4305 = vset.pattern.permute.xlu0 0
        %4306 = vperm.xlu0 %4305, %v4268
        %v4307 = vpop.permute.xlu0 %4306
        %v4317 = vunpack.c.l.b16 %v4252
        %v4318 = vunpack.c.l.b16 %v4253
        %v4319 = vunpack.c.l.b16 %v4254
        %v4320 = vunpack.c.l.b16 %v4255
        %v4321 = vunpack.c.l.b16 %v4256
        %v4322 = vunpack.c.l.b16 %v4257
        %v4323 = vunpack.c.l.b16 %v4258
        %v4324 = vunpack.c.l.b16 %v4259
        %v4325 = vpack.c.b16 %v4318, %v4317
        %v4326 = vpack.c.b16 %v4320, %v4319
        %v4327 = vpack.c.b16 %v4322, %v4321
        %v4328 = vpack.c.b16 %v4324, %v4323
        %v4330 = vsel %vm2051, %v4325, 0
        %v4333 = vsel %vm2051, %v4326, 0
        %v4336 = vsel %vm2051, %v4327, 0
        %v4339 = vsel %vm2051, %v4328, 0
        %4341 = vmatprep.subr.bf16.mxu0 0
        %4342 = vmatpush1.bf16.msra.mxu0 0
        %4343 = vmatprep.subr.bf16.mxu0 0
        %4344 = vmatpush1.bf16.msra.mxu0 0
        %4345 = vmatprep.subr.bf16.mxu0 0
        %4346 = vmatpush1.bf16.msra.mxu0 0
        %4347 = vmatprep.subr.bf16.mxu0 0
        %4348 = vmatpush1.bf16.msra.mxu0 0
        %4349 = vmatprep.subr.bf16.mxu0 %v4244
        %4350 = vmatpush1.bf16.msra.mxu0 %v4243
        %4351 = vmatprep.subr.bf16.mxu0 %v4236
        %4352 = vmatpush1.bf16.msra.mxu0 %v4235
        %4353 = vmatprep.subr.bf16.mxu0 %v4228
        %4354 = vmatpush1.bf16.msra.mxu0 %v4227
        %4355 = vmatprep.subr.bf16.mxu0 %v4220
        %4356 = vmatpush1.bf16.msra.mxu0 %v4219
        %4357 = vmatprep.subr.bf16.mxu0 0
        %4358 = vmatpush2.bf16.msra.mxu0 0
        %4359 = vmatprep.subr.bf16.mxu0 0
        %4360 = vmatpush2.bf16.msra.mxu0 0
        %4361 = vmatprep.subr.bf16.mxu0 0
        %4362 = vmatpush2.bf16.msra.mxu0 0
        %4363 = vmatprep.subr.bf16.mxu0 0
        %4364 = vmatpush2.bf16.msra.mxu0 0
        %4365 = vmatprep.subr.bf16.mxu0 0
        %4366 = vmatpush2.bf16.msra.mxu0 0
        %4367 = vmatprep.subr.bf16.mxu0 0
        %4368 = vmatpush2.bf16.msra.mxu0 0
        %4369 = vmatprep.subr.bf16.mxu0 0
        %4370 = vmatpush2.bf16.msra.mxu0 0
        %4371 = vmatprep.subr.bf16.mxu0 0
        %4372 = vmatpush2.bf16.msra.mxu0 0
        %4373 = vmatprep.mubr.bf16.mxu0 0
        %4374 = vmatmul.mubr.bf16.gmra.mxu0 %v4330
        %v4375 = vpop.f32.mrf.mxu0
        %v4376 = vadd.f32 %v4272, %v4375
        %v4377 = vpop.f32.mrf.mxu0
        %v4378 = vadd.f32 %v4272, %v4377
        %v4379 = vpop.f32.mrf.mxu0
        %v4380 = vadd.f32 %v4277, %v4379
        %v4381 = vpop.f32.mrf.mxu0
        %v4382 = vadd.f32 %v4277, %v4381
        %4383 = vmatprep.mubr.bf16.mxu0 0
        %4384 = vmatmul.mubr.bf16.gmra.mxu0 %v4333
        %v4385 = vpop.f32.mrf.mxu0
        %v4386 = vadd.f32 %v4282, %v4385
        %v4387 = vpop.f32.mrf.mxu0
        %v4388 = vadd.f32 %v4282, %v4387
        %v4389 = vpop.f32.mrf.mxu0
        %v4390 = vadd.f32 %v4287, %v4389
        %v4391 = vpop.f32.mrf.mxu0
        %v4392 = vadd.f32 %v4287, %v4391
        %4393 = vmatprep.mubr.bf16.mxu0 0
        %4394 = vmatmul.mubr.bf16.gmra.mxu0 %v4336
        %v4395 = vpop.f32.mrf.mxu0
        %v4396 = vadd.f32 %v4292, %v4395
        %v4397 = vpop.f32.mrf.mxu0
        %v4398 = vadd.f32 %v4292, %v4397
        %v4399 = vpop.f32.mrf.mxu0
        %v4400 = vadd.f32 %v4297, %v4399
        %v4401 = vpop.f32.mrf.mxu0
        %v4402 = vadd.f32 %v4297, %v4401
        %4403 = vmatprep.mubr.bf16.mxu0 0
        %4404 = vmatmul.mubr.bf16.gmra.mxu0 %v4339
        %v4405 = vpop.f32.mrf.mxu0
        %v4406 = vadd.f32 %v4302, %v4405
        %v4407 = vpop.f32.mrf.mxu0
        %v4408 = vadd.f32 %v4302, %v4407
        %v4409 = vpop.f32.mrf.mxu0
        %v4410 = vadd.f32 %v4307, %v4409
        %v4411 = vpop.f32.mrf.mxu0
        %v4412 = vadd.f32 %v4307, %v4411
        %4413 = vdwg.mxu0
        %4414 = vmatprep.subr.bf16.mxu0 0
        %4415 = vmatpush1.bf16.msra.mxu0 0
        %4416 = vmatprep.subr.bf16.mxu0 0
        %4417 = vmatpush1.bf16.msra.mxu0 0
        %4418 = vmatprep.subr.bf16.mxu0 0
        %4419 = vmatpush1.bf16.msra.mxu0 0
        %4420 = vmatprep.subr.bf16.mxu0 0
        %4421 = vmatpush1.bf16.msra.mxu0 0
        %4422 = vmatprep.subr.bf16.mxu0 %v4246
        %4423 = vmatpush1.bf16.msra.mxu0 %v4245
        %4424 = vmatprep.subr.bf16.mxu0 %v4238
        %4425 = vmatpush1.bf16.msra.mxu0 %v4237
        %4426 = vmatprep.subr.bf16.mxu0 %v4230
        %4427 = vmatpush1.bf16.msra.mxu0 %v4229
        %4428 = vmatprep.subr.bf16.mxu0 %v4222
        %4429 = vmatpush1.bf16.msra.mxu0 %v4221
        %4430 = vmatprep.subr.bf16.mxu0 0
        %4431 = vmatpush2.bf16.msra.mxu0 0
        %4432 = vmatprep.subr.bf16.mxu0 0
        %4433 = vmatpush2.bf16.msra.mxu0 0
        %4434 = vmatprep.subr.bf16.mxu0 0
        %4435 = vmatpush2.bf16.msra.mxu0 0
        %4436 = vmatprep.subr.bf16.mxu0 0
        %4437 = vmatpush2.bf16.msra.mxu0 0
        %4438 = vmatprep.subr.bf16.mxu0 0
        %4439 = vmatpush2.bf16.msra.mxu0 0
        %4440 = vmatprep.subr.bf16.mxu0 0
        %4441 = vmatpush2.bf16.msra.mxu0 0
        %4442 = vmatprep.subr.bf16.mxu0 0
        %4443 = vmatpush2.bf16.msra.mxu0 0
        %4444 = vmatprep.subr.bf16.mxu0 0
        %4445 = vmatpush2.bf16.msra.mxu0 0
        %4446 = vmatprep.mubr.bf16.mxu0 0
        %4447 = vmatmul.mubr.bf16.gmra.mxu0 %v4330
        %v4448 = vpop.f32.mrf.mxu0
        %v4449 = vadd.f32 %v4272, %v4448
        %v4450 = vpop.f32.mrf.mxu0
        %v4451 = vadd.f32 %v4272, %v4450
        %v4452 = vpop.f32.mrf.mxu0
        %v4453 = vadd.f32 %v4277, %v4452
        %v4454 = vpop.f32.mrf.mxu0
        %v4455 = vadd.f32 %v4277, %v4454
        %4456 = vmatprep.mubr.bf16.mxu0 0
        %4457 = vmatmul.mubr.bf16.gmra.mxu0 %v4333
        %v4458 = vpop.f32.mrf.mxu0
        %v4459 = vadd.f32 %v4282, %v4458
        %v4460 = vpop.f32.mrf.mxu0
        %v4461 = vadd.f32 %v4282, %v4460
        %v4462 = vpop.f32.mrf.mxu0
        %v4463 = vadd.f32 %v4287, %v4462
        %v4464 = vpop.f32.mrf.mxu0
        %v4465 = vadd.f32 %v4287, %v4464
        %4466 = vmatprep.mubr.bf16.mxu0 0
        %4467 = vmatmul.mubr.bf16.gmra.mxu0 %v4336
        %v4468 = vpop.f32.mrf.mxu0
        %v4469 = vadd.f32 %v4292, %v4468
        %v4470 = vpop.f32.mrf.mxu0
        %v4471 = vadd.f32 %v4292, %v4470
        %v4472 = vpop.f32.mrf.mxu0
        %v4473 = vadd.f32 %v4297, %v4472
        %v4474 = vpop.f32.mrf.mxu0
        %v4475 = vadd.f32 %v4297, %v4474
        %4476 = vmatprep.mubr.bf16.mxu0 0
        %4477 = vmatmul.mubr.bf16.gmra.mxu0 %v4339
        %v4478 = vpop.f32.mrf.mxu0
        %v4479 = vadd.f32 %v4302, %v4478
        %v4480 = vpop.f32.mrf.mxu0
        %v4481 = vadd.f32 %v4302, %v4480
        %v4482 = vpop.f32.mrf.mxu0
        %v4483 = vadd.f32 %v4307, %v4482
        %v4484 = vpop.f32.mrf.mxu0
        %v4485 = vadd.f32 %v4307, %v4484
        %4486 = vdwg.mxu0
        %4487 = vmatprep.subr.bf16.mxu0 0
        %4488 = vmatpush1.bf16.msra.mxu0 0
        %4489 = vmatprep.subr.bf16.mxu0 0
        %4490 = vmatpush1.bf16.msra.mxu0 0
        %4491 = vmatprep.subr.bf16.mxu0 0
        %4492 = vmatpush1.bf16.msra.mxu0 0
        %4493 = vmatprep.subr.bf16.mxu0 0
        %4494 = vmatpush1.bf16.msra.mxu0 0
        %4495 = vmatprep.subr.bf16.mxu0 %v4248
        %4496 = vmatpush1.bf16.msra.mxu0 %v4247
        %4497 = vmatprep.subr.bf16.mxu0 %v4240
        %4498 = vmatpush1.bf16.msra.mxu0 %v4239
        %4499 = vmatprep.subr.bf16.mxu0 %v4232
        %4500 = vmatpush1.bf16.msra.mxu0 %v4231
        %4501 = vmatprep.subr.bf16.mxu0 %v4224
        %4502 = vmatpush1.bf16.msra.mxu0 %v4223
        %4503 = vmatprep.subr.bf16.mxu0 0
        %4504 = vmatpush2.bf16.msra.mxu0 0
        %4505 = vmatprep.subr.bf16.mxu0 0
        %4506 = vmatpush2.bf16.msra.mxu0 0
        %4507 = vmatprep.subr.bf16.mxu0 0
        %4508 = vmatpush2.bf16.msra.mxu0 0
        %4509 = vmatprep.subr.bf16.mxu0 0
        %4510 = vmatpush2.bf16.msra.mxu0 0
        %4511 = vmatprep.subr.bf16.mxu0 0
        %4512 = vmatpush2.bf16.msra.mxu0 0
        %4513 = vmatprep.subr.bf16.mxu0 0
        %4514 = vmatpush2.bf16.msra.mxu0 0
        %4515 = vmatprep.subr.bf16.mxu0 0
        %4516 = vmatpush2.bf16.msra.mxu0 0
        %4517 = vmatprep.subr.bf16.mxu0 0
        %4518 = vmatpush2.bf16.msra.mxu0 0
        %4519 = vmatprep.mubr.bf16.mxu0 0
        %4520 = vmatmul.mubr.bf16.gmra.mxu0 %v4330
        %v4521 = vpop.f32.mrf.mxu0
        %v4522 = vadd.f32 %v4272, %v4521
        %v4523 = vpop.f32.mrf.mxu0
        %v4524 = vadd.f32 %v4272, %v4523
        %v4525 = vpop.f32.mrf.mxu0
        %v4526 = vadd.f32 %v4277, %v4525
        %v4527 = vpop.f32.mrf.mxu0
        %v4528 = vadd.f32 %v4277, %v4527
        %4529 = vmatprep.mubr.bf16.mxu0 0
        %4530 = vmatmul.mubr.bf16.gmra.mxu0 %v4333
        %v4531 = vpop.f32.mrf.mxu0
        %v4532 = vadd.f32 %v4282, %v4531
        %v4533 = vpop.f32.mrf.mxu0
        %v4534 = vadd.f32 %v4282, %v4533
        %v4535 = vpop.f32.mrf.mxu0
        %v4536 = vadd.f32 %v4287, %v4535
        %v4537 = vpop.f32.mrf.mxu0
        %v4538 = vadd.f32 %v4287, %v4537
        %4539 = vmatprep.mubr.bf16.mxu0 0
        %4540 = vmatmul.mubr.bf16.gmra.mxu0 %v4336
        %v4541 = vpop.f32.mrf.mxu0
        %v4542 = vadd.f32 %v4292, %v4541
        %v4543 = vpop.f32.mrf.mxu0
        %v4544 = vadd.f32 %v4292, %v4543
        %v4545 = vpop.f32.mrf.mxu0
        %v4546 = vadd.f32 %v4297, %v4545
        %v4547 = vpop.f32.mrf.mxu0
        %v4548 = vadd.f32 %v4297, %v4547
        %4549 = vmatprep.mubr.bf16.mxu0 0
        %4550 = vmatmul.mubr.bf16.gmra.mxu0 %v4339
        %v4551 = vpop.f32.mrf.mxu0
        %v4552 = vadd.f32 %v4302, %v4551
        %v4553 = vpop.f32.mrf.mxu0
        %v4554 = vadd.f32 %v4302, %v4553
        %v4555 = vpop.f32.mrf.mxu0
        %v4556 = vadd.f32 %v4307, %v4555
        %v4557 = vpop.f32.mrf.mxu0
        %v4558 = vadd.f32 %v4307, %v4557
        %4559 = vdwg.mxu0
        %4560 = vmatprep.subr.bf16.mxu0 0
        %4561 = vmatpush1.bf16.msra.mxu0 0
        %4562 = vmatprep.subr.bf16.mxu0 0
        %4563 = vmatpush1.bf16.msra.mxu0 0
        %4564 = vmatprep.subr.bf16.mxu0 0
        %4565 = vmatpush1.bf16.msra.mxu0 0
        %4566 = vmatprep.subr.bf16.mxu0 0
        %4567 = vmatpush1.bf16.msra.mxu0 0
        %4568 = vmatprep.subr.bf16.mxu0 %v4250
        %4569 = vmatpush1.bf16.msra.mxu0 %v4249
        %4570 = vmatprep.subr.bf16.mxu0 %v4242
        %4571 = vmatpush1.bf16.msra.mxu0 %v4241
        %4572 = vmatprep.subr.bf16.mxu0 %v4234
        %4573 = vmatpush1.bf16.msra.mxu0 %v4233
        %4574 = vmatprep.subr.bf16.mxu0 %v4226
        %4575 = vmatpush1.bf16.msra.mxu0 %v4225
        %4576 = vmatprep.subr.bf16.mxu0 0
        %4577 = vmatpush2.bf16.msra.mxu0 0
        %4578 = vmatprep.subr.bf16.mxu0 0
        %4579 = vmatpush2.bf16.msra.mxu0 0
        %4580 = vmatprep.subr.bf16.mxu0 0
        %4581 = vmatpush2.bf16.msra.mxu0 0
        %4582 = vmatprep.subr.bf16.mxu0 0
        %4583 = vmatpush2.bf16.msra.mxu0 0
        %4584 = vmatprep.subr.bf16.mxu0 0
        %4585 = vmatpush2.bf16.msra.mxu0 0
        %4586 = vmatprep.subr.bf16.mxu0 0
        %4587 = vmatpush2.bf16.msra.mxu0 0
        %4588 = vmatprep.subr.bf16.mxu0 0
        %4589 = vmatpush2.bf16.msra.mxu0 0
        %4590 = vmatprep.subr.bf16.mxu0 0
        %4591 = vmatpush2.bf16.msra.mxu0 0
        %4592 = vmatprep.mubr.bf16.mxu0 0
        %4593 = vmatmul.mubr.bf16.gmra.mxu0 %v4330
        %v4594 = vpop.f32.mrf.mxu0
        %v4595 = vadd.f32 %v4272, %v4594
        %v4596 = vpop.f32.mrf.mxu0
        %v4597 = vadd.f32 %v4272, %v4596
        %v4598 = vpop.f32.mrf.mxu0
        %v4599 = vadd.f32 %v4277, %v4598
        %v4600 = vpop.f32.mrf.mxu0
        %v4601 = vadd.f32 %v4277, %v4600
        %4602 = vmatprep.mubr.bf16.mxu0 0
        %4603 = vmatmul.mubr.bf16.gmra.mxu0 %v4333
        %v4604 = vpop.f32.mrf.mxu0
        %v4605 = vadd.f32 %v4282, %v4604
        %v4606 = vpop.f32.mrf.mxu0
        %v4607 = vadd.f32 %v4282, %v4606
        %v4608 = vpop.f32.mrf.mxu0
        %v4609 = vadd.f32 %v4287, %v4608
        %v4610 = vpop.f32.mrf.mxu0
        %v4611 = vadd.f32 %v4287, %v4610
        %4612 = vmatprep.mubr.bf16.mxu0 0
        %4613 = vmatmul.mubr.bf16.gmra.mxu0 %v4336
        %v4614 = vpop.f32.mrf.mxu0
        %v4615 = vadd.f32 %v4292, %v4614
        %v4616 = vpop.f32.mrf.mxu0
        %v4617 = vadd.f32 %v4292, %v4616
        %v4618 = vpop.f32.mrf.mxu0
        %v4619 = vadd.f32 %v4297, %v4618
        %v4620 = vpop.f32.mrf.mxu0
        %v4621 = vadd.f32 %v4297, %v4620
        %4622 = vmatprep.mubr.bf16.mxu0 0
        %4623 = vmatmul.mubr.bf16.gmra.mxu0 %v4339
        %v4624 = vpop.f32.mrf.mxu0
        %v4625 = vadd.f32 %v4302, %v4624
        %v4626 = vpop.f32.mrf.mxu0
        %v4627 = vadd.f32 %v4302, %v4626
        %v4628 = vpop.f32.mrf.mxu0
        %v4629 = vadd.f32 %v4307, %v4628
        %v4630 = vpop.f32.mrf.mxu0
        %v4631 = vadd.f32 %v4307, %v4630
        %4632 = vdwg.mxu0
        %v4633 = vmax.f32 %v4376, 0.0
        %v4634 = vmax.f32 %v4378, 0.0
        %v4635 = vmax.f32 %v4449, 0.0
        %v4636 = vmax.f32 %v4451, 0.0
        %v4637 = vmax.f32 %v4522, 0.0
        %v4638 = vmax.f32 %v4524, 0.0
        %v4639 = vmax.f32 %v4595, 0.0
        %v4640 = vmax.f32 %v4597, 0.0
        %v4641 = vmax.f32 %v4380, 0.0
        %v4642 = vmax.f32 %v4382, 0.0
        %v4643 = vmax.f32 %v4453, 0.0
        %v4644 = vmax.f32 %v4455, 0.0
        %v4645 = vmax.f32 %v4526, 0.0
        %v4646 = vmax.f32 %v4528, 0.0
        %v4647 = vmax.f32 %v4599, 0.0
        %v4648 = vmax.f32 %v4601, 0.0
        %v4649 = vmax.f32 %v4386, 0.0
        %v4650 = vmax.f32 %v4388, 0.0
        %v4651 = vmax.f32 %v4459, 0.0
        %v4652 = vmax.f32 %v4461, 0.0
        %v4653 = vmax.f32 %v4532, 0.0
        %v4654 = vmax.f32 %v4534, 0.0
        %v4655 = vmax.f32 %v4605, 0.0
        %v4656 = vmax.f32 %v4607, 0.0
        %v4657 = vmax.f32 %v4390, 0.0
        %v4658 = vmax.f32 %v4392, 0.0
        %v4659 = vmax.f32 %v4463, 0.0
        %v4660 = vmax.f32 %v4465, 0.0
        %v4661 = vmax.f32 %v4536, 0.0
        %v4662 = vmax.f32 %v4538, 0.0
        %v4663 = vmax.f32 %v4609, 0.0
        %v4664 = vmax.f32 %v4611, 0.0
        %v4665 = vmax.f32 %v4396, 0.0
        %v4666 = vmax.f32 %v4398, 0.0
        %v4667 = vmax.f32 %v4469, 0.0
        %v4668 = vmax.f32 %v4471, 0.0
        %v4669 = vmax.f32 %v4542, 0.0
        %v4670 = vmax.f32 %v4544, 0.0
        %v4671 = vmax.f32 %v4615, 0.0
        %v4672 = vmax.f32 %v4617, 0.0
        %v4673 = vmax.f32 %v4400, 0.0
        %v4674 = vmax.f32 %v4402, 0.0
        %v4675 = vmax.f32 %v4473, 0.0
        %v4676 = vmax.f32 %v4475, 0.0
        %v4677 = vmax.f32 %v4546, 0.0
        %v4678 = vmax.f32 %v4548, 0.0
        %v4679 = vmax.f32 %v4619, 0.0
        %v4680 = vmax.f32 %v4621, 0.0
        %v4681 = vmax.f32 %v4406, 0.0
        %v4682 = vmax.f32 %v4408, 0.0
        %v4683 = vmax.f32 %v4479, 0.0
        %v4684 = vmax.f32 %v4481, 0.0
        %v4685 = vmax.f32 %v4552, 0.0
        %v4686 = vmax.f32 %v4554, 0.0
        %v4687 = vmax.f32 %v4625, 0.0
        %v4688 = vmax.f32 %v4627, 0.0
        %v4689 = vmax.f32 %v4410, 0.0
        %v4690 = vmax.f32 %v4412, 0.0
        %v4691 = vmax.f32 %v4483, 0.0
        %v4692 = vmax.f32 %v4485, 0.0
        %v4693 = vmax.f32 %v4556, 0.0
        %v4694 = vmax.f32 %v4558, 0.0
        %v4695 = vmax.f32 %v4629, 0.0
        %v4696 = vmax.f32 %v4631, 0.0
        %v4697 = vpack.c.bf16 %v4641, %v4633
        %v4698 = vpack.c.bf16 %v4642, %v4634
        %v4699 = vpack.c.bf16 %v4643, %v4635
        %v4700 = vpack.c.bf16 %v4644, %v4636
        %v4701 = vpack.c.bf16 %v4645, %v4637
        %v4702 = vpack.c.bf16 %v4646, %v4638
        %v4703 = vpack.c.bf16 %v4647, %v4639
        %v4704 = vpack.c.bf16 %v4648, %v4640
        %v4705 = vpack.c.bf16 %v4657, %v4649
        %v4706 = vpack.c.bf16 %v4658, %v4650
        %v4707 = vpack.c.bf16 %v4659, %v4651
        %v4708 = vpack.c.bf16 %v4660, %v4652
        %v4709 = vpack.c.bf16 %v4661, %v4653
        %v4710 = vpack.c.bf16 %v4662, %v4654
        %v4711 = vpack.c.bf16 %v4663, %v4655
        %v4712 = vpack.c.bf16 %v4664, %v4656
        %v4713 = vpack.c.bf16 %v4673, %v4665
        %v4714 = vpack.c.bf16 %v4674, %v4666
        %v4715 = vpack.c.bf16 %v4675, %v4667
        %v4716 = vpack.c.bf16 %v4676, %v4668
        %v4717 = vpack.c.bf16 %v4677, %v4669
        %v4718 = vpack.c.bf16 %v4678, %v4670
        %v4719 = vpack.c.bf16 %v4679, %v4671
        %v4720 = vpack.c.bf16 %v4680, %v4672
        %v4721 = vpack.c.bf16 %v4689, %v4681
        %v4722 = vpack.c.bf16 %v4690, %v4682
        %v4723 = vpack.c.bf16 %v4691, %v4683
        %v4724 = vpack.c.bf16 %v4692, %v4684
        %v4725 = vpack.c.bf16 %v4693, %v4685
        %v4726 = vpack.c.bf16 %v4694, %v4686
        %v4727 = vpack.c.bf16 %v4695, %v4687
        %v4728 = vpack.c.bf16 %v4696, %v4688
        %s4729 = scalar_lea.vmem %s11, 2
        %v4730 = vld [vmem:[%s4729] sm:$0x3]
        %s4731 = scalar_lea.vmem %s12, 4
        %v4732 = vld [vmem:[%s4731] sm:$0xf]
        %4734 = vset.pattern.permute.xlu0 0
        %4735 = vperm.xlu0 %4734, %v4732
        %v4736 = vpop.permute.xlu0 %4735
        %v4739 = vsel %vm2051, %v4730, 0
        %4741 = vmatprep.subr.bf16.mxu0 0
        %4742 = vmatpush1.bf16.msra.mxu0 0
        %4743 = vmatprep.subr.bf16.mxu0 0
        %4744 = vmatpush1.bf16.msra.mxu0 0
        %4745 = vmatprep.subr.bf16.mxu0 0
        %4746 = vmatpush1.bf16.msra.mxu0 0
        %4747 = vmatprep.subr.bf16.mxu0 0
        %4748 = vmatpush1.bf16.msra.mxu0 0
        %4749 = vmatprep.subr.bf16.mxu0 %v4722
        %4750 = vmatpush1.bf16.msra.mxu0 %v4721
        %4751 = vmatprep.subr.bf16.mxu0 %v4714
        %4752 = vmatpush1.bf16.msra.mxu0 %v4713
        %4753 = vmatprep.subr.bf16.mxu0 %v4706
        %4754 = vmatpush1.bf16.msra.mxu0 %v4705
        %4755 = vmatprep.subr.bf16.mxu0 %v4698
        %4756 = vmatpush1.bf16.msra.mxu0 %v4697
        %4757 = vmatprep.subr.bf16.mxu0 0
        %4758 = vmatpush2.bf16.msra.mxu0 0
        %4759 = vmatprep.subr.bf16.mxu0 0
        %4760 = vmatpush2.bf16.msra.mxu0 0
        %4761 = vmatprep.subr.bf16.mxu0 0
        %4762 = vmatpush2.bf16.msra.mxu0 0
        %4763 = vmatprep.subr.bf16.mxu0 0
        %4764 = vmatpush2.bf16.msra.mxu0 0
        %4765 = vmatprep.subr.bf16.mxu0 0
        %4766 = vmatpush2.bf16.msra.mxu0 0
        %4767 = vmatprep.subr.bf16.mxu0 0
        %4768 = vmatpush2.bf16.msra.mxu0 0
        %4769 = vmatprep.subr.bf16.mxu0 0
        %4770 = vmatpush2.bf16.msra.mxu0 0
        %4771 = vmatprep.subr.bf16.mxu0 0
        %4772 = vmatpush2.bf16.msra.mxu0 0
        %4773 = vmatprep.mubr.bf16.mxu0 0
        %4774 = vmatmul.mubr.bf16.gmra.mxu0 %v4739
        %v4775 = vpop.f32.mrf.mxu0
        %v4776 = vadd.f32 %v4736, %v4775
        %v4777 = vpop.f32.mrf.mxu0
        %v4778 = vadd.f32 %v4736, %v4777
        %v4779 = vpop.f32.mrf.mxu0
        %v4780 = vpop.f32.mrf.mxu0
        %4781 = vdwg.mxu0
        %4782 = vmatprep.subr.bf16.mxu0 0
        %4783 = vmatpush1.bf16.msra.mxu0 0
        %4784 = vmatprep.subr.bf16.mxu0 0
        %4785 = vmatpush1.bf16.msra.mxu0 0
        %4786 = vmatprep.subr.bf16.mxu0 0
        %4787 = vmatpush1.bf16.msra.mxu0 0
        %4788 = vmatprep.subr.bf16.mxu0 0
        %4789 = vmatpush1.bf16.msra.mxu0 0
        %4790 = vmatprep.subr.bf16.mxu0 %v4724
        %4791 = vmatpush1.bf16.msra.mxu0 %v4723
        %4792 = vmatprep.subr.bf16.mxu0 %v4716
        %4793 = vmatpush1.bf16.msra.mxu0 %v4715
        %4794 = vmatprep.subr.bf16.mxu0 %v4708
        %4795 = vmatpush1.bf16.msra.mxu0 %v4707
        %4796 = vmatprep.subr.bf16.mxu0 %v4700
        %4797 = vmatpush1.bf16.msra.mxu0 %v4699
        %4798 = vmatprep.subr.bf16.mxu0 0
        %4799 = vmatpush2.bf16.msra.mxu0 0
        %4800 = vmatprep.subr.bf16.mxu0 0
        %4801 = vmatpush2.bf16.msra.mxu0 0
        %4802 = vmatprep.subr.bf16.mxu0 0
        %4803 = vmatpush2.bf16.msra.mxu0 0
        %4804 = vmatprep.subr.bf16.mxu0 0
        %4805 = vmatpush2.bf16.msra.mxu0 0
        %4806 = vmatprep.subr.bf16.mxu0 0
        %4807 = vmatpush2.bf16.msra.mxu0 0
        %4808 = vmatprep.subr.bf16.mxu0 0
        %4809 = vmatpush2.bf16.msra.mxu0 0
        %4810 = vmatprep.subr.bf16.mxu0 0
        %4811 = vmatpush2.bf16.msra.mxu0 0
        %4812 = vmatprep.subr.bf16.mxu0 0
        %4813 = vmatpush2.bf16.msra.mxu0 0
        %4814 = vmatprep.mubr.bf16.mxu0 0
        %4815 = vmatmul.mubr.bf16.gmra.mxu0 %v4739
        %v4816 = vpop.f32.mrf.mxu0
        %v4817 = vadd.f32 %v4736, %v4816
        %v4818 = vpop.f32.mrf.mxu0
        %v4819 = vadd.f32 %v4736, %v4818
        %v4820 = vpop.f32.mrf.mxu0
        %v4821 = vpop.f32.mrf.mxu0
        %4822 = vdwg.mxu0
        %4823 = vmatprep.subr.bf16.mxu0 0
        %4824 = vmatpush1.bf16.msra.mxu0 0
        %4825 = vmatprep.subr.bf16.mxu0 0
        %4826 = vmatpush1.bf16.msra.mxu0 0
        %4827 = vmatprep.subr.bf16.mxu0 0
        %4828 = vmatpush1.bf16.msra.mxu0 0
        %4829 = vmatprep.subr.bf16.mxu0 0
        %4830 = vmatpush1.bf16.msra.mxu0 0
        %4831 = vmatprep.subr.bf16.mxu0 %v4726
        %4832 = vmatpush1.bf16.msra.mxu0 %v4725
        %4833 = vmatprep.subr.bf16.mxu0 %v4718
        %4834 = vmatpush1.bf16.msra.mxu0 %v4717
        %4835 = vmatprep.subr.bf16.mxu0 %v4710
        %4836 = vmatpush1.bf16.msra.mxu0 %v4709
        %4837 = vmatprep.subr.bf16.mxu0 %v4702
        %4838 = vmatpush1.bf16.msra.mxu0 %v4701
        %4839 = vmatprep.subr.bf16.mxu0 0
        %4840 = vmatpush2.bf16.msra.mxu0 0
        %4841 = vmatprep.subr.bf16.mxu0 0
        %4842 = vmatpush2.bf16.msra.mxu0 0
        %4843 = vmatprep.subr.bf16.mxu0 0
        %4844 = vmatpush2.bf16.msra.mxu0 0
        %4845 = vmatprep.subr.bf16.mxu0 0
        %4846 = vmatpush2.bf16.msra.mxu0 0
        %4847 = vmatprep.subr.bf16.mxu0 0
        %4848 = vmatpush2.bf16.msra.mxu0 0
        %4849 = vmatprep.subr.bf16.mxu0 0
        %4850 = vmatpush2.bf16.msra.mxu0 0
        %4851 = vmatprep.subr.bf16.mxu0 0
        %4852 = vmatpush2.bf16.msra.mxu0 0
        %4853 = vmatprep.subr.bf16.mxu0 0
        %4854 = vmatpush2.bf16.msra.mxu0 0
        %4855 = vmatprep.mubr.bf16.mxu0 0
        %4856 = vmatmul.mubr.bf16.gmra.mxu0 %v4739
        %v4857 = vpop.f32.mrf.mxu0
        %v4858 = vadd.f32 %v4736, %v4857
        %v4859 = vpop.f32.mrf.mxu0
        %v4860 = vadd.f32 %v4736, %v4859
        %v4861 = vpop.f32.mrf.mxu0
        %v4862 = vpop.f32.mrf.mxu0
        %4863 = vdwg.mxu0
        %4864 = vmatprep.subr.bf16.mxu0 0
        %4865 = vmatpush1.bf16.msra.mxu0 0
        %4866 = vmatprep.subr.bf16.mxu0 0
        %4867 = vmatpush1.bf16.msra.mxu0 0
        %4868 = vmatprep.subr.bf16.mxu0 0
        %4869 = vmatpush1.bf16.msra.mxu0 0
        %4870 = vmatprep.subr.bf16.mxu0 0
        %4871 = vmatpush1.bf16.msra.mxu0 0
        %4872 = vmatprep.subr.bf16.mxu0 %v4728
        %4873 = vmatpush1.bf16.msra.mxu0 %v4727
        %4874 = vmatprep.subr.bf16.mxu0 %v4720
        %4875 = vmatpush1.bf16.msra.mxu0 %v4719
        %4876 = vmatprep.subr.bf16.mxu0 %v4712
        %4877 = vmatpush1.bf16.msra.mxu0 %v4711
        %4878 = vmatprep.subr.bf16.mxu0 %v4704
        %4879 = vmatpush1.bf16.msra.mxu0 %v4703
        %4880 = vmatprep.subr.bf16.mxu0 0
        %4881 = vmatpush2.bf16.msra.mxu0 0
        %4882 = vmatprep.subr.bf16.mxu0 0
        %4883 = vmatpush2.bf16.msra.mxu0 0
        %4884 = vmatprep.subr.bf16.mxu0 0
        %4885 = vmatpush2.bf16.msra.mxu0 0
        %4886 = vmatprep.subr.bf16.mxu0 0
        %4887 = vmatpush2.bf16.msra.mxu0 0
        %4888 = vmatprep.subr.bf16.mxu0 0
        %4889 = vmatpush2.bf16.msra.mxu0 0
        %4890 = vmatprep.subr.bf16.mxu0 0
        %4891 = vmatpush2.bf16.msra.mxu0 0
        %4892 = vmatprep.subr.bf16.mxu0 0
        %4893 = vmatpush2.bf16.msra.mxu0 0
        %4894 = vmatprep.subr.bf16.mxu0 0
        %4895 = vmatpush2.bf16.msra.mxu0 0
        %4896 = vmatprep.mubr.bf16.mxu0 0
        %4897 = vmatmul.mubr.bf16.gmra.mxu0 %v4739
        %v4898 = vpop.f32.mrf.mxu0
        %v4899 = vadd.f32 %v4736, %v4898
        %v4900 = vpop.f32.mrf.mxu0
        %v4901 = vadd.f32 %v4736, %v4900
        %v4902 = vpop.f32.mrf.mxu0
        %v4903 = vpop.f32.mrf.mxu0
        %4904 = vdwg.mxu0
        %v4905 = vmul.f32 %v4776, %v3102
        %v4906 = vmul.f32 %v4778, %v3102
        %v4907 = vmul.f32 %v4817, %v3102
        %v4908 = vmul.f32 %v4819, %v3102
        %v4909 = vmul.f32 %v4858, %v3102
        %v4910 = vmul.f32 %v4860, %v3102
        %v4911 = vmul.f32 %v4899, %v3102
        %v4912 = vmul.f32 %v4901, %v3102
        %v4913 = vtanh.pop %v4905
        %v4914 = vtanh.pop %v4906
        %v4915 = vtanh.pop %v4907
        %v4916 = vtanh.pop %v4908
        %v4917 = vtanh.pop %v4909
        %v4918 = vtanh.pop %v4910
        %v4919 = vtanh.pop %v4911
        %v4920 = vtanh.pop %v4912
        %v4921 = vmul.f32 %v4913, 1.9
        %v4922 = vmul.f32 %v4914, 1.9
        %v4923 = vmul.f32 %v4915, 1.9
        %v4924 = vmul.f32 %v4916, 1.9
        %v4925 = vmul.f32 %v4917, 1.9
        %v4926 = vmul.f32 %v4918, 1.9
        %v4927 = vmul.f32 %v4919, 1.9
        %v4928 = vmul.f32 %v4920, 1.9
        %v4929 = vmul.f32 %v4921, 1.442695
        %v4930 = vpow.pop %v4929
        %v4931 = vmul.f32 %v4922, 1.442695
        %v4932 = vpow.pop %v4931
        %v4933 = vmul.f32 %v4923, 1.442695
        %v4934 = vpow.pop %v4933
        %v4935 = vmul.f32 %v4924, 1.442695
        %v4936 = vpow.pop %v4935
        %v4937 = vmul.f32 %v4925, 1.442695
        %v4938 = vpow.pop %v4937
        %v4939 = vmul.f32 %v4926, 1.442695
        %v4940 = vpow.pop %v4939
        %v4941 = vmul.f32 %v4927, 1.442695
        %v4942 = vpow.pop %v4941
        %v4943 = vmul.f32 %v4928, 1.442695
        %v4944 = vpow.pop %v4943
        %v4945 = vmul.f32 %v611, %v4930
        %v4946 = vmul.f32 %v613, %v4932
        %v4947 = vmul.f32 %v682, %v4934
        %v4948 = vmul.f32 %v684, %v4936
        %v4949 = vmul.f32 %v753, %v4938
        %v4950 = vmul.f32 %v755, %v4940
        %v4951 = vmul.f32 %v824, %v4942
        %v4952 = vmul.f32 %v826, %v4944
        %v4961 = vrot.slane %v4776, 2
        %v4962 = vrot.slane %v4778, 2
        %v4963 = vrot.slane %v4817, 2
        %v4964 = vrot.slane %v4819, 2
        %v4965 = vrot.slane %v4858, 2
        %v4966 = vrot.slane %v4860, 2
        %v4967 = vrot.slane %v4899, 2
        %v4968 = vrot.slane %v4901, 2
        %v4977 = vadd.f32 %v4945, %v4961
        %v4978 = vadd.f32 %v4946, %v4962
        %v4979 = vadd.f32 %v4947, %v4963
        %v4980 = vadd.f32 %v4948, %v4964
        %v4981 = vadd.f32 %v4949, %v4965
        %v4982 = vadd.f32 %v4950, %v4966
        %v4983 = vadd.f32 %v4951, %v4967
        %v4984 = vadd.f32 %v4952, %v4968
        %v4993 = vrot.slane %v3175, 2
        %v4994 = vrot.slane %v3176, 2
        %v4995 = vrot.slane %v3177, 2
        %v4996 = vrot.slane %v3178, 2
        %v4997 = vrot.slane %v3179, 2
        %v4998 = vrot.slane %v3180, 2
        %v4999 = vrot.slane %v3181, 2
        %v5000 = vrot.slane %v3182, 2
        %v5017 = vrot.slane %v4977, 6
        %v5018 = vrot.slane %v4978, 6
        %v5019 = vrot.slane %v4979, 6
        %v5020 = vrot.slane %v4980, 6
        %v5021 = vrot.slane %v4981, 6
        %v5022 = vrot.slane %v4982, 6
        %v5023 = vrot.slane %v4983, 6
        %v5024 = vrot.slane %v4984, 6
        %vm5033 = vcmask 1041408
        %v5034 = vsel %vm5033, %v4993, %v5017
        %v5035 = vsel %vm5033, %v4994, %v5018
        %v5036 = vsel %vm5033, %v4995, %v5019
        %v5037 = vsel %vm5033, %v4996, %v5020
        %v5038 = vsel %vm5033, %v4997, %v5021
        %v5039 = vsel %vm5033, %v4998, %v5022
        %v5040 = vsel %vm5033, %v4999, %v5023
        %v5041 = vsel %vm5033, %v5000, %v5024
        %v5050 = vcombine.low %v5034, %v5035
        %v5051 = vcombine.low %v5036, %v5037
        %v5052 = vcombine.low %v5038, %v5039
        %v5053 = vcombine.low %v5040, %v5041
        %5058 = vst [vmem:[%s478] sm:$0xff] %v5050
        %5059 = vst [vmem:[%s478 + $0x8] sm:$0xff] %v5051
        %5060 = vst [vmem:[%s478 + $0x10] sm:$0xff] %v5052
        %5061 = vst [vmem:[%s478 + $0x18] sm:$0xff] %v5053
        %v5062 = vsel %vm5033, %v3119, 0.0
        %v5063 = vrot.slane %v5062, 4
        %v5064 = vadd.f32 %v5062, %v5063
        %v5065 = vrot.slane %v5064, 2
        %v5066 = vadd.f32 %v5064, %v5065
        %v5067 = vrot.slane %v5066, 1
        %v5068 = vadd.f32 %v5066, %v5067
        %v5069 = vsel %vm5033, %v3120, 0.0
        %v5070 = vrot.slane %v5069, 4
        %v5071 = vadd.f32 %v5069, %v5070
        %v5072 = vrot.slane %v5071, 2
        %v5073 = vadd.f32 %v5071, %v5072
        %v5074 = vrot.slane %v5073, 1
        %v5075 = vadd.f32 %v5073, %v5074
        %v5076 = vsel %vm5033, %v3121, 0.0
        %v5077 = vrot.slane %v5076, 4
        %v5078 = vadd.f32 %v5076, %v5077
        %v5079 = vrot.slane %v5078, 2
        %v5080 = vadd.f32 %v5078, %v5079
        %v5081 = vrot.slane %v5080, 1
        %v5082 = vadd.f32 %v5080, %v5081
        %v5083 = vsel %vm5033, %v3122, 0.0
        %v5084 = vrot.slane %v5083, 4
        %v5085 = vadd.f32 %v5083, %v5084
        %v5086 = vrot.slane %v5085, 2
        %v5087 = vadd.f32 %v5085, %v5086
        %v5088 = vrot.slane %v5087, 1
        %v5089 = vadd.f32 %v5087, %v5088
        %v5090 = vsel %vm5033, %v3123, 0.0
        %v5091 = vrot.slane %v5090, 4
        %v5092 = vadd.f32 %v5090, %v5091
        %v5093 = vrot.slane %v5092, 2
        %v5094 = vadd.f32 %v5092, %v5093
        %v5095 = vrot.slane %v5094, 1
        %v5096 = vadd.f32 %v5094, %v5095
        %v5097 = vsel %vm5033, %v3124, 0.0
        %v5098 = vrot.slane %v5097, 4
        %v5099 = vadd.f32 %v5097, %v5098
        %v5100 = vrot.slane %v5099, 2
        %v5101 = vadd.f32 %v5099, %v5100
        %v5102 = vrot.slane %v5101, 1
        %v5103 = vadd.f32 %v5101, %v5102
        %v5104 = vsel %vm5033, %v3125, 0.0
        %v5105 = vrot.slane %v5104, 4
        %v5106 = vadd.f32 %v5104, %v5105
        %v5107 = vrot.slane %v5106, 2
        %v5108 = vadd.f32 %v5106, %v5107
        %v5109 = vrot.slane %v5108, 1
        %v5110 = vadd.f32 %v5108, %v5109
        %v5111 = vsel %vm5033, %v3126, 0.0
        %v5112 = vrot.slane %v5111, 4
        %v5113 = vadd.f32 %v5111, %v5112
        %v5114 = vrot.slane %v5113, 2
        %v5115 = vadd.f32 %v5113, %v5114
        %v5116 = vrot.slane %v5115, 1
        %v5117 = vadd.f32 %v5115, %v5116
        %v5118 = vsel %vm5033, %v4921, 0.0
        %v5119 = vrot.slane %v5118, 4
        %v5120 = vadd.f32 %v5118, %v5119
        %v5121 = vrot.slane %v5120, 2
        %v5122 = vadd.f32 %v5120, %v5121
        %v5123 = vrot.slane %v5122, 1
        %v5124 = vadd.f32 %v5122, %v5123
        %v5125 = vsel %vm5033, %v4922, 0.0
        %v5126 = vrot.slane %v5125, 4
        %v5127 = vadd.f32 %v5125, %v5126
        %v5128 = vrot.slane %v5127, 2
        %v5129 = vadd.f32 %v5127, %v5128
        %v5130 = vrot.slane %v5129, 1
        %v5131 = vadd.f32 %v5129, %v5130
        %v5132 = vsel %vm5033, %v4923, 0.0
        %v5133 = vrot.slane %v5132, 4
        %v5134 = vadd.f32 %v5132, %v5133
        %v5135 = vrot.slane %v5134, 2
        %v5136 = vadd.f32 %v5134, %v5135
        %v5137 = vrot.slane %v5136, 1
        %v5138 = vadd.f32 %v5136, %v5137
        %v5139 = vsel %vm5033, %v4924, 0.0
        %v5140 = vrot.slane %v5139, 4
        %v5141 = vadd.f32 %v5139, %v5140
        %v5142 = vrot.slane %v5141, 2
        %v5143 = vadd.f32 %v5141, %v5142
        %v5144 = vrot.slane %v5143, 1
        %v5145 = vadd.f32 %v5143, %v5144
        %v5146 = vsel %vm5033, %v4925, 0.0
        %v5147 = vrot.slane %v5146, 4
        %v5148 = vadd.f32 %v5146, %v5147
        %v5149 = vrot.slane %v5148, 2
        %v5150 = vadd.f32 %v5148, %v5149
        %v5151 = vrot.slane %v5150, 1
        %v5152 = vadd.f32 %v5150, %v5151
        %v5153 = vsel %vm5033, %v4926, 0.0
        %v5154 = vrot.slane %v5153, 4
        %v5155 = vadd.f32 %v5153, %v5154
        %v5156 = vrot.slane %v5155, 2
        %v5157 = vadd.f32 %v5155, %v5156
        %v5158 = vrot.slane %v5157, 1
        %v5159 = vadd.f32 %v5157, %v5158
        %v5160 = vsel %vm5033, %v4927, 0.0
        %v5161 = vrot.slane %v5160, 4
        %v5162 = vadd.f32 %v5160, %v5161
        %v5163 = vrot.slane %v5162, 2
        %v5164 = vadd.f32 %v5162, %v5163
        %v5165 = vrot.slane %v5164, 1
        %v5166 = vadd.f32 %v5164, %v5165
        %v5167 = vsel %vm5033, %v4928, 0.0
        %v5168 = vrot.slane %v5167, 4
        %v5169 = vadd.f32 %v5167, %v5168
        %v5170 = vrot.slane %v5169, 2
        %v5171 = vadd.f32 %v5169, %v5170
        %v5172 = vrot.slane %v5171, 1
        %v5173 = vadd.f32 %v5171, %v5172
        %v5174 = vadd.f32 %v5068, %v5124
        %v5175 = vadd.f32 %v5075, %v5131
        %v5176 = vadd.f32 %v5082, %v5138
        %v5177 = vadd.f32 %v5089, %v5145
        %v5178 = vadd.f32 %v5096, %v5152
        %v5179 = vadd.f32 %v5103, %v5159
        %v5180 = vadd.f32 %v5110, %v5166
        %v5181 = vadd.f32 %v5117, %v5173
        %v5190 = vcombine.low %v5174, %v5175
        %v5191 = vcombine.low %v5176, %v5177
        %v5192 = vcombine.low %v5178, %v5179
        %v5193 = vcombine.low %v5180, %v5181
        %v5195 = vunpack.c.l.s4 1966171168
        %v5196 = vunpack.c.0.s8 %v5195
        %v5197 = vlaneseq
        %v5198 = vshrl.u32 %v5197, 7
        %v5199 = vsub.s32 %v5196, %v5198
        %v5200 = vrot.slane %v5190, %v5199
        %v5202 = vunpack.c.l.s4 1966171168
        %v5203 = vunpack.c.0.s8 %v5202
        %v5204 = vlaneseq
        %v5205 = vshrl.u32 %v5204, 7
        %v5206 = vsub.s32 %v5203, %v5205
        %v5207 = vrot.slane %v5191, %v5206
        %v5209 = vunpack.c.l.s4 1966171168
        %v5210 = vunpack.c.0.s8 %v5209
        %v5211 = vlaneseq
        %v5212 = vshrl.u32 %v5211, 7
        %v5213 = vsub.s32 %v5210, %v5212
        %v5214 = vrot.slane %v5192, %v5213
        %v5216 = vunpack.c.l.s4 1966171168
        %v5217 = vunpack.c.0.s8 %v5216
        %v5218 = vlaneseq
        %v5219 = vshrl.u32 %v5218, 7
        %v5220 = vsub.s32 %v5217, %v5219
        %v5221 = vrot.slane %v5193, %v5220
        %v5222 = vcombine.low %v5200, %v5207
        %v5223 = vcombine.low %v5214, %v5221
        %v5225 = vunpack.c.l.s4 1966171168
        %v5226 = vunpack.c.0.s8 %v5225
        %v5227 = vlaneseq
        %v5228 = vshrl.u32 %v5227, 7
        %v5229 = vsub.s32 %v5226, %v5228
        %v5230 = vrot.slane %v5222, %v5229
        %v5232 = vunpack.c.l.s4 1966171168
        %v5233 = vunpack.c.0.s8 %v5232
        %v5234 = vlaneseq
        %v5235 = vshrl.u32 %v5234, 7
        %v5236 = vsub.s32 %v5233, %v5235
        %v5237 = vrot.slane %v5223, %v5236
        %v5238 = vcombine.low %v5230, %v5237
        %5240 = vst [vmem:[%s501] sm:$0xff] %v5238
        %s5241 = sand.u32 %s320, 1
        %s5242 = scalar_lea.sflag [#allocation3], %s5241
        %s5243 = sand.u32 %s320, 1
        %s5244 = smul.addr %s5243, 32
        %s5245 = scalar_lea.vmem [#allocation2], %s5244
        %s5246 = smul.u32 8, %s29
        %p5247 = scmp.lt.s32.totalorder %s5246, 31
        %s5248 = scalar_select %p5247, %s5246, 31
        %s5249 = scalar_lea.vmem %s14, %s5248
        // Predicated region
        $region73: #{flowblock_forward.1} parent=71 // pred_check
          %p5250 = pneg %p330
        $region74: #{flowblock_forward.1} parent=71 // pred_check_branch
          %5252 = sbr.rel (%p5250) target = $region76
        $region75: #{flowblock_forward.1} parent=71 // pred_region
          %s5253 = smul.u32 8, %s29
          %s5255 = ssub.s32 512, 512
          %5256 = vsyncadd %s5242, %s5255
          %s5257 = smul.addr %s5253, 64
          %s5258 = scalar_lea.hbm %s13, %s5257
          %s5260 = sshll.u32 %s5245, 4
          %s5261 = int_to_ptr.vmem [resolvable:$true] %s5260
          %5263 = dma.vmem_to_hbm [thread:$0]  %s5261, 512, %s5258, %s5242
        $region76: #{flowblock_forward.1} parent=71 // pred_fallthru
          _
        // Predicated region
        $region77: #{flowblock_forward.1} parent=71 // pred_check
          %p5264 = pneg %p356
        $region78: #{flowblock_forward.1} parent=71 // pred_check_branch
          %5266 = sbr.rel (%p5264) target = $region80
        $region79: #{flowblock_forward.1} parent=71 // pred_region
          %s5267 = smul.u32 8, %s29
        $region80: #{flowblock_forward.1} parent=71 // pred_fallthru
          _
      $region72: #{flowblock_forward.1} parent=5 // pred_fallthru
        _
      %p5268 = scmp.le.s32.totalorder 2, %s24
      // Predicated region
      $region81: #{flowblock_forward.1} parent=5 // pred_check
        %p5269 = pneg %p5268
      $region82: #{flowblock_forward.1} parent=5 // pred_check_branch
        %5271 = sbr.rel (%p5269) target = $region84
      $region83: #{flowblock_forward.1} parent=5 // pred_region
        %s5272 = ssub.s32 %s24, 2
        // Predicated region
        $region85: #{flowblock_forward.1} parent=83 // pred_check
          %p5273 = pneg %p336
        $region86: #{flowblock_forward.1} parent=83 // pred_check_branch
          %5275 = sbr.rel (%p5273) target = $region88
        $region87: #{flowblock_forward.1} parent=83 // pred_region
          %s5276 = sand.u32 %s321, 1
          %s5277 = scalar_lea.sflag [#allocation3], %s5276
          %s5278 = sand.u32 %s321, 1
          %s5279 = smul.addr %s5278, 32
          %s5280 = scalar_lea.vmem [#allocation2], %s5279
          %5281 = dma.done %s5277, 512
        $region88: #{flowblock_forward.1} parent=83 // pred_fallthru
          _
        // Predicated region
        $region89: #{flowblock_forward.1} parent=83 // pred_check
          %p5282 = pneg %p362
        $region90: #{flowblock_forward.1} parent=83 // pred_check_branch
          %5284 = sbr.rel (%p5282) target = $region92
        $region91: #{flowblock_forward.1} parent=83 // pred_region
          %s5285 = smul.u32 8, %s30
          %p5286 = scmp.lt.s32.totalorder %s5285, 31
          %s5287 = scalar_select %p5286, %s5285, 31
          %s5288 = scalar_lea.vmem %s14, %s5287
        $region92: #{flowblock_forward.1} parent=83 // pred_fallthru
          _
      $region84: #{flowblock_forward.1} parent=5 // pred_fallthru
        _
    $region6: #{flowblock_forward.1} parent=1 // loop_footer
      %s28 = sadd.s32 1, %s24
    $region7: #{flowblock_forward.1} parent=1 // loop_footer_branch
      %23 = sbr.rel target = $region3
    $region8: #{flowblock_forward.1} parent=1 // loop_exit
      _
    %5289 = vsyncpa [#allocation3], 1
    %s5290 = scalar_lea.sflag [#allocation3], 1
    %5291 = vsyncpa %s5290, 1

</llo_original>
